<compile_context>
chip_gen: v7x
topology: tpu7x:2x2x1
jax: 0.10.0
libtpu: 0.0.40
codegen_flags: <defaults>
</compile_context>

<pallas_src>
import functools

import jax
import jax.numpy as jnp
from jax.experimental import pallas as pl
from jax.experimental.pallas import tpu as pltpu

LANE = 128
_BN_EPS = 1e-5


def _rup(n, m):
    return ((n + m - 1) // m) * m


# -----------------------------------------------------------------------------
# Shared network body.  `run_blocks(h0, block_step) -> h_final` abstracts how
# the residual-block weights are obtained (VMEM-resident vs. streamed).
# -----------------------------------------------------------------------------
def _network_body(x_ref, w_in_ref, pvw1_ref, pw2_ref, vw2_ref, bias_ref,
                  policy_ref, value_ref, num_blocks, run_blocks):
    cdt = w_in_ref.dtype
    h_pad = w_in_ref.shape[1]
    h2_pad, v_pad = vw2_ref.shape
    a_pad = pw2_ref.shape[1]

    def lin(h, w, c):
        # y = h @ w + c ; BN already folded into (w, c); f32 MXU accumulation.
        return jnp.dot(h, w, preferred_element_type=jnp.float32) + c

    def lin_relu(h, w, c):
        return jnp.maximum(lin(h, w, c), 0.0).astype(cdt)

    def block_step(h, w1, w2, i):
        # i may be a static python int (unrolled) or a traced scalar (rolled /
        # streamed); bias lookup is a plain leading-axis index either way.
        c1 = bias_ref[1 + i][:, :h_pad]
        c2 = bias_ref[1 + num_blocks + i][:, :h_pad]
        y = lin_relu(h, w1, c1)
        y = lin(y, w2, c2) + h.astype(jnp.float32)
        return jnp.maximum(y, 0.0).astype(cdt)

    # input layer: Linear + (folded) BN + ReLU
    h = lin_relu(x_ref[...], w_in_ref[...], bias_ref[0][:, :h_pad])

    # residual blocks
    h = run_blocks(h, block_step)

    base = 1 + 2 * num_blocks

    # fused policy/value first Linear+BN+ReLU (N = H_pad + H2_pad, MXU-wide)
    pv = lin_relu(h, pvw1_ref[...], bias_ref[base][:, :h_pad + h2_pad])
    p = pv[:, :h_pad]
    v = pv[:, h_pad:h_pad + h2_pad]

    policy_ref[...] = lin(p, pw2_ref[...],
                          bias_ref[base + 1][:, :a_pad]).astype(policy_ref.dtype)
    value_ref[...] = jnp.tanh(
        lin(v, vw2_ref[...], bias_ref[base + 2][:, :v_pad])
    ).astype(value_ref.dtype)


# -----------------------------------------------------------------------------
# Kernel A: all weights VMEM-resident (constant index_maps, single-buffered).
# -----------------------------------------------------------------------------
def _deep_catan_kernel_resident(x_ref, w_in_ref, rb_w1_ref, rb_w2_ref,
                                pvw1_ref, pw2_ref, vw2_ref, bias_ref,
                                policy_ref, value_ref):
    num_blocks = rb_w1_ref.shape[0]

    def run_blocks(h, block_step):
        if num_blocks <= 8:
            # short chains: static unroll (max LLO scheduler visibility)
            for i in range(num_blocks):
                h = block_step(h, rb_w1_ref[i], rb_w2_ref[i], i)
            return h
        # long chains: rolled loop (bounded live ranges), mild unroll so the
        # next block's bias/addressing work overlaps the previous MXU drain.
        return jax.lax.fori_loop(
            0, num_blocks,
            lambda i, hh: block_step(hh, rb_w1_ref[i], rb_w2_ref[i], i),
            h, unroll=2)

    _network_body(x_ref, w_in_ref, pvw1_ref, pw2_ref, vw2_ref, bias_ref,
                  policy_ref, value_ref, num_blocks, run_blocks)


# -----------------------------------------------------------------------------
# Kernel B: residual-block weights streamed from HBM with a manual 2-deep
# double buffer (block i+1 weight DMA overlaps block i compute).
# -----------------------------------------------------------------------------
def _deep_catan_kernel_stream(x_ref, w_in_ref, rb_w1_hbm, rb_w2_hbm,
                              pvw1_ref, pw2_ref, vw2_ref, bias_ref,
                              policy_ref, value_ref,
                              w1_buf, w2_buf, h_scr, dma_sem):
    num_blocks = rb_w1_hbm.shape[0]

    def start_fetch(i, slot):
        pltpu.make_async_copy(rb_w1_hbm.at[i], w1_buf.at[slot],
                              dma_sem.at[0, slot]).start()
        pltpu.make_async_copy(rb_w2_hbm.at[i], w2_buf.at[slot],
                              dma_sem.at[1, slot]).start()

    def wait_fetch(slot):
        pltpu.make_async_copy(rb_w1_hbm.at[0], w1_buf.at[slot],
                              dma_sem.at[0, slot]).wait()
        pltpu.make_async_copy(rb_w2_hbm.at[0], w2_buf.at[slot],
                              dma_sem.at[1, slot]).wait()

    def run_blocks(h, block_step):
        if num_blocks == 0:
            return h
        h_scr[...] = h
        start_fetch(0, 0)

        @pl.loop(0, num_blocks)
        def _(i):
            slot = jax.lax.rem(i, 2)
            wait_fetch(slot)

            @pl.when(i + 1 < num_blocks)
            def _():
                start_fetch(i + 1, 1 - slot)

            h_scr[...] = block_step(h_scr[...], w1_buf[slot], w2_buf[slot], i)

        return h_scr[...]

    _network_body(x_ref, w_in_ref, pvw1_ref, pw2_ref, vw2_ref, bias_ref,
                  policy_ref, value_ref, num_blocks, run_blocks)


# -----------------------------------------------------------------------------
# Raw (nn.Module-layout) parameters + BN folding / padding / packing
# -----------------------------------------------------------------------------
def init_params(key, state_dim, action_dim, hidden_dim, num_blocks):
    """Raw params in nn.Module layout: Linear.weight [out,in], Linear.bias
    [out], BatchNorm1d gamma/beta/running_mean/running_var [dim]."""
    ks = iter(jax.random.split(key, 16 * (num_blocks + 4)))

    def linear(in_d, out_d):
        bound = float(in_d) ** -0.5
        return {
            "w": jax.random.uniform(next(ks), (out_d, in_d), jnp.float32, -bound, bound),
            "b": jax.random.uniform(next(ks), (out_d,), jnp.float32, -bound, bound),
        }

    def bnorm(dim):
        return {
            "gamma": 1.0 + 0.1 * jax.random.normal(next(ks), (dim,), jnp.float32),
            "beta": 0.1 * jax.random.normal(next(ks), (dim,), jnp.float32),
            "mean": 0.1 * jax.random.normal(next(ks), (dim,), jnp.float32),
            "var": 1.0 + 0.1 * jax.random.uniform(next(ks), (dim,), jnp.float32),
        }

    hd2 = hidden_dim // 2
    return {
        "input": {"lin": linear(state_dim, hidden_dim), "bn": bnorm(hidden_dim)},
        "blocks": [
            {"lin1": linear(hidden_dim, hidden_dim), "bn1": bnorm(hidden_dim),
             "lin2": linear(hidden_dim, hidden_dim), "bn2": bnorm(hidden_dim)}
            for _ in range(num_blocks)
        ],
        "policy": {"lin1": linear(hidden_dim, hidden_dim), "bn1": bnorm(hidden_dim),
                   "lin2": linear(hidden_dim, action_dim)},
        "value": {"lin1": linear(hidden_dim, hd2), "bn1": bnorm(hd2),
                  "lin2": linear(hd2, 1)},
    }


def _fold_lin_bn(lin_p, bn_p):
    """Fold eval-mode BN into the preceding Linear: (W' [in,out], c' [out])."""
    s = bn_p["gamma"] / jnp.sqrt(bn_p["var"] + _BN_EPS)
    t = bn_p["beta"] - bn_p["mean"] * s
    return lin_p["w"].T * s[None, :], lin_p["b"] * s + t


def prepare_params(raw, compute_dtype=jnp.bfloat16):
    """Fold BN, transpose to [in,out], zero-pad feature axes to multiples of
    128, stack res-block weights, fuse the two head first-linears, and pack
    all biases into one (2*NB+4, 1, D) float32 stack."""
    num_blocks = len(raw["blocks"])
    assert num_blocks >= 1
    hidden = raw["input"]["lin"]["w"].shape[0]
    state_dim = raw["input"]["lin"]["w"].shape[1]
    action_dim = raw["policy"]["lin2"]["w"].shape[0]
    hd2 = raw["value"]["lin2"]["w"].shape[1]

    s_pad = _rup(state_dim, LANE)
    h_pad = _rup(hidden, LANE)
    h2_pad = _rup(hd2, LANE)
    a_pad = _rup(action_dim, LANE)
    v_pad = LANE  # value output padded from width 1 -> 128 (lane-dense store)
    d = max(h_pad + h2_pad, a_pad, v_pad)

    def pad_w(w, rows, cols):
        return jnp.pad(w, ((0, rows - w.shape[0]), (0, cols - w.shape[1]))
                       ).astype(compute_dtype)

    def pad_vec(c, width):
        return jnp.pad(c, (0, width - c.shape[0]))

    def pack_bias(c):
        return pad_vec(c, d).astype(jnp.float32)

    w_in, c_in = _fold_lin_bn(raw["input"]["lin"], raw["input"]["bn"])

    rb_w1, rb_w2, rb_c1, rb_c2 = [], [], [], []
    for blk in raw["blocks"]:
        w1, c1 = _fold_lin_bn(blk["lin1"], blk["bn1"])
        w2, c2 = _fold_lin_bn(blk["lin2"], blk["bn2"])
        rb_w1.append(pad_w(w1, h_pad, h_pad))
        rb_w2.append(pad_w(w2, h_pad, h_pad))
        rb_c1.append(c1)
        rb_c2.append(c2)

    pw1, cp1 = _fold_lin_bn(raw["policy"]["lin1"], raw["policy"]["bn1"])
    pw2, cp2 = raw["policy"]["lin2"]["w"].T, raw["policy"]["lin2"]["b"]
    vw1, cv1 = _fold_lin_bn(raw["value"]["lin1"], raw["value"]["bn1"])
    vw2, cv2 = raw["value"]["lin2"]["w"].T, raw["value"]["lin2"]["b"]

    # fused policy/value first linear: (H_pad, H_pad + H2_pad)
    pvw1 = jnp.concatenate([pad_w(pw1, h_pad, h_pad),
                            pad_w(vw1, h_pad, h2_pad)], axis=1)
    cpv1 = jnp.concatenate([pad_vec(cp1, h_pad), pad_vec(cv1, h2_pad)])

    biases = jnp.stack(
        [pack_bias(c_in)]
        + [pack_bias(c) for c in rb_c1]
        + [pack_bias(c) for c in rb_c2]
        + [pack_bias(cpv1), pack_bias(cp2), pack_bias(cv2)],
        axis=0,
    )[:, None, :]  # (2*NB+4, 1, D): leading-axis indexable biases

    return {
        "w_in": pad_w(w_in, s_pad, h_pad),
        "rb_w1": jnp.stack(rb_w1, axis=0),
        "rb_w2": jnp.stack(rb_w2, axis=0),
        "pvw1": pvw1,
        "pw2": pad_w(pw2, h_pad, a_pad),
        "vw2": pad_w(vw2, h2_pad, v_pad),
        "biases": biases,
    }


_PARAM_ORDER = ("w_in", "rb_w1", "rb_w2", "pvw1", "pw2", "vw2", "biases")


# -----------------------------------------------------------------------------
# Wrapper
# -----------------------------------------------------------------------------
@functools.partial(jax.jit,
                   static_argnames=("action_dim", "weight_streaming",
                                    "single_buffer"))
def _forward_impl(x, params, *, action_dim, weight_streaming, single_buffer):
    cdt = params["w_in"].dtype
    itemsize = jnp.dtype(cdt).itemsize
    s_pad, h_pad = params["w_in"].shape
    num_blocks = params["rb_w1"].shape[0]
    a_pad = params["pw2"].shape[1]
    h2_pad, v_pad = params["vw2"].shape

    # Device-generation hints (trace-time; conservative fallback).
    try:
        kind = jax.devices()[0].device_kind.lower()
    except Exception:  # pragma: no cover
        kind = ""
    is_v7 = "v7" in kind
    big_mxu = is_v7 or "v6" in kind

    # ---- batch tiling ----
    batch = x.shape[0]
    sub = 16 if cdt == jnp.bfloat16 else 8
    if batch > 128:
        tb = 256 if (big_mxu and batch >= 256) else 128
    else:
        tb = _rup(batch, sub)
        if tb >= 2 * sub:
            # >= 2 sublane tiles: split into 2 grid steps so the "parallel"
            # batch axis can shard across v7x's two TensorCores.
            tb = _rup((batch + 1) // 2, sub)
    batch_pad = _rup(batch, tb)
    grid = (batch_pad // tb,)

    x_pad = jnp.pad(x.astype(cdt),
                    ((0, batch_pad - batch), (0, s_pad - x.shape[1])))

    # ---- VMEM budget (per-step resident footprint, not whole-batch bytes) --
    def nbytes(a):
        return int(a.size) * int(a.dtype.itemsize)

    rb_bytes = nbytes(params["rb_w1"]) + nbytes(params["rb_w2"])
    other_w_bytes = sum(nbytes(params[k])
                        for k in ("w_in", "pvw1", "pw2", "vw2", "biases"))
    wfac = 1 if single_buffer else 2
    act_bytes = 2 * tb * s_pad * itemsize + 2 * tb * (a_pad + v_pad) * 4
    temp_bytes = 4 * tb * (2 * h_pad + h2_pad + a_pad) * 4  # f32 intermediates
    cap = (56 << 20) if is_v7 else (100 << 20)

    resident_need = wfac * (rb_bytes + other_w_bytes) + act_bytes + temp_bytes + (4 << 20)
    if weight_streaming is None:
        weight_streaming = resident_need > int(0.85 * cap)

    if weight_streaming:
        stream_buf = 2 * 2 * h_pad * h_pad * itemsize + tb * h_pad * itemsize
        vmem_need = wfac * other_w_bytes + stream_buf + act_bytes + temp_bytes + (4 << 20)
    else:
        vmem_need = resident_need
    vmem_limit = int(min(max(vmem_need, 16 << 20), cap))

    # ---- specs ----
    def resident_spec(shape):
        shape = tuple(int(s) for s in shape)
        zeros = (0,) * len(shape)
        index_map = lambda i: zeros  # noqa: E731  (constant block -> no re-DMA)
        if single_buffer:
            # Resident weights never change block: single-buffer them to halve
            # their VMEM footprint (decisive on v7x's 64 MiB/TC).
            return pl.BlockSpec(shape, index_map, pipeline_mode=pl.Buffered(1))
        return pl.BlockSpec(shape, index_map)

    if weight_streaming:
        rb1_spec = pl.BlockSpec(memory_space=pl.ANY)
        rb2_spec = pl.BlockSpec(memory_space=pl.ANY)
        kernel = _deep_catan_kernel_stream
        scratch = [pltpu.VMEM((2, h_pad, h_pad), cdt),
                   pltpu.VMEM((2, h_pad, h_pad), cdt),
                   pltpu.VMEM((tb, h_pad), cdt),
                   pltpu.SemaphoreType.DMA((2, 2))]
    else:
        rb1_spec = resident_spec(params["rb_w1"].shape)
        rb2_spec = resident_spec(params["rb_w2"].shape)
        kernel = _deep_catan_kernel_resident
        scratch = []

    in_specs = [
        pl.BlockSpec((tb, s_pad), lambda i: (i, 0)),   # activations: batch-tiled
        resident_spec(params["w_in"].shape),
        rb1_spec,
        rb2_spec,
        resident_spec(params["pvw1"].shape),
        resident_spec(params["pw2"].shape),
        resident_spec(params["vw2"].shape),
        resident_spec(params["biases"].shape),
    ]
    out_specs = (
        pl.BlockSpec((tb, a_pad), lambda i: (i, 0)),
        pl.BlockSpec((tb, v_pad), lambda i: (i, 0)),
    )
    out_shape = (
        jax.ShapeDtypeStruct((batch_pad, a_pad), jnp.float32),
        jax.ShapeDtypeStruct((batch_pad, v_pad), jnp.float32),
    )

    flops = 2 * batch_pad * (
        s_pad * h_pad + num_blocks * 2 * h_pad * h_pad
        + h_pad * (h_pad + h2_pad) + h_pad * a_pad + h2_pad * v_pad)
    bytes_accessed = (rb_bytes + other_w_bytes
                      + batch_pad * s_pad * itemsize
                      + batch_pad * (a_pad + v_pad) * 4)
    cost = pl.CostEstimate(flops=int(flops),
                           transcendentals=int(batch_pad * v_pad),
                           bytes_accessed=int(bytes_accessed))

    args = (x_pad,) + tuple(params[k] for k in _PARAM_ORDER)

    policy_pad, value_pad = pl.pallas_call(
        kernel,
        out_shape=out_shape,
        grid_spec=pltpu.PrefetchScalarGridSpec(
            num_scalar_prefetch=0,
            grid=grid,
            in_specs=in_specs,
            out_specs=out_specs,
            scratch_shapes=scratch,
        ),
        compiler_params=pltpu.CompilerParams(
            dimension_semantics=("parallel",),
            vmem_limit_bytes=vmem_limit,
        ),
        cost_estimate=cost,
    )(*args)

    return policy_pad[:batch, :action_dim], value_pad[:batch, :1]


_SINGLE_BUFFER_WEIGHTS = True  # flipped off once if this jax rejects Buffered(1)


def deep_catan_forward(x, params, *, action_dim, weight_streaming=None):
    """Returns (policy_logits [B, action_dim], value [B, 1]).

    weight_streaming: None = auto (stream residual-block weights from HBM only
    when the resident footprint would exceed the VMEM budget), True/False to
    force the streamed / resident path.
    """
    global _SINGLE_BUFFER_WEIGHTS
    try:
        return _forward_impl(x, params, action_dim=action_dim,
                             weight_streaming=weight_streaming,
                             single_buffer=_SINGLE_BUFFER_WEIGHTS)
    except Exception:
        if not _SINGLE_BUFFER_WEIGHTS:
            raise
        # pipeline_mode=pl.Buffered(1) not supported by this jax build:
        # fall back to default double-buffered resident weights.
        _SINGLE_BUFFER_WEIGHTS = False
        return _forward_impl(x, params, action_dim=action_dim,
                             weight_streaming=weight_streaming,
                             single_buffer=False)


# -----------------------------------------------------------------------------
# Pure-JAX reference (module-faithful, eval-mode BN) — correctness check only
# -----------------------------------------------------------------------------
def deep_catan_reference(x, raw):
    def linear(h, p):
        return h @ p["w"].T + p["b"]

    def bnorm(h, p):
        return (h - p["mean"]) / jnp.sqrt(p["var"] + _BN_EPS) * p["gamma"] + p["beta"]

    h = jax.nn.relu(bnorm(linear(x, raw["input"]["lin"]), raw["input"]["bn"]))
    for blk in raw["blocks"]:
        res = h
        y = jax.nn.relu(bnorm(linear(h, blk["lin1"]), blk["bn1"]))
        y = bnorm(linear(y, blk["lin2"]), blk["bn2"])
        h = jax.nn.relu(y + res)
    pol = linear(
        jax.nn.relu(bnorm(linear(h, raw["policy"]["lin1"]), raw["policy"]["bn1"])),
        raw["policy"]["lin2"])
    v = jax.nn.relu(bnorm(linear(h, raw["value"]["lin1"]), raw["value"]["bn1"]))
    val = jnp.tanh(linear(v, raw["value"]["lin2"]))
    return pol, val


if __name__ == "__main__":
    # Small shapes consistent with DeepCatanNetwork(state_dim, action_dim,
    # hidden_dim, num_blocks).
    batch, state_dim, action_dim, hidden_dim, num_blocks = 8, 32, 16, 32, 3

    key = jax.random.PRNGKey(0)
    k_x, k_p, k_x2 = jax.random.split(key, 3)
    x = jax.random.normal(k_x, (batch, state_dim), jnp.float32)
    raw = init_params(k_p, state_dim, action_dim, hidden_dim, num_blocks)

    ref_policy, ref_value = deep_catan_reference(x, raw)

    # 1) default bf16 fast path (resident, single-buffered weights)
    params_bf16 = prepare_params(raw)  # compute_dtype defaults to bfloat16
    policy, value = deep_catan_forward(x, params_bf16, action_dim=action_dim)
    jax.block_until_ready((policy, value))
    assert policy.shape == (batch, action_dim)
    assert value.shape == (batch, 1)
    assert jnp.allclose(policy, ref_policy, atol=1e-1, rtol=1e-1)
    assert jnp.allclose(value, ref_value, atol=1e-1, rtol=1e-1)

    # 2) forced per-block weight-streaming path (manual double-buffered DMA)
    policy_s, value_s = deep_catan_forward(x, params_bf16, action_dim=action_dim,
                                           weight_streaming=True)
    jax.block_until_ready((policy_s, value_s))
    assert jnp.allclose(policy_s, ref_policy, atol=1e-1, rtol=1e-1)
    assert jnp.allclose(value_s, ref_value, atol=1e-1, rtol=1e-1)

    # 3) mid-size batch: exercises the 2-step "parallel" batch grid split
    x_big = jax.random.normal(k_x2, (40, state_dim), jnp.float32)
    ref_policy_b, ref_value_b = deep_catan_reference(x_big, raw)
    policy_b, value_b = deep_catan_forward(x_big, params_bf16, action_dim=action_dim)
    jax.block_until_ready((policy_b, value_b))
    assert policy_b.shape == (40, action_dim) and value_b.shape == (40, 1)
    assert jnp.allclose(policy_b, ref_policy_b, atol=1e-1, rtol=1e-1)
    assert jnp.allclose(value_b, ref_value_b, atol=1e-1, rtol=1e-1)

    # 4) f32 debug/reference path (tight tolerance vs module-faithful reference)
    params_f32 = prepare_params(raw, compute_dtype=jnp.float32)
    policy32, value32 = deep_catan_forward(x, params_f32, action_dim=action_dim)
    jax.block_until_ready((policy32, value32))
    assert jnp.allclose(policy32, ref_policy, atol=2e-3, rtol=2e-3)
    assert jnp.allclose(value32, ref_value, atol=2e-3, rtol=2e-3)

    print("KERNEL_OK")
</pallas_src>

<mosaic_0001>
module attributes {stable_mosaic.version = 11 : i64} {
  func.func @_deep_catan_kernel_resident(%arg0: i32, %arg1: memref<16x128xbf16, #tpu.memory_space<vmem>>, %arg2: memref<128x128xbf16, #tpu.memory_space<vmem>>, %arg3: memref<3x128x128xbf16, #tpu.memory_space<vmem>>, %arg4: memref<3x128x128xbf16, #tpu.memory_space<vmem>>, %arg5: memref<128x256xbf16, #tpu.memory_space<vmem>>, %arg6: memref<128x128xbf16, #tpu.memory_space<vmem>>, %arg7: memref<128x128xbf16, #tpu.memory_space<vmem>>, %arg8: memref<10x1x256xf32, #tpu.memory_space<vmem>>, %arg9: memref<16x128xf32, #tpu.memory_space<vmem>>, %arg10: memref<16x128xf32, #tpu.memory_space<vmem>>) attributes {dimension_semantics = [#tpu.dimension_semantics<parallel>], iteration_bounds = array<i64: 1>, scalar_prefetch = 0 : i64, scratch_operands = 0 : i64, tpu.core_type = #tpu.core_type<tc>, window_params = [{transform_indices = @transform_0, window_bounds = array<i64: 16, 128>}, {pipeline_mode = #tpu.pipeline_mode<synchronous>, transform_indices = @transform_1, window_bounds = array<i64: 128, 128>}, {pipeline_mode = #tpu.pipeline_mode<synchronous>, transform_indices = @transform_2, window_bounds = array<i64: 3, 128, 128>}, {pipeline_mode = #tpu.pipeline_mode<synchronous>, transform_indices = @transform_3, window_bounds = array<i64: 3, 128, 128>}, {pipeline_mode = #tpu.pipeline_mode<synchronous>, transform_indices = @transform_4, window_bounds = array<i64: 128, 256>}, {pipeline_mode = #tpu.pipeline_mode<synchronous>, transform_indices = @transform_5, window_bounds = array<i64: 128, 128>}, {pipeline_mode = #tpu.pipeline_mode<synchronous>, transform_indices = @transform_6, window_bounds = array<i64: 128, 128>}, {pipeline_mode = #tpu.pipeline_mode<synchronous>, transform_indices = @transform_7, window_bounds = array<i64: 10, 1, 256>}, {transform_indices = @transform_8, window_bounds = array<i64: 16, 128>}, {transform_indices = @transform_9, window_bounds = array<i64: 16, 128>}]} {
    %c0 = arith.constant 0 : index
    %c0_0 = arith.constant 0 : index
    %0 = vector.load %arg1[%c0, %c0_0] : memref<16x128xbf16, #tpu.memory_space<vmem>>, vector<16x128xbf16>
    %c0_1 = arith.constant 0 : index
    %c0_2 = arith.constant 0 : index
    %1 = vector.load %arg2[%c0_1, %c0_2] : memref<128x128xbf16, #tpu.memory_space<vmem>>, vector<128x128xbf16>
    %c0_3 = arith.constant 0 : index
    %c0_4 = arith.constant 0 : index
    %c0_5 = arith.constant 0 : index
    %2 = vector.load %arg8[%c0_3, %c0_4, %c0_5] : memref<10x1x256xf32, #tpu.memory_space<vmem>>, vector<1x1x256xf32>
    %3 = vector.shape_cast %2 : vector<1x1x256xf32> to vector<1x256xf32>
    %4 = vector.extract_strided_slice %3 {offsets = [0, 0], sizes = [1, 128], strides = [1, 1]} : vector<1x256xf32> to vector<1x128xf32>
    %cst = arith.constant dense<0.000000e+00> : vector<16x128xf32>
    %5 = tpu.matmul %0, %1, %cst {dimension_numbers = #tpu.dot_dimension_numbers<[1], [0], [0], [1], [0, 0, 1, 1], [], []>} : vector<16x128xbf16>, vector<128x128xbf16>, vector<16x128xf32> -> vector<16x128xf32>
    %6 = vector.broadcast %4 : vector<1x128xf32> to vector<16x128xf32>
    %7 = arith.addf %5, %6 : vector<16x128xf32>
    %cst_6 = arith.constant 0.000000e+00 : f32
    %8 = vector.broadcast %cst_6 : f32 to vector<16x128xf32>
    %9 = arith.maximumf %7, %8 : vector<16x128xf32>
    %10 = arith.truncf %9 : vector<16x128xf32> to vector<16x128xbf16>
    %c0_7 = arith.constant 0 : index
    %c0_8 = arith.constant 0 : index
    %c0_9 = arith.constant 0 : index
    %11 = vector.load %arg3[%c0_7, %c0_8, %c0_9] : memref<3x128x128xbf16, #tpu.memory_space<vmem>>, vector<1x128x128xbf16>
    %12 = vector.shape_cast %11 : vector<1x128x128xbf16> to vector<128x128xbf16>
    %c0_10 = arith.constant 0 : index
    %c0_11 = arith.constant 0 : index
    %c0_12 = arith.constant 0 : index
    %13 = vector.load %arg4[%c0_10, %c0_11, %c0_12] : memref<3x128x128xbf16, #tpu.memory_space<vmem>>, vector<1x128x128xbf16>
    %14 = vector.shape_cast %13 : vector<1x128x128xbf16> to vector<128x128xbf16>
    %c1 = arith.constant 1 : index
    %c0_13 = arith.constant 0 : index
    %c0_14 = arith.constant 0 : index
    %15 = vector.load %arg8[%c1, %c0_13, %c0_14] : memref<10x1x256xf32, #tpu.memory_space<vmem>>, vector<1x1x256xf32>
    %16 = vector.shape_cast %15 : vector<1x1x256xf32> to vector<1x256xf32>
    %17 = vector.extract_strided_slice %16 {offsets = [0, 0], sizes = [1, 128], strides = [1, 1]} : vector<1x256xf32> to vector<1x128xf32>
    %c4 = arith.constant 4 : index
    %c0_15 = arith.constant 0 : index
    %c0_16 = arith.constant 0 : index
    %18 = vector.load %arg8[%c4, %c0_15, %c0_16] : memref<10x1x256xf32, #tpu.memory_space<vmem>>, vector<1x1x256xf32>
    %19 = vector.shape_cast %18 : vector<1x1x256xf32> to vector<1x256xf32>
    %20 = vector.extract_strided_slice %19 {offsets = [0, 0], sizes = [1, 128], strides = [1, 1]} : vector<1x256xf32> to vector<1x128xf32>
    %cst_17 = arith.constant dense<0.000000e+00> : vector<16x128xf32>
    %21 = tpu.matmul %10, %12, %cst_17 {dimension_numbers = #tpu.dot_dimension_numbers<[1], [0], [0], [1], [0, 0, 1, 1], [], []>} : vector<16x128xbf16>, vector<128x128xbf16>, vector<16x128xf32> -> vector<16x128xf32>
    %22 = vector.broadcast %17 : vector<1x128xf32> to vector<16x128xf32>
    %23 = arith.addf %21, %22 : vector<16x128xf32>
    %cst_18 = arith.constant 0.000000e+00 : f32
    %24 = vector.broadcast %cst_18 : f32 to vector<16x128xf32>
    %25 = arith.maximumf %23, %24 : vector<16x128xf32>
    %26 = arith.truncf %25 : vector<16x128xf32> to vector<16x128xbf16>
    %cst_19 = arith.constant dense<0.000000e+00> : vector<16x128xf32>
    %27 = tpu.matmul %26, %14, %cst_19 {dimension_numbers = #tpu.dot_dimension_numbers<[1], [0], [0], [1], [0, 0, 1, 1], [], []>} : vector<16x128xbf16>, vector<128x128xbf16>, vector<16x128xf32> -> vector<16x128xf32>
    %28 = vector.broadcast %20 : vector<1x128xf32> to vector<16x128xf32>
    %29 = arith.addf %27, %28 : vector<16x128xf32>
    %30 = arith.extf %10 : vector<16x128xbf16> to vector<16x128xf32>
    %31 = arith.addf %29, %30 : vector<16x128xf32>
    %cst_20 = arith.constant 0.000000e+00 : f32
    %32 = vector.broadcast %cst_20 : f32 to vector<16x128xf32>
    %33 = arith.maximumf %31, %32 : vector<16x128xf32>
    %34 = arith.truncf %33 : vector<16x128xf32> to vector<16x128xbf16>
    %c1_21 = arith.constant 1 : index
    %c0_22 = arith.constant 0 : index
    %c0_23 = arith.constant 0 : index
    %35 = vector.load %arg3[%c1_21, %c0_22, %c0_23] : memref<3x128x128xbf16, #tpu.memory_space<vmem>>, vector<1x128x128xbf16>
    %36 = vector.shape_cast %35 : vector<1x128x128xbf16> to vector<128x128xbf16>
    %c1_24 = arith.constant 1 : index
    %c0_25 = arith.constant 0 : index
    %c0_26 = arith.constant 0 : index
    %37 = vector.load %arg4[%c1_24, %c0_25, %c0_26] : memref<3x128x128xbf16, #tpu.memory_space<vmem>>, vector<1x128x128xbf16>
    %38 = vector.shape_cast %37 : vector<1x128x128xbf16> to vector<128x128xbf16>
    %c2 = arith.constant 2 : index
    %c0_27 = arith.constant 0 : index
    %c0_28 = arith.constant 0 : index
    %39 = vector.load %arg8[%c2, %c0_27, %c0_28] : memref<10x1x256xf32, #tpu.memory_space<vmem>>, vector<1x1x256xf32>
    %40 = vector.shape_cast %39 : vector<1x1x256xf32> to vector<1x256xf32>
    %41 = vector.extract_strided_slice %40 {offsets = [0, 0], sizes = [1, 128], strides = [1, 1]} : vector<1x256xf32> to vector<1x128xf32>
    %c5 = arith.constant 5 : index
    %c0_29 = arith.constant 0 : index
    %c0_30 = arith.constant 0 : index
    %42 = vector.load %arg8[%c5, %c0_29, %c0_30] : memref<10x1x256xf32, #tpu.memory_space<vmem>>, vector<1x1x256xf32>
    %43 = vector.shape_cast %42 : vector<1x1x256xf32> to vector<1x256xf32>
    %44 = vector.extract_strided_slice %43 {offsets = [0, 0], sizes = [1, 128], strides = [1, 1]} : vector<1x256xf32> to vector<1x128xf32>
    %cst_31 = arith.constant dense<0.000000e+00> : vector<16x128xf32>
    %45 = tpu.matmul %34, %36, %cst_31 {dimension_numbers = #tpu.dot_dimension_numbers<[1], [0], [0], [1], [0, 0, 1, 1], [], []>} : vector<16x128xbf16>, vector<128x128xbf16>, vector<16x128xf32> -> vector<16x128xf32>
    %46 = vector.broadcast %41 : vector<1x128xf32> to vector<16x128xf32>
    %47 = arith.addf %45, %46 : vector<16x128xf32>
    %cst_32 = arith.constant 0.000000e+00 : f32
    %48 = vector.broadcast %cst_32 : f32 to vector<16x128xf32>
    %49 = arith.maximumf %47, %48 : vector<16x128xf32>
    %50 = arith.truncf %49 : vector<16x128xf32> to vector<16x128xbf16>
    %cst_33 = arith.constant dense<0.000000e+00> : vector<16x128xf32>
    %51 = tpu.matmul %50, %38, %cst_33 {dimension_numbers = #tpu.dot_dimension_numbers<[1], [0], [0], [1], [0, 0, 1, 1], [], []>} : vector<16x128xbf16>, vector<128x128xbf16>, vector<16x128xf32> -> vector<16x128xf32>
    %52 = vector.broadcast %44 : vector<1x128xf32> to vector<16x128xf32>
    %53 = arith.addf %51, %52 : vector<16x128xf32>
    %54 = arith.extf %34 : vector<16x128xbf16> to vector<16x128xf32>
    %55 = arith.addf %53, %54 : vector<16x128xf32>
    %cst_34 = arith.constant 0.000000e+00 : f32
    %56 = vector.broadcast %cst_34 : f32 to vector<16x128xf32>
    %57 = arith.maximumf %55, %56 : vector<16x128xf32>
    %58 = arith.truncf %57 : vector<16x128xf32> to vector<16x128xbf16>
    %c2_35 = arith.constant 2 : index
    %c0_36 = arith.constant 0 : index
    %c0_37 = arith.constant 0 : index
    %59 = vector.load %arg3[%c2_35, %c0_36, %c0_37] : memref<3x128x128xbf16, #tpu.memory_space<vmem>>, vector<1x128x128xbf16>
    %60 = vector.shape_cast %59 : vector<1x128x128xbf16> to vector<128x128xbf16>
    %c2_38 = arith.constant 2 : index
    %c0_39 = arith.constant 0 : index
    %c0_40 = arith.constant 0 : index
    %61 = vector.load %arg4[%c2_38, %c0_39, %c0_40] : memref<3x128x128xbf16, #tpu.memory_space<vmem>>, vector<1x128x128xbf16>
    %62 = vector.shape_cast %61 : vector<1x128x128xbf16> to vector<128x128xbf16>
    %c3 = arith.constant 3 : index
    %c0_41 = arith.constant 0 : index
    %c0_42 = arith.constant 0 : index
    %63 = vector.load %arg8[%c3, %c0_41, %c0_42] : memref<10x1x256xf32, #tpu.memory_space<vmem>>, vector<1x1x256xf32>
    %64 = vector.shape_cast %63 : vector<1x1x256xf32> to vector<1x256xf32>
    %65 = vector.extract_strided_slice %64 {offsets = [0, 0], sizes = [1, 128], strides = [1, 1]} : vector<1x256xf32> to vector<1x128xf32>
    %c6 = arith.constant 6 : index
    %c0_43 = arith.constant 0 : index
    %c0_44 = arith.constant 0 : index
    %66 = vector.load %arg8[%c6, %c0_43, %c0_44] : memref<10x1x256xf32, #tpu.memory_space<vmem>>, vector<1x1x256xf32>
    %67 = vector.shape_cast %66 : vector<1x1x256xf32> to vector<1x256xf32>
    %68 = vector.extract_strided_slice %67 {offsets = [0, 0], sizes = [1, 128], strides = [1, 1]} : vector<1x256xf32> to vector<1x128xf32>
    %cst_45 = arith.constant dense<0.000000e+00> : vector<16x128xf32>
    %69 = tpu.matmul %58, %60, %cst_45 {dimension_numbers = #tpu.dot_dimension_numbers<[1], [0], [0], [1], [0, 0, 1, 1], [], []>} : vector<16x128xbf16>, vector<128x128xbf16>, vector<16x128xf32> -> vector<16x128xf32>
    %70 = vector.broadcast %65 : vector<1x128xf32> to vector<16x128xf32>
    %71 = arith.addf %69, %70 : vector<16x128xf32>
    %cst_46 = arith.constant 0.000000e+00 : f32
    %72 = vector.broadcast %cst_46 : f32 to vector<16x128xf32>
    %73 = arith.maximumf %71, %72 : vector<16x128xf32>
    %74 = arith.truncf %73 : vector<16x128xf32> to vector<16x128xbf16>
    %cst_47 = arith.constant dense<0.000000e+00> : vector<16x128xf32>
    %75 = tpu.matmul %74, %62, %cst_47 {dimension_numbers = #tpu.dot_dimension_numbers<[1], [0], [0], [1], [0, 0, 1, 1], [], []>} : vector<16x128xbf16>, vector<128x128xbf16>, vector<16x128xf32> -> vector<16x128xf32>
    %76 = vector.broadcast %68 : vector<1x128xf32> to vector<16x128xf32>
    %77 = arith.addf %75, %76 : vector<16x128xf32>
    %78 = arith.extf %58 : vector<16x128xbf16> to vector<16x128xf32>
    %79 = arith.addf %77, %78 : vector<16x128xf32>
    %cst_48 = arith.constant 0.000000e+00 : f32
    %80 = vector.broadcast %cst_48 : f32 to vector<16x128xf32>
    %81 = arith.maximumf %79, %80 : vector<16x128xf32>
    %82 = arith.truncf %81 : vector<16x128xf32> to vector<16x128xbf16>
    %c0_49 = arith.constant 0 : index
    %c0_50 = arith.constant 0 : index
    %83 = vector.load %arg5[%c0_49, %c0_50] : memref<128x256xbf16, #tpu.memory_space<vmem>>, vector<128x256xbf16>
    %c7 = arith.constant 7 : index
    %c0_51 = arith.constant 0 : index
    %c0_52 = arith.constant 0 : index
    %84 = vector.load %arg8[%c7, %c0_51, %c0_52] : memref<10x1x256xf32, #tpu.memory_space<vmem>>, vector<1x1x256xf32>
    %85 = vector.shape_cast %84 : vector<1x1x256xf32> to vector<1x256xf32>
    %cst_53 = arith.constant dense<0.000000e+00> : vector<16x256xf32>
    %86 = tpu.matmul %82, %83, %cst_53 {dimension_numbers = #tpu.dot_dimension_numbers<[1], [0], [0], [1], [0, 0, 1, 1], [], []>} : vector<16x128xbf16>, vector<128x256xbf16>, vector<16x256xf32> -> vector<16x256xf32>
    %87 = vector.broadcast %85 : vector<1x256xf32> to vector<16x256xf32>
    %88 = arith.addf %86, %87 : vector<16x256xf32>
    %cst_54 = arith.constant 0.000000e+00 : f32
    %89 = vector.broadcast %cst_54 : f32 to vector<16x256xf32>
    %90 = arith.maximumf %88, %89 : vector<16x256xf32>
    %91 = arith.truncf %90 : vector<16x256xf32> to vector<16x256xbf16>
    %92 = vector.extract_strided_slice %91 {offsets = [0, 0], sizes = [16, 128], strides = [1, 1]} : vector<16x256xbf16> to vector<16x128xbf16>
    %93 = vector.extract_strided_slice %91 {offsets = [0, 128], sizes = [16, 128], strides = [1, 1]} : vector<16x256xbf16> to vector<16x128xbf16>
    %c0_55 = arith.constant 0 : index
    %c0_56 = arith.constant 0 : index
    %94 = vector.load %arg6[%c0_55, %c0_56] : memref<128x128xbf16, #tpu.memory_space<vmem>>, vector<128x128xbf16>
    %c8 = arith.constant 8 : index
    %c0_57 = arith.constant 0 : index
    %c0_58 = arith.constant 0 : index
    %95 = vector.load %arg8[%c8, %c0_57, %c0_58] : memref<10x1x256xf32, #tpu.memory_space<vmem>>, vector<1x1x256xf32>
    %96 = vector.shape_cast %95 : vector<1x1x256xf32> to vector<1x256xf32>
    %97 = vector.extract_strided_slice %96 {offsets = [0, 0], sizes = [1, 128], strides = [1, 1]} : vector<1x256xf32> to vector<1x128xf32>
    %cst_59 = arith.constant dense<0.000000e+00> : vector<16x128xf32>
    %98 = tpu.matmul %92, %94, %cst_59 {dimension_numbers = #tpu.dot_dimension_numbers<[1], [0], [0], [1], [0, 0, 1, 1], [], []>} : vector<16x128xbf16>, vector<128x128xbf16>, vector<16x128xf32> -> vector<16x128xf32>
    %99 = vector.broadcast %97 : vector<1x128xf32> to vector<16x128xf32>
    %100 = arith.addf %98, %99 : vector<16x128xf32>
    %c0_60 = arith.constant 0 : index
    %c0_61 = arith.constant 0 : index
    %101 = vector.load %arg9[%c0_60, %c0_61] : memref<16x128xf32, #tpu.memory_space<vmem>>, vector<16x128xf32>
    tpu.vector_store %arg9[%c0_60, %c0_61], %100 {strides = array<i32>} : memref<16x128xf32, #tpu.memory_space<vmem>>, vector<16x128xf32>,
    %c0_62 = arith.constant 0 : index
    %c0_63 = arith.constant 0 : index
    %102 = vector.load %arg7[%c0_62, %c0_63] : memref<128x128xbf16, #tpu.memory_space<vmem>>, vector<128x128xbf16>
    %c9 = arith.constant 9 : index
    %c0_64 = arith.constant 0 : index
    %c0_65 = arith.constant 0 : index
    %103 = vector.load %arg8[%c9, %c0_64, %c0_65] : memref<10x1x256xf32, #tpu.memory_space<vmem>>, vector<1x1x256xf32>
    %104 = vector.shape_cast %103 : vector<1x1x256xf32> to vector<1x256xf32>
    %105 = vector.extract_strided_slice %104 {offsets = [0, 0], sizes = [1, 128], strides = [1, 1]} : vector<1x256xf32> to vector<1x128xf32>
    %cst_66 = arith.constant dense<0.000000e+00> : vector<16x128xf32>
    %106 = tpu.matmul %93, %102, %cst_66 {dimension_numbers = #tpu.dot_dimension_numbers<[1], [0], [0], [1], [0, 0, 1, 1], [], []>} : vector<16x128xbf16>, vector<128x128xbf16>, vector<16x128xf32> -> vector<16x128xf32>
    %107 = vector.broadcast %105 : vector<1x128xf32> to vector<16x128xf32>
    %108 = arith.addf %106, %107 : vector<16x128xf32>
    %109 = math.tanh %108 : vector<16x128xf32>
    %c0_67 = arith.constant 0 : index
    %c0_68 = arith.constant 0 : index
    %110 = vector.load %arg10[%c0_67, %c0_68] : memref<16x128xf32, #tpu.memory_space<vmem>>, vector<16x128xf32>
    tpu.vector_store %arg10[%c0_67, %c0_68], %109 {strides = array<i32>} : memref<16x128xf32, #tpu.memory_space<vmem>>, vector<16x128xf32>,
    return
  }
  func.func @transform_0(%arg0: i32) -> (i32, i32) {
    %c0_i32 = arith.constant 0 : i32
    %c0_i32_0 = arith.constant 0 : i32
    return %arg0, %c0_i32 : i32, i32
  }
  func.func @transform_1(%arg0: i32) -> (i32, i32) {
    %c0_i32 = arith.constant 0 : i32
    %c0_i32_0 = arith.constant 0 : i32
    %c0_i32_1 = arith.constant 0 : i32
    return %c0_i32, %c0_i32_0 : i32, i32
  }
  func.func @transform_2(%arg0: i32) -> (i32, i32, i32) {
    %c0_i32 = arith.constant 0 : i32
    %c0_i32_0 = arith.constant 0 : i32
    %c0_i32_1 = arith.constant 0 : i32
    %c0_i32_2 = arith.constant 0 : i32
    return %c0_i32, %c0_i32_0, %c0_i32_1 : i32, i32, i32
  }
  func.func @transform_3(%arg0: i32) -> (i32, i32, i32) {
    %c0_i32 = arith.constant 0 : i32
    %c0_i32_0 = arith.constant 0 : i32
    %c0_i32_1 = arith.constant 0 : i32
    %c0_i32_2 = arith.constant 0 : i32
    return %c0_i32, %c0_i32_0, %c0_i32_1 : i32, i32, i32
  }
  func.func @transform_4(%arg0: i32) -> (i32, i32) {
    %c0_i32 = arith.constant 0 : i32
    %c0_i32_0 = arith.constant 0 : i32
    %c0_i32_1 = arith.constant 0 : i32
    return %c0_i32, %c0_i32_0 : i32, i32
  }
  func.func @transform_5(%arg0: i32) -> (i32, i32) {
    %c0_i32 = arith.constant 0 : i32
    %c0_i32_0 = arith.constant 0 : i32
    %c0_i32_1 = arith.constant 0 : i32
    return %c0_i32, %c0_i32_0 : i32, i32
  }
  func.func @transform_6(%arg0: i32) -> (i32, i32) {
    %c0_i32 = arith.constant 0 : i32
    %c0_i32_0 = arith.constant 0 : i32
    %c0_i32_1 = arith.constant 0 : i32
    return %c0_i32, %c0_i32_0 : i32, i32
  }
  func.func @transform_7(%arg0: i32) -> (i32, i32, i32) {
    %c0_i32 = arith.constant 0 : i32
    %c0_i32_0 = arith.constant 0 : i32
    %c0_i32_1 = arith.constant 0 : i32
    %c0_i32_2 = arith.constant 0 : i32
    return %c0_i32, %c0_i32_0, %c0_i32_1 : i32, i32, i32
  }
  func.func @transform_8(%arg0: i32) -> (i32, i32) {
    %c0_i32 = arith.constant 0 : i32
    %c0_i32_0 = arith.constant 0 : i32
    return %arg0, %c0_i32 : i32, i32
  }
  func.func @transform_9(%arg0: i32) -> (i32, i32) {
    %c0_i32 = arith.constant 0 : i32
    %c0_i32_0 = arith.constant 0 : i32
    return %arg0, %c0_i32 : i32, i32
  }
}

module attributes {stable_mosaic.version = 11 : i64} {
  func.func @_deep_catan_kernel_resident(%arg0: i32, %arg1: memref<16x128xbf16, #tpu.memory_space<vmem>>, %arg2: memref<128x128xbf16, #tpu.memory_space<vmem>>, %arg3: memref<3x128x128xbf16, #tpu.memory_space<vmem>>, %arg4: memref<3x128x128xbf16, #tpu.memory_space<vmem>>, %arg5: memref<128x256xbf16, #tpu.memory_space<vmem>>, %arg6: memref<128x128xbf16, #tpu.memory_space<vmem>>, %arg7: memref<128x128xbf16, #tpu.memory_space<vmem>>, %arg8: memref<10x1x256xf32, #tpu.memory_space<vmem>>, %arg9: memref<16x128xf32, #tpu.memory_space<vmem>>, %arg10: memref<16x128xf32, #tpu.memory_space<vmem>>) attributes {dimension_semantics = [#tpu.dimension_semantics<parallel>], iteration_bounds = array<i64: 1>, scalar_prefetch = 0 : i64, scratch_operands = 0 : i64, tpu.core_type = #tpu.core_type<tc>, window_params = [{transform_indices = @transform_0, window_bounds = array<i64: 16, 128>}, {pipeline_mode = #tpu.pipeline_mode<synchronous>, transform_indices = @transform_1, window_bounds = array<i64: 128, 128>}, {pipeline_mode = #tpu.pipeline_mode<synchronous>, transform_indices = @transform_2, window_bounds = array<i64: 3, 128, 128>}, {pipeline_mode = #tpu.pipeline_mode<synchronous>, transform_indices = @transform_3, window_bounds = array<i64: 3, 128, 128>}, {pipeline_mode = #tpu.pipeline_mode<synchronous>, transform_indices = @transform_4, window_bounds = array<i64: 128, 256>}, {pipeline_mode = #tpu.pipeline_mode<synchronous>, transform_indices = @transform_5, window_bounds = array<i64: 128, 128>}, {pipeline_mode = #tpu.pipeline_mode<synchronous>, transform_indices = @transform_6, window_bounds = array<i64: 128, 128>}, {pipeline_mode = #tpu.pipeline_mode<synchronous>, transform_indices = @transform_7, window_bounds = array<i64: 10, 1, 256>}, {transform_indices = @transform_8, window_bounds = array<i64: 16, 128>}, {transform_indices = @transform_9, window_bounds = array<i64: 16, 128>}]} {
    %c0 = arith.constant 0 : index
    %c0_0 = arith.constant 0 : index
    %0 = vector.load %arg1[%c0, %c0_0] : memref<16x128xbf16, #tpu.memory_space<vmem>>, vector<16x128xbf16>
    %c0_1 = arith.constant 0 : index
    %c0_2 = arith.constant 0 : index
    %1 = vector.load %arg2[%c0_1, %c0_2] : memref<128x128xbf16, #tpu.memory_space<vmem>>, vector<128x128xbf16>
    %c0_3 = arith.constant 0 : index
    %c0_4 = arith.constant 0 : index
    %c0_5 = arith.constant 0 : index
    %2 = vector.load %arg8[%c0_3, %c0_4, %c0_5] : memref<10x1x256xf32, #tpu.memory_space<vmem>>, vector<1x1x256xf32>
    %3 = vector.shape_cast %2 : vector<1x1x256xf32> to vector<1x256xf32>
    %4 = vector.extract_strided_slice %3 {offsets = [0, 0], sizes = [1, 128], strides = [1, 1]} : vector<1x256xf32> to vector<1x128xf32>
    %cst = arith.constant dense<0.000000e+00> : vector<16x128xf32>
    %5 = tpu.matmul %0, %1, %cst {dimension_numbers = #tpu.dot_dimension_numbers<[1], [0], [0], [1], [0, 0, 1, 1], [], []>} : vector<16x128xbf16>, vector<128x128xbf16>, vector<16x128xf32> -> vector<16x128xf32>
    %6 = vector.broadcast %4 : vector<1x128xf32> to vector<16x128xf32>
    %7 = arith.addf %5, %6 : vector<16x128xf32>
    %cst_6 = arith.constant 0.000000e+00 : f32
    %8 = vector.broadcast %cst_6 : f32 to vector<16x128xf32>
    %9 = arith.maximumf %7, %8 : vector<16x128xf32>
    %10 = arith.truncf %9 : vector<16x128xf32> to vector<16x128xbf16>
    %c0_7 = arith.constant 0 : index
    %c0_8 = arith.constant 0 : index
    %c0_9 = arith.constant 0 : index
    %11 = vector.load %arg3[%c0_7, %c0_8, %c0_9] : memref<3x128x128xbf16, #tpu.memory_space<vmem>>, vector<1x128x128xbf16>
    %12 = vector.shape_cast %11 : vector<1x128x128xbf16> to vector<128x128xbf16>
    %c0_10 = arith.constant 0 : index
    %c0_11 = arith.constant 0 : index
    %c0_12 = arith.constant 0 : index
    %13 = vector.load %arg4[%c0_10, %c0_11, %c0_12] : memref<3x128x128xbf16, #tpu.memory_space<vmem>>, vector<1x128x128xbf16>
    %14 = vector.shape_cast %13 : vector<1x128x128xbf16> to vector<128x128xbf16>
    %c1 = arith.constant 1 : index
    %c0_13 = arith.constant 0 : index
    %c0_14 = arith.constant 0 : index
    %15 = vector.load %arg8[%c1, %c0_13, %c0_14] : memref<10x1x256xf32, #tpu.memory_space<vmem>>, vector<1x1x256xf32>
    %16 = vector.shape_cast %15 : vector<1x1x256xf32> to vector<1x256xf32>
    %17 = vector.extract_strided_slice %16 {offsets = [0, 0], sizes = [1, 128], strides = [1, 1]} : vector<1x256xf32> to vector<1x128xf32>
    %c4 = arith.constant 4 : index
    %c0_15 = arith.constant 0 : index
    %c0_16 = arith.constant 0 : index
    %18 = vector.load %arg8[%c4, %c0_15, %c0_16] : memref<10x1x256xf32, #tpu.memory_space<vmem>>, vector<1x1x256xf32>
    %19 = vector.shape_cast %18 : vector<1x1x256xf32> to vector<1x256xf32>
    %20 = vector.extract_strided_slice %19 {offsets = [0, 0], sizes = [1, 128], strides = [1, 1]} : vector<1x256xf32> to vector<1x128xf32>
    %cst_17 = arith.constant dense<0.000000e+00> : vector<16x128xf32>
    %21 = tpu.matmul %10, %12, %cst_17 {dimension_numbers = #tpu.dot_dimension_numbers<[1], [0], [0], [1], [0, 0, 1, 1], [], []>} : vector<16x128xbf16>, vector<128x128xbf16>, vector<16x128xf32> -> vector<16x128xf32>
    %22 = vector.broadcast %17 : vector<1x128xf32> to vector<16x128xf32>
    %23 = arith.addf %21, %22 : vector<16x128xf32>
    %cst_18 = arith.constant 0.000000e+00 : f32
    %24 = vector.broadcast %cst_18 : f32 to vector<16x128xf32>
    %25 = arith.maximumf %23, %24 : vector<16x128xf32>
    %26 = arith.truncf %25 : vector<16x128xf32> to vector<16x128xbf16>
    %cst_19 = arith.constant dense<0.000000e+00> : vector<16x128xf32>
    %27 = tpu.matmul %26, %14, %cst_19 {dimension_numbers = #tpu.dot_dimension_numbers<[1], [0], [0], [1], [0, 0, 1, 1], [], []>} : vector<16x128xbf16>, vector<128x128xbf16>, vector<16x128xf32> -> vector<16x128xf32>
    %28 = vector.broadcast %20 : vector<1x128xf32> to vector<16x128xf32>
    %29 = arith.addf %27, %28 : vector<16x128xf32>
    %30 = arith.extf %10 : vector<16x128xbf16> to vector<16x128xf32>
    %31 = arith.addf %29, %30 : vector<16x128xf32>
    %cst_20 = arith.constant 0.000000e+00 : f32
    %32 = vector.broadcast %cst_20 : f32 to vector<16x128xf32>
    %33 = arith.maximumf %31, %32 : vector<16x128xf32>
    %34 = arith.truncf %33 : vector<16x128xf32> to vector<16x128xbf16>
    %c1_21 = arith.constant 1 : index
    %c0_22 = arith.constant 0 : index
    %c0_23 = arith.constant 0 : index
    %35 = vector.load %arg3[%c1_21, %c0_22, %c0_23] : memref<3x128x128xbf16, #tpu.memory_space<vmem>>, vector<1x128x128xbf16>
    %36 = vector.shape_cast %35 : vector<1x128x128xbf16> to vector<128x128xbf16>
    %c1_24 = arith.constant 1 : index
    %c0_25 = arith.constant 0 : index
    %c0_26 = arith.constant 0 : index
    %37 = vector.load %arg4[%c1_24, %c0_25, %c0_26] : memref<3x128x128xbf16, #tpu.memory_space<vmem>>, vector<1x128x128xbf16>
    %38 = vector.shape_cast %37 : vector<1x128x128xbf16> to vector<128x128xbf16>
    %c2 = arith.constant 2 : index
    %c0_27 = arith.constant 0 : index
    %c0_28 = arith.constant 0 : index
    %39 = vector.load %arg8[%c2, %c0_27, %c0_28] : memref<10x1x256xf32, #tpu.memory_space<vmem>>, vector<1x1x256xf32>
    %40 = vector.shape_cast %39 : vector<1x1x256xf32> to vector<1x256xf32>
    %41 = vector.extract_strided_slice %40 {offsets = [0, 0], sizes = [1, 128], strides = [1, 1]} : vector<1x256xf32> to vector<1x128xf32>
    %c5 = arith.constant 5 : index
    %c0_29 = arith.constant 0 : index
    %c0_30 = arith.constant 0 : index
    %42 = vector.load %arg8[%c5, %c0_29, %c0_30] : memref<10x1x256xf32, #tpu.memory_space<vmem>>, vector<1x1x256xf32>
    %43 = vector.shape_cast %42 : vector<1x1x256xf32> to vector<1x256xf32>
    %44 = vector.extract_strided_slice %43 {offsets = [0, 0], sizes = [1, 128], strides = [1, 1]} : vector<1x256xf32> to vector<1x128xf32>
    %cst_31 = arith.constant dense<0.000000e+00> : vector<16x128xf32>
    %45 = tpu.matmul %34, %36, %cst_31 {dimension_numbers = #tpu.dot_dimension_numbers<[1], [0], [0], [1], [0, 0, 1, 1], [], []>} : vector<16x128xbf16>, vector<128x128xbf16>, vector<16x128xf32> -> vector<16x128xf32>
    %46 = vector.broadcast %41 : vector<1x128xf32> to vector<16x128xf32>
    %47 = arith.addf %45, %46 : vector<16x128xf32>
    %cst_32 = arith.constant 0.000000e+00 : f32
    %48 = vector.broadcast %cst_32 : f32 to vector<16x128xf32>
    %49 = arith.maximumf %47, %48 : vector<16x128xf32>
    %50 = arith.truncf %49 : vector<16x128xf32> to vector<16x128xbf16>
    %cst_33 = arith.constant dense<0.000000e+00> : vector<16x128xf32>
    %51 = tpu.matmul %50, %38, %cst_33 {dimension_numbers = #tpu.dot_dimension_numbers<[1], [0], [0], [1], [0, 0, 1, 1], [], []>} : vector<16x128xbf16>, vector<128x128xbf16>, vector<16x128xf32> -> vector<16x128xf32>
    %52 = vector.broadcast %44 : vector<1x128xf32> to vector<16x128xf32>
    %53 = arith.addf %51, %52 : vector<16x128xf32>
    %54 = arith.extf %34 : vector<16x128xbf16> to vector<16x128xf32>
    %55 = arith.addf %53, %54 : vector<16x128xf32>
    %cst_34 = arith.constant 0.000000e+00 : f32
    %56 = vector.broadcast %cst_34 : f32 to vector<16x128xf32>
    %57 = arith.maximumf %55, %56 : vector<16x128xf32>
    %58 = arith.truncf %57 : vector<16x128xf32> to vector<16x128xbf16>
    %c2_35 = arith.constant 2 : index
    %c0_36 = arith.constant 0 : index
    %c0_37 = arith.constant 0 : index
    %59 = vector.load %arg3[%c2_35, %c0_36, %c0_37] : memref<3x128x128xbf16, #tpu.memory_space<vmem>>, vector<1x128x128xbf16>
    %60 = vector.shape_cast %59 : vector<1x128x128xbf16> to vector<128x128xbf16>
    %c2_38 = arith.constant 2 : index
    %c0_39 = arith.constant 0 : index
    %c0_40 = arith.constant 0 : index
    %61 = vector.load %arg4[%c2_38, %c0_39, %c0_40] : memref<3x128x128xbf16, #tpu.memory_space<vmem>>, vector<1x128x128xbf16>
    %62 = vector.shape_cast %61 : vector<1x128x128xbf16> to vector<128x128xbf16>
    %c3 = arith.constant 3 : index
    %c0_41 = arith.constant 0 : index
    %c0_42 = arith.constant 0 : index
    %63 = vector.load %arg8[%c3, %c0_41, %c0_42] : memref<10x1x256xf32, #tpu.memory_space<vmem>>, vector<1x1x256xf32>
    %64 = vector.shape_cast %63 : vector<1x1x256xf32> to vector<1x256xf32>
    %65 = vector.extract_strided_slice %64 {offsets = [0, 0], sizes = [1, 128], strides = [1, 1]} : vector<1x256xf32> to vector<1x128xf32>
    %c6 = arith.constant 6 : index
    %c0_43 = arith.constant 0 : index
    %c0_44 = arith.constant 0 : index
    %66 = vector.load %arg8[%c6, %c0_43, %c0_44] : memref<10x1x256xf32, #tpu.memory_space<vmem>>, vector<1x1x256xf32>
    %67 = vector.shape_cast %66 : vector<1x1x256xf32> to vector<1x256xf32>
    %68 = vector.extract_strided_slice %67 {offsets = [0, 0], sizes = [1, 128], strides = [1, 1]} : vector<1x256xf32> to vector<1x128xf32>
    %cst_45 = arith.constant dense<0.000000e+00> : vector<16x128xf32>
    %69 = tpu.matmul %58, %60, %cst_45 {dimension_numbers = #tpu.dot_dimension_numbers<[1], [0], [0], [1], [0, 0, 1, 1], [], []>} : vector<16x128xbf16>, vector<128x128xbf16>, vector<16x128xf32> -> vector<16x128xf32>
    %70 = vector.broadcast %65 : vector<1x128xf32> to vector<16x128xf32>
    %71 = arith.addf %69, %70 : vector<16x128xf32>
    %cst_46 = arith.constant 0.000000e+00 : f32
    %72 = vector.broadcast %cst_46 : f32 to vector<16x128xf32>
    %73 = arith.maximumf %71, %72 : vector<16x128xf32>
    %74 = arith.truncf %73 : vector<16x128xf32> to vector<16x128xbf16>
    %cst_47 = arith.constant dense<0.000000e+00> : vector<16x128xf32>
    %75 = tpu.matmul %74, %62, %cst_47 {dimension_numbers = #tpu.dot_dimension_numbers<[1], [0], [0], [1], [0, 0, 1, 1], [], []>} : vector<16x128xbf16>, vector<128x128xbf16>, vector<16x128xf32> -> vector<16x128xf32>
    %76 = vector.broadcast %68 : vector<1x128xf32> to vector<16x128xf32>
    %77 = arith.addf %75, %76 : vector<16x128xf32>
    %78 = arith.extf %58 : vector<16x128xbf16> to vector<16x128xf32>
    %79 = arith.addf %77, %78 : vector<16x128xf32>
    %cst_48 = arith.constant 0.000000e+00 : f32
    %80 = vector.broadcast %cst_48 : f32 to vector<16x128xf32>
    %81 = arith.maximumf %79, %80 : vector<16x128xf32>
    %82 = arith.truncf %81 : vector<16x128xf32> to vector<16x128xbf16>
    %c0_49 = arith.constant 0 : index
    %c0_50 = arith.constant 0 : index
    %83 = vector.load %arg5[%c0_49, %c0_50] : memref<128x256xbf16, #tpu.memory_space<vmem>>, vector<128x256xbf16>
    %c7 = arith.constant 7 : index
    %c0_51 = arith.constant 0 : index
    %c0_52 = arith.constant 0 : index
    %84 = vector.load %arg8[%c7, %c0_51, %c0_52] : memref<10x1x256xf32, #tpu.memory_space<vmem>>, vector<1x1x256xf32>
    %85 = vector.shape_cast %84 : vector<1x1x256xf32> to vector<1x256xf32>
    %cst_53 = arith.constant dense<0.000000e+00> : vector<16x256xf32>
    %86 = tpu.matmul %82, %83, %cst_53 {dimension_numbers = #tpu.dot_dimension_numbers<[1], [0], [0], [1], [0, 0, 1, 1], [], []>} : vector<16x128xbf16>, vector<128x256xbf16>, vector<16x256xf32> -> vector<16x256xf32>
    %87 = vector.broadcast %85 : vector<1x256xf32> to vector<16x256xf32>
    %88 = arith.addf %86, %87 : vector<16x256xf32>
    %cst_54 = arith.constant 0.000000e+00 : f32
    %89 = vector.broadcast %cst_54 : f32 to vector<16x256xf32>
    %90 = arith.maximumf %88, %89 : vector<16x256xf32>
    %91 = arith.truncf %90 : vector<16x256xf32> to vector<16x256xbf16>
    %92 = vector.extract_strided_slice %91 {offsets = [0, 0], sizes = [16, 128], strides = [1, 1]} : vector<16x256xbf16> to vector<16x128xbf16>
    %93 = vector.extract_strided_slice %91 {offsets = [0, 128], sizes = [16, 128], strides = [1, 1]} : vector<16x256xbf16> to vector<16x128xbf16>
    %c0_55 = arith.constant 0 : index
    %c0_56 = arith.constant 0 : index
    %94 = vector.load %arg6[%c0_55, %c0_56] : memref<128x128xbf16, #tpu.memory_space<vmem>>, vector<128x128xbf16>
    %c8 = arith.constant 8 : index
    %c0_57 = arith.constant 0 : index
    %c0_58 = arith.constant 0 : index
    %95 = vector.load %arg8[%c8, %c0_57, %c0_58] : memref<10x1x256xf32, #tpu.memory_space<vmem>>, vector<1x1x256xf32>
    %96 = vector.shape_cast %95 : vector<1x1x256xf32> to vector<1x256xf32>
    %97 = vector.extract_strided_slice %96 {offsets = [0, 0], sizes = [1, 128], strides = [1, 1]} : vector<1x256xf32> to vector<1x128xf32>
    %cst_59 = arith.constant dense<0.000000e+00> : vector<16x128xf32>
    %98 = tpu.matmul %92, %94, %cst_59 {dimension_numbers = #tpu.dot_dimension_numbers<[1], [0], [0], [1], [0, 0, 1, 1], [], []>} : vector<16x128xbf16>, vector<128x128xbf16>, vector<16x128xf32> -> vector<16x128xf32>
    %99 = vector.broadcast %97 : vector<1x128xf32> to vector<16x128xf32>
    %100 = arith.addf %98, %99 : vector<16x128xf32>
    %c0_60 = arith.constant 0 : index
    %c0_61 = arith.constant 0 : index
    %101 = vector.load %arg9[%c0_60, %c0_61] : memref<16x128xf32, #tpu.memory_space<vmem>>, vector<16x128xf32>
    tpu.vector_store %arg9[%c0_60, %c0_61], %100 {strides = array<i32>} : memref<16x128xf32, #tpu.memory_space<vmem>>, vector<16x128xf32>,
    %c0_62 = arith.constant 0 : index
    %c0_63 = arith.constant 0 : index
    %102 = vector.load %arg7[%c0_62, %c0_63] : memref<128x128xbf16, #tpu.memory_space<vmem>>, vector<128x128xbf16>
    %c9 = arith.constant 9 : index
    %c0_64 = arith.constant 0 : index
    %c0_65 = arith.constant 0 : index
    %103 = vector.load %arg8[%c9, %c0_64, %c0_65] : memref<10x1x256xf32, #tpu.memory_space<vmem>>, vector<1x1x256xf32>
    %104 = vector.shape_cast %103 : vector<1x1x256xf32> to vector<1x256xf32>
    %105 = vector.extract_strided_slice %104 {offsets = [0, 0], sizes = [1, 128], strides = [1, 1]} : vector<1x256xf32> to vector<1x128xf32>
    %cst_66 = arith.constant dense<0.000000e+00> : vector<16x128xf32>
    %106 = tpu.matmul %93, %102, %cst_66 {dimension_numbers = #tpu.dot_dimension_numbers<[1], [0], [0], [1], [0, 0, 1, 1], [], []>} : vector<16x128xbf16>, vector<128x128xbf16>, vector<16x128xf32> -> vector<16x128xf32>
    %107 = vector.broadcast %105 : vector<1x128xf32> to vector<16x128xf32>
    %108 = arith.addf %106, %107 : vector<16x128xf32>
    %109 = math.tanh %108 : vector<16x128xf32>
    %c0_67 = arith.constant 0 : index
    %c0_68 = arith.constant 0 : index
    %110 = vector.load %arg10[%c0_67, %c0_68] : memref<16x128xf32, #tpu.memory_space<vmem>>, vector<16x128xf32>
    tpu.vector_store %arg10[%c0_67, %c0_68], %109 {strides = array<i32>} : memref<16x128xf32, #tpu.memory_space<vmem>>, vector<16x128xf32>,
    return
  }
  func.func @transform_0(%arg0: i32) -> (i32, i32) {
    %c0_i32 = arith.constant 0 : i32
    %c0_i32_0 = arith.constant 0 : i32
    return %arg0, %c0_i32 : i32, i32
  }
  func.func @transform_1(%arg0: i32) -> (i32, i32) {
    %c0_i32 = arith.constant 0 : i32
    %c0_i32_0 = arith.constant 0 : i32
    %c0_i32_1 = arith.constant 0 : i32
    return %c0_i32, %c0_i32_0 : i32, i32
  }
  func.func @transform_2(%arg0: i32) -> (i32, i32, i32) {
    %c0_i32 = arith.constant 0 : i32
    %c0_i32_0 = arith.constant 0 : i32
    %c0_i32_1 = arith.constant 0 : i32
    %c0_i32_2 = arith.constant 0 : i32
    return %c0_i32, %c0_i32_0, %c0_i32_1 : i32, i32, i32
  }
  func.func @transform_3(%arg0: i32) -> (i32, i32, i32) {
    %c0_i32 = arith.constant 0 : i32
    %c0_i32_0 = arith.constant 0 : i32
    %c0_i32_1 = arith.constant 0 : i32
    %c0_i32_2 = arith.constant 0 : i32
    return %c0_i32, %c0_i32_0, %c0_i32_1 : i32, i32, i32
  }
  func.func @transform_4(%arg0: i32) -> (i32, i32) {
    %c0_i32 = arith.constant 0 : i32
    %c0_i32_0 = arith.constant 0 : i32
    %c0_i32_1 = arith.constant 0 : i32
    return %c0_i32, %c0_i32_0 : i32, i32
  }
  func.func @transform_5(%arg0: i32) -> (i32, i32) {
    %c0_i32 = arith.constant 0 : i32
    %c0_i32_0 = arith.constant 0 : i32
    %c0_i32_1 = arith.constant 0 : i32
    return %c0_i32, %c0_i32_0 : i32, i32
  }
  func.func @transform_6(%arg0: i32) -> (i32, i32) {
    %c0_i32 = arith.constant 0 : i32
    %c0_i32_0 = arith.constant 0 : i32
    %c0_i32_1 = arith.constant 0 : i32
    return %c0_i32, %c0_i32_0 : i32, i32
  }
  func.func @transform_7(%arg0: i32) -> (i32, i32, i32) {
    %c0_i32 = arith.constant 0 : i32
    %c0_i32_0 = arith.constant 0 : i32
    %c0_i32_1 = arith.constant 0 : i32
    %c0_i32_2 = arith.constant 0 : i32
    return %c0_i32, %c0_i32_0, %c0_i32_1 : i32, i32, i32
  }
  func.func @transform_8(%arg0: i32) -> (i32, i32) {
    %c0_i32 = arith.constant 0 : i32
    %c0_i32_0 = arith.constant 0 : i32
    return %arg0, %c0_i32 : i32, i32
  }
  func.func @transform_9(%arg0: i32) -> (i32, i32) {
    %c0_i32 = arith.constant 0 : i32
    %c0_i32_0 = arith.constant 0 : i32
    return %arg0, %c0_i32 : i32, i32
  }
}

</mosaic_0001>

<llo_original>
// kernel: _forward_impl.1
$region0: #{_forward_impl.1}
  #allocation0 [shape = 'u32[]', space=smem, size = 0x4, offset = 0x4, fixed_abs, tag = 'smem constant byte address 0x4 - core index']
  #allocation1 [shape = 'u32[144,128]{1,0:T(1,128)}', space=vmem, size = 0x12000, scoped, tag = 'internal scratch']
  %s0 = inlined_call_operand.vmem [shape: bf16[16,128], index: 0, kind: input, shape index: {}]
  %s1 = inlined_call_operand.hbm [shape: bf16[128,128], index: 1, kind: input, shape index: {}]
  %s2 = inlined_call_operand.hbm [shape: bf16[3,128,128], index: 2, kind: input, shape index: {}]
  %s3 = inlined_call_operand.hbm [shape: bf16[3,128,128], index: 3, kind: input, shape index: {}]
  %s4 = inlined_call_operand.hbm [shape: bf16[128,256], index: 4, kind: input, shape index: {}]
  %s5 = inlined_call_operand.hbm [shape: bf16[128,128], index: 5, kind: input, shape index: {}]
  %s6 = inlined_call_operand.hbm [shape: bf16[128,128], index: 6, kind: input, shape index: {}]
  %s7 = inlined_call_operand.vmem [shape: f32[10,1,256], index: 7, kind: input, shape index: {}]
  %s8 = inlined_call_operand.vmem [shape: f32[16,128], index: 8, kind: output, shape index: {0}]
  %s9 = inlined_call_operand.vmem [shape: f32[16,128], index: 9, kind: output, shape index: {1}]
  %10 = xla_tuple %s8, %s9
  %s11 = sld [smem:[#allocation0]]
  $region74: #{_forward_impl.1} parent=0
    _
  %s13 = ssub.s32 1, %s11
  %s14 = scalar_select 0, %s13, %s11
  $region1: #{_forward_impl.1} parent=0
    #allocation2 [shape = 'u8[32768]{0}', space=vmem, size = 0x8000, scoped, tag = 'input window, operand 1, single buffered']
    #allocation3 [shape = 's32[1]{0}', space=sflag, size = 0x4, scoped, tag = 'scoped memory for _forward_impl.1']
    #allocation4 [shape = 'u8[98304]{0}', space=vmem, size = 0x18000, scoped, tag = 'input window, operand 2, single buffered']
    #allocation5 [shape = 's32[1]{0}', space=sflag, size = 0x4, scoped, tag = 'scoped memory for _forward_impl.1']
    #allocation6 [shape = 'u8[98304]{0}', space=vmem, size = 0x18000, scoped, tag = 'input window, operand 3, single buffered']
    #allocation7 [shape = 'u8[65536]{0}', space=vmem, size = 0x10000, scoped, tag = 'input window, operand 4, single buffered']
    #allocation8 [shape = 's32[1]{0}', space=sflag, size = 0x4, scoped, tag = 'scoped memory for _forward_impl.1']
    #allocation9 [shape = 'u8[32768]{0}', space=vmem, size = 0x8000, scoped, tag = 'input window, operand 5, single buffered']
    #allocation10 [shape = 'u8[32768]{0}', space=vmem, size = 0x8000, scoped, tag = 'input window, operand 6, single buffered']
    #allocation11 [shape = 's32[1]{0}', space=sflag, size = 0x4, scoped, tag = 'scoped memory for _forward_impl.1']
    %15 = vsyncpa [#allocation3], 0
    %16 = vsyncpa [#allocation5], 0
    %17 = vsyncpa [#allocation8], 0
    %18 = vsyncpa [#allocation11], 0
    // Predicated region
    $region2: #{_forward_impl.1} parent=1 // pred_check
      _
    $region3: #{_forward_impl.1} parent=1 // pred_check_branch
      %20 = sbr.rel (0) target = $region5
    $region4: #{_forward_impl.1} parent=1 // pred_region
      _
    $region5: #{_forward_impl.1} parent=1 // pred_fallthru
      _
    // Predicated region
    $region6: #{_forward_impl.1} parent=1 // pred_check
      _
    $region7: #{_forward_impl.1} parent=1 // pred_check_branch
      %22 = sbr.rel (0) target = $region9
    $region8: #{_forward_impl.1} parent=1 // pred_region
      %s24 = ssub.s32 1024, 1024
      %25 = vsyncadd [#allocation3], %s24
      %s26 = sshll.u32 [#allocation2], 4
      %s27 = int_to_ptr.vmem [resolvable:$true] %s26
      %32 = dma.hbm_to_vmem [thread:$0]  %s1, 1024, %s27, [#allocation3], 64, 64, 4
    $region9: #{_forward_impl.1} parent=1 // pred_fallthru
      _
    // Predicated region
    $region10: #{_forward_impl.1} parent=1 // pred_check
      _
    $region11: #{_forward_impl.1} parent=1 // pred_check_branch
      %34 = sbr.rel (0) target = $region13
    $region12: #{_forward_impl.1} parent=1 // pred_region
      %s36 = ssub.s32 3072, 3072
      %37 = vsyncadd [#allocation5], %s36
      %s38 = sshll.u32 [#allocation4], 4
      %s39 = int_to_ptr.vmem [resolvable:$true] %s38
      %44 = dma.hbm_to_vmem [thread:$0]  %s2, 3072, %s39, [#allocation5], 64, 64, 4
    $region13: #{_forward_impl.1} parent=1 // pred_fallthru
      _
    // Predicated region
    $region14: #{_forward_impl.1} parent=1 // pred_check
      _
    $region15: #{_forward_impl.1} parent=1 // pred_check_branch
      %46 = sbr.rel (0) target = $region17
    $region16: #{_forward_impl.1} parent=1 // pred_region
      %s48 = ssub.s32 3072, 3072
      %49 = vsyncadd [#allocation5], %s48
      %s50 = sshll.u32 [#allocation6], 4
      %s51 = int_to_ptr.vmem [resolvable:$true] %s50
      %56 = dma.hbm_to_vmem [thread:$0]  %s3, 3072, %s51, [#allocation5], 64, 64, 4
    $region17: #{_forward_impl.1} parent=1 // pred_fallthru
      _
    // Predicated region
    $region18: #{_forward_impl.1} parent=1 // pred_check
      _
    $region19: #{_forward_impl.1} parent=1 // pred_check_branch
      %58 = sbr.rel (0) target = $region21
    $region20: #{_forward_impl.1} parent=1 // pred_region
      %s60 = ssub.s32 2048, 2048
      %61 = vsyncadd [#allocation8], %s60
      %s62 = sshll.u32 [#allocation7], 4
      %s63 = int_to_ptr.vmem [resolvable:$true] %s62
      %68 = dma.hbm_to_vmem [thread:$0]  %s4, 2048, %s63, [#allocation8], 128, 128, 8
    $region21: #{_forward_impl.1} parent=1 // pred_fallthru
      _
    // Predicated region
    $region22: #{_forward_impl.1} parent=1 // pred_check
      _
    $region23: #{_forward_impl.1} parent=1 // pred_check_branch
      %70 = sbr.rel (0) target = $region25
    $region24: #{_forward_impl.1} parent=1 // pred_region
      %s72 = ssub.s32 1024, 1024
      %73 = vsyncadd [#allocation8], %s72
      %s74 = sshll.u32 [#allocation9], 4
      %s75 = int_to_ptr.vmem [resolvable:$true] %s74
      %80 = dma.hbm_to_vmem [thread:$0]  %s5, 1024, %s75, [#allocation8], 64, 64, 4
    $region25: #{_forward_impl.1} parent=1 // pred_fallthru
      _
    // Predicated region
    $region26: #{_forward_impl.1} parent=1 // pred_check
      _
    $region27: #{_forward_impl.1} parent=1 // pred_check_branch
      %82 = sbr.rel (0) target = $region29
    $region28: #{_forward_impl.1} parent=1 // pred_region
      %s84 = ssub.s32 1024, 1024
      %85 = vsyncadd [#allocation11], %s84
      %s86 = sshll.u32 [#allocation10], 4
      %s87 = int_to_ptr.vmem [resolvable:$true] %s86
      %92 = dma.hbm_to_vmem [thread:$0]  %s6, 1024, %s87, [#allocation11], 64, 64, 4
    $region29: #{_forward_impl.1} parent=1 // pred_fallthru
      _
    // Predicated region
    $region30: #{_forward_impl.1} parent=1 // pred_check
      _
    $region31: #{_forward_impl.1} parent=1 // pred_check_branch
      %94 = sbr.rel (0) target = $region33
    $region32: #{_forward_impl.1} parent=1 // pred_region
      _
    $region33: #{_forward_impl.1} parent=1 // pred_fallthru
      _
    // Predicated region
    $region34: #{_forward_impl.1} parent=1 // pred_check
      _
    $region35: #{_forward_impl.1} parent=1 // pred_check_branch
      %96 = sbr.rel (0) target = $region37
    $region36: #{_forward_impl.1} parent=1 // pred_region
      %97 = dma.done [#allocation3], 1024
    $region37: #{_forward_impl.1} parent=1 // pred_fallthru
      _
    // Predicated region
    $region38: #{_forward_impl.1} parent=1 // pred_check
      _
    $region39: #{_forward_impl.1} parent=1 // pred_check_branch
      %99 = sbr.rel (0) target = $region41
    $region40: #{_forward_impl.1} parent=1 // pred_region
      %100 = dma.done [#allocation5], 3072
    $region41: #{_forward_impl.1} parent=1 // pred_fallthru
      _
    // Predicated region
    $region42: #{_forward_impl.1} parent=1 // pred_check
      _
    $region43: #{_forward_impl.1} parent=1 // pred_check_branch
      %102 = sbr.rel (0) target = $region45
    $region44: #{_forward_impl.1} parent=1 // pred_region
      %103 = dma.done [#allocation5], 3072
    $region45: #{_forward_impl.1} parent=1 // pred_fallthru
      _
    // Predicated region
    $region46: #{_forward_impl.1} parent=1 // pred_check
      _
    $region47: #{_forward_impl.1} parent=1 // pred_check_branch
      %105 = sbr.rel (0) target = $region49
    $region48: #{_forward_impl.1} parent=1 // pred_region
      %106 = dma.done [#allocation8], 2048
    $region49: #{_forward_impl.1} parent=1 // pred_fallthru
      _
    // Predicated region
    $region50: #{_forward_impl.1} parent=1 // pred_check
      _
    $region51: #{_forward_impl.1} parent=1 // pred_check_branch
      %108 = sbr.rel (0) target = $region53
    $region52: #{_forward_impl.1} parent=1 // pred_region
      %109 = dma.done [#allocation8], 1024
    $region53: #{_forward_impl.1} parent=1 // pred_fallthru
      _
    // Predicated region
    $region54: #{_forward_impl.1} parent=1 // pred_check
      _
    $region55: #{_forward_impl.1} parent=1 // pred_check_branch
      %111 = sbr.rel (0) target = $region57
    $region56: #{_forward_impl.1} parent=1 // pred_region
      %112 = dma.done [#allocation11], 1024
    $region57: #{_forward_impl.1} parent=1 // pred_fallthru
      _
    %v114 = vld [vmem:[%s0] sm:$0xf]
    %v115 = vld [vmem:[%s0 + $0x4] sm:$0xf]
    %v116 = vld [vmem:[#allocation2] sm:$0xf]
    %v117 = vld [vmem:[#allocation2 + $0x4] sm:$0xf]
    %v118 = vld [vmem:[#allocation2 + $0x8] sm:$0xf]
    %v119 = vld [vmem:[#allocation2 + $0xc] sm:$0xf]
    %v120 = vld [vmem:[#allocation2 + $0x10] sm:$0xf]
    %v121 = vld [vmem:[#allocation2 + $0x14] sm:$0xf]
    %v122 = vld [vmem:[#allocation2 + $0x18] sm:$0xf]
    %v123 = vld [vmem:[#allocation2 + $0x1c] sm:$0xf]
    %v124 = vld [vmem:[#allocation2 + $0x20] sm:$0xf]
    %v125 = vld [vmem:[#allocation2 + $0x24] sm:$0xf]
    %v126 = vld [vmem:[#allocation2 + $0x28] sm:$0xf]
    %v127 = vld [vmem:[#allocation2 + $0x2c] sm:$0xf]
    %v128 = vld [vmem:[#allocation2 + $0x30] sm:$0xf]
    %v129 = vld [vmem:[#allocation2 + $0x34] sm:$0xf]
    %v130 = vld [vmem:[#allocation2 + $0x38] sm:$0xf]
    %v131 = vld [vmem:[#allocation2 + $0x3c] sm:$0xf]
    %v132 = vld [vmem:[%s7] sm:$0x3]
    %v134 = vlaneseq
    %v135 = vshrl.u32 %v134, 7
    %v136 = vsub.s32 0, %v135
    %v137 = vrot.slane %v132, %v136
    %v141 = vunpack.c.l.b16 %v114
    %v142 = vunpack.c.l.b16 %v115
    %v143 = vpack.c.b16 %v142, %v141
    %v161 = vunpack.c.l.b16 %v116
    %v162 = vunpack.c.l.b16 %v117
    %v163 = vunpack.c.l.b16 %v118
    %v164 = vunpack.c.l.b16 %v119
    %v165 = vunpack.c.l.b16 %v120
    %v166 = vunpack.c.l.b16 %v121
    %v167 = vunpack.c.l.b16 %v122
    %v168 = vunpack.c.l.b16 %v123
    %v169 = vunpack.c.l.b16 %v124
    %v170 = vunpack.c.l.b16 %v125
    %v171 = vunpack.c.l.b16 %v126
    %v172 = vunpack.c.l.b16 %v127
    %v173 = vunpack.c.l.b16 %v128
    %v174 = vunpack.c.l.b16 %v129
    %v175 = vunpack.c.l.b16 %v130
    %v176 = vunpack.c.l.b16 %v131
    %v177 = vpack.c.b16 %v162, %v161
    %v178 = vpack.c.b16 %v164, %v163
    %v179 = vpack.c.b16 %v166, %v165
    %v180 = vpack.c.b16 %v168, %v167
    %v181 = vpack.c.b16 %v170, %v169
    %v182 = vpack.c.b16 %v172, %v171
    %v183 = vpack.c.b16 %v174, %v173
    %v184 = vpack.c.b16 %v176, %v175
    %193 = vmatprep.subr.bf16.mxu0 0
    %194 = vmatpush1.bf16.msra.mxu0 %v177
    %195 = vmatprep.subr.bf16.mxu0 0
    %196 = vmatpush1.bf16.msra.mxu0 %v178
    %197 = vmatprep.subr.bf16.mxu0 0
    %198 = vmatpush1.bf16.msra.mxu0 %v179
    %199 = vmatprep.subr.bf16.mxu0 0
    %200 = vmatpush1.bf16.msra.mxu0 %v180
    %201 = vmatprep.subr.bf16.mxu0 0
    %202 = vmatpush1.bf16.msra.mxu0 %v181
    %203 = vmatprep.subr.bf16.mxu0 0
    %204 = vmatpush1.bf16.msra.mxu0 %v182
    %205 = vmatprep.subr.bf16.mxu0 0
    %206 = vmatpush1.bf16.msra.mxu0 %v183
    %207 = vmatprep.subr.bf16.mxu0 0
    %208 = vmatpush1.bf16.msra.mxu0 %v184
    %209 = vmatprep.subr.bf16.mxu0 0
    %210 = vmatpush1.bf16.msra.mxu0 0
    %211 = vmatprep.subr.bf16.mxu0 0
    %212 = vmatpush1.bf16.msra.mxu0 0
    %213 = vmatprep.subr.bf16.mxu0 0
    %214 = vmatpush1.bf16.msra.mxu0 0
    %215 = vmatprep.subr.bf16.mxu0 0
    %216 = vmatpush1.bf16.msra.mxu0 0
    %217 = vmatprep.subr.bf16.mxu0 0
    %218 = vmatpush1.bf16.msra.mxu0 0
    %219 = vmatprep.subr.bf16.mxu0 0
    %220 = vmatpush1.bf16.msra.mxu0 0
    %221 = vmatprep.subr.bf16.mxu0 0
    %222 = vmatpush1.bf16.msra.mxu0 0
    %223 = vmatprep.subr.bf16.mxu0 0
    %224 = vmatpush1.bf16.msra.mxu0 0
    %225 = vmatprep.mubr.bf16.mxu0 0
    %226 = vmatmul.mubr.bf16.gmra.mrb[0].mxu0 %v143
    %v227 = vpop.f32.mrb[0].mxu0
    %v228 = vadd.f32 %v137, %v227
    %v229 = vpop.f32.mrb[0].mxu0
    %v230 = vpop.f32.mrb[0].mxu0
    %v231 = vadd.f32 %v137, %v230
    %v232 = vpop.f32.mrb[0].mxu0
    %233 = vdwg.mxu0
    %v234 = vmax.f32 %v228, 0.0
    %v235 = vmax.f32 %v231, 0.0
    %v236 = vpack.c.bf16 %v235, %v234
    %v237 = vld [vmem:[#allocation4] sm:$0xf]
    %v238 = vld [vmem:[#allocation4 + $0x4] sm:$0xf]
    %v239 = vld [vmem:[#allocation4 + $0x8] sm:$0xf]
    %v240 = vld [vmem:[#allocation4 + $0xc] sm:$0xf]
    %v241 = vld [vmem:[#allocation4 + $0x10] sm:$0xf]
    %v242 = vld [vmem:[#allocation4 + $0x14] sm:$0xf]
    %v243 = vld [vmem:[#allocation4 + $0x18] sm:$0xf]
    %v244 = vld [vmem:[#allocation4 + $0x1c] sm:$0xf]
    %v245 = vld [vmem:[#allocation4 + $0x20] sm:$0xf]
    %v246 = vld [vmem:[#allocation4 + $0x24] sm:$0xf]
    %v247 = vld [vmem:[#allocation4 + $0x28] sm:$0xf]
    %v248 = vld [vmem:[#allocation4 + $0x2c] sm:$0xf]
    %v249 = vld [vmem:[#allocation4 + $0x30] sm:$0xf]
    %v250 = vld [vmem:[#allocation4 + $0x34] sm:$0xf]
    %v251 = vld [vmem:[#allocation4 + $0x38] sm:$0xf]
    %v252 = vld [vmem:[#allocation4 + $0x3c] sm:$0xf]
    %v253 = vld [vmem:[#allocation6] sm:$0xf]
    %v254 = vld [vmem:[#allocation6 + $0x4] sm:$0xf]
    %v255 = vld [vmem:[#allocation6 + $0x8] sm:$0xf]
    %v256 = vld [vmem:[#allocation6 + $0xc] sm:$0xf]
    %v257 = vld [vmem:[#allocation6 + $0x10] sm:$0xf]
    %v258 = vld [vmem:[#allocation6 + $0x14] sm:$0xf]
    %v259 = vld [vmem:[#allocation6 + $0x18] sm:$0xf]
    %v260 = vld [vmem:[#allocation6 + $0x1c] sm:$0xf]
    %v261 = vld [vmem:[#allocation6 + $0x20] sm:$0xf]
    %v262 = vld [vmem:[#allocation6 + $0x24] sm:$0xf]
    %v263 = vld [vmem:[#allocation6 + $0x28] sm:$0xf]
    %v264 = vld [vmem:[#allocation6 + $0x2c] sm:$0xf]
    %v265 = vld [vmem:[#allocation6 + $0x30] sm:$0xf]
    %v266 = vld [vmem:[#allocation6 + $0x34] sm:$0xf]
    %v267 = vld [vmem:[#allocation6 + $0x38] sm:$0xf]
    %v268 = vld [vmem:[#allocation6 + $0x3c] sm:$0xf]
    %s269 = scalar_lea.vmem %s7, 2
    %v270 = vld [vmem:[%s269] sm:$0x3]
    %s271 = scalar_lea.vmem %s7, 8
    %v272 = vld [vmem:[%s271] sm:$0x3]
    %v274 = vlaneseq
    %v275 = vshrl.u32 %v274, 7
    %v276 = vsub.s32 0, %v275
    %v277 = vrot.slane %v270, %v276
    %v295 = vunpack.c.l.b16 %v237
    %v296 = vunpack.c.l.b16 %v238
    %v297 = vunpack.c.l.b16 %v239
    %v298 = vunpack.c.l.b16 %v240
    %v299 = vunpack.c.l.b16 %v241
    %v300 = vunpack.c.l.b16 %v242
    %v301 = vunpack.c.l.b16 %v243
    %v302 = vunpack.c.l.b16 %v244
    %v303 = vunpack.c.l.b16 %v245
    %v304 = vunpack.c.l.b16 %v246
    %v305 = vunpack.c.l.b16 %v247
    %v306 = vunpack.c.l.b16 %v248
    %v307 = vunpack.c.l.b16 %v249
    %v308 = vunpack.c.l.b16 %v250
    %v309 = vunpack.c.l.b16 %v251
    %v310 = vunpack.c.l.b16 %v252
    %v311 = vpack.c.b16 %v296, %v295
    %v312 = vpack.c.b16 %v298, %v297
    %v313 = vpack.c.b16 %v300, %v299
    %v314 = vpack.c.b16 %v302, %v301
    %v315 = vpack.c.b16 %v304, %v303
    %v316 = vpack.c.b16 %v306, %v305
    %v317 = vpack.c.b16 %v308, %v307
    %v318 = vpack.c.b16 %v310, %v309
    %327 = vmatprep.subr.bf16.mxu0 0
    %328 = vmatpush1.bf16.msra.mxu0 %v311
    %329 = vmatprep.subr.bf16.mxu0 0
    %330 = vmatpush1.bf16.msra.mxu0 %v312
    %331 = vmatprep.subr.bf16.mxu0 0
    %332 = vmatpush1.bf16.msra.mxu0 %v313
    %333 = vmatprep.subr.bf16.mxu0 0
    %334 = vmatpush1.bf16.msra.mxu0 %v314
    %335 = vmatprep.subr.bf16.mxu0 0
    %336 = vmatpush1.bf16.msra.mxu0 %v315
    %337 = vmatprep.subr.bf16.mxu0 0
    %338 = vmatpush1.bf16.msra.mxu0 %v316
    %339 = vmatprep.subr.bf16.mxu0 0
    %340 = vmatpush1.bf16.msra.mxu0 %v317
    %341 = vmatprep.subr.bf16.mxu0 0
    %342 = vmatpush1.bf16.msra.mxu0 %v318
    %343 = vmatprep.subr.bf16.mxu0 0
    %344 = vmatpush1.bf16.msra.mxu0 0
    %345 = vmatprep.subr.bf16.mxu0 0
    %346 = vmatpush1.bf16.msra.mxu0 0
    %347 = vmatprep.subr.bf16.mxu0 0
    %348 = vmatpush1.bf16.msra.mxu0 0
    %349 = vmatprep.subr.bf16.mxu0 0
    %350 = vmatpush1.bf16.msra.mxu0 0
    %351 = vmatprep.subr.bf16.mxu0 0
    %352 = vmatpush1.bf16.msra.mxu0 0
    %353 = vmatprep.subr.bf16.mxu0 0
    %354 = vmatpush1.bf16.msra.mxu0 0
    %355 = vmatprep.subr.bf16.mxu0 0
    %356 = vmatpush1.bf16.msra.mxu0 0
    %357 = vmatprep.subr.bf16.mxu0 0
    %358 = vmatpush1.bf16.msra.mxu0 0
    %359 = vmatprep.mubr.bf16.mxu0 0
    %360 = vmatmul.mubr.bf16.gmra.mrb[0].mxu0 %v236
    %v361 = vpop.f32.mrb[0].mxu0
    %v362 = vadd.f32 %v277, %v361
    %v363 = vpop.f32.mrb[0].mxu0
    %v364 = vpop.f32.mrb[0].mxu0
    %v365 = vadd.f32 %v277, %v364
    %v366 = vpop.f32.mrb[0].mxu0
    %367 = vdwg.mxu0
    %v368 = vmax.f32 %v362, 0.0
    %v369 = vmax.f32 %v365, 0.0
    %v370 = vpack.c.bf16 %v369, %v368
    %v372 = vlaneseq
    %v373 = vshrl.u32 %v372, 7
    %v374 = vsub.s32 0, %v373
    %v375 = vrot.slane %v272, %v374
    %v393 = vunpack.c.l.b16 %v253
    %v394 = vunpack.c.l.b16 %v254
    %v395 = vunpack.c.l.b16 %v255
    %v396 = vunpack.c.l.b16 %v256
    %v397 = vunpack.c.l.b16 %v257
    %v398 = vunpack.c.l.b16 %v258
    %v399 = vunpack.c.l.b16 %v259
    %v400 = vunpack.c.l.b16 %v260
    %v401 = vunpack.c.l.b16 %v261
    %v402 = vunpack.c.l.b16 %v262
    %v403 = vunpack.c.l.b16 %v263
    %v404 = vunpack.c.l.b16 %v264
    %v405 = vunpack.c.l.b16 %v265
    %v406 = vunpack.c.l.b16 %v266
    %v407 = vunpack.c.l.b16 %v267
    %v408 = vunpack.c.l.b16 %v268
    %v409 = vpack.c.b16 %v394, %v393
    %v410 = vpack.c.b16 %v396, %v395
    %v411 = vpack.c.b16 %v398, %v397
    %v412 = vpack.c.b16 %v400, %v399
    %v413 = vpack.c.b16 %v402, %v401
    %v414 = vpack.c.b16 %v404, %v403
    %v415 = vpack.c.b16 %v406, %v405
    %v416 = vpack.c.b16 %v408, %v407
    %425 = vmatprep.subr.bf16.mxu0 0
    %426 = vmatpush1.bf16.msra.mxu0 %v409
    %427 = vmatprep.subr.bf16.mxu0 0
    %428 = vmatpush1.bf16.msra.mxu0 %v410
    %429 = vmatprep.subr.bf16.mxu0 0
    %430 = vmatpush1.bf16.msra.mxu0 %v411
    %431 = vmatprep.subr.bf16.mxu0 0
    %432 = vmatpush1.bf16.msra.mxu0 %v412
    %433 = vmatprep.subr.bf16.mxu0 0
    %434 = vmatpush1.bf16.msra.mxu0 %v413
    %435 = vmatprep.subr.bf16.mxu0 0
    %436 = vmatpush1.bf16.msra.mxu0 %v414
    %437 = vmatprep.subr.bf16.mxu0 0
    %438 = vmatpush1.bf16.msra.mxu0 %v415
    %439 = vmatprep.subr.bf16.mxu0 0
    %440 = vmatpush1.bf16.msra.mxu0 %v416
    %441 = vmatprep.subr.bf16.mxu0 0
    %442 = vmatpush1.bf16.msra.mxu0 0
    %443 = vmatprep.subr.bf16.mxu0 0
    %444 = vmatpush1.bf16.msra.mxu0 0
    %445 = vmatprep.subr.bf16.mxu0 0
    %446 = vmatpush1.bf16.msra.mxu0 0
    %447 = vmatprep.subr.bf16.mxu0 0
    %448 = vmatpush1.bf16.msra.mxu0 0
    %449 = vmatprep.subr.bf16.mxu0 0
    %450 = vmatpush1.bf16.msra.mxu0 0
    %451 = vmatprep.subr.bf16.mxu0 0
    %452 = vmatpush1.bf16.msra.mxu0 0
    %453 = vmatprep.subr.bf16.mxu0 0
    %454 = vmatpush1.bf16.msra.mxu0 0
    %455 = vmatprep.subr.bf16.mxu0 0
    %456 = vmatpush1.bf16.msra.mxu0 0
    %457 = vmatprep.mubr.bf16.mxu0 0
    %458 = vmatmul.mubr.bf16.gmra.mrb[0].mxu0 %v370
    %v459 = vpop.f32.mrb[0].mxu0
    %v460 = vadd.f32 %v375, %v459
    %v461 = vpop.f32.mrb[0].mxu0
    %v462 = vpop.f32.mrb[0].mxu0
    %v463 = vadd.f32 %v375, %v462
    %v464 = vpop.f32.mrb[0].mxu0
    %465 = vdwg.mxu0
    %v466 = vunpack.c.l.bf16 %v236
    %v467 = vunpack.c.h.bf16 %v236
    %v468 = vadd.f32 %v460, %v466
    %v469 = vadd.f32 %v463, %v467
    %v470 = vmax.f32 %v468, 0.0
    %v471 = vmax.f32 %v469, 0.0
    %v472 = vpack.c.bf16 %v471, %v470
    %s473 = scalar_lea.vmem [#allocation4], 64
    %v474 = vld [vmem:[%s473] sm:$0xf]
    %v475 = vld [vmem:[%s473 + $0x4] sm:$0xf]
    %v476 = vld [vmem:[%s473 + $0x8] sm:$0xf]
    %v477 = vld [vmem:[%s473 + $0xc] sm:$0xf]
    %v478 = vld [vmem:[%s473 + $0x10] sm:$0xf]
    %v479 = vld [vmem:[%s473 + $0x14] sm:$0xf]
    %v480 = vld [vmem:[%s473 + $0x18] sm:$0xf]
    %v481 = vld [vmem:[%s473 + $0x1c] sm:$0xf]
    %v482 = vld [vmem:[%s473 + $0x20] sm:$0xf]
    %v483 = vld [vmem:[%s473 + $0x24] sm:$0xf]
    %v484 = vld [vmem:[%s473 + $0x28] sm:$0xf]
    %v485 = vld [vmem:[%s473 + $0x2c] sm:$0xf]
    %v486 = vld [vmem:[%s473 + $0x30] sm:$0xf]
    %v487 = vld [vmem:[%s473 + $0x34] sm:$0xf]
    %v488 = vld [vmem:[%s473 + $0x38] sm:$0xf]
    %v489 = vld [vmem:[%s473 + $0x3c] sm:$0xf]
    %s490 = scalar_lea.vmem [#allocation6], 64
    %v491 = vld [vmem:[%s490] sm:$0xf]
    %v492 = vld [vmem:[%s490 + $0x4] sm:$0xf]
    %v493 = vld [vmem:[%s490 + $0x8] sm:$0xf]
    %v494 = vld [vmem:[%s490 + $0xc] sm:$0xf]
    %v495 = vld [vmem:[%s490 + $0x10] sm:$0xf]
    %v496 = vld [vmem:[%s490 + $0x14] sm:$0xf]
    %v497 = vld [vmem:[%s490 + $0x18] sm:$0xf]
    %v498 = vld [vmem:[%s490 + $0x1c] sm:$0xf]
    %v499 = vld [vmem:[%s490 + $0x20] sm:$0xf]
    %v500 = vld [vmem:[%s490 + $0x24] sm:$0xf]
    %v501 = vld [vmem:[%s490 + $0x28] sm:$0xf]
    %v502 = vld [vmem:[%s490 + $0x2c] sm:$0xf]
    %v503 = vld [vmem:[%s490 + $0x30] sm:$0xf]
    %v504 = vld [vmem:[%s490 + $0x34] sm:$0xf]
    %v505 = vld [vmem:[%s490 + $0x38] sm:$0xf]
    %v506 = vld [vmem:[%s490 + $0x3c] sm:$0xf]
    %s507 = scalar_lea.vmem %s7, 4
    %v508 = vld [vmem:[%s507] sm:$0x3]
    %s509 = scalar_lea.vmem %s7, 10
    %v510 = vld [vmem:[%s509] sm:$0x3]
    %v512 = vlaneseq
    %v513 = vshrl.u32 %v512, 7
    %v514 = vsub.s32 0, %v513
    %v515 = vrot.slane %v508, %v514
    %v533 = vunpack.c.l.b16 %v474
    %v534 = vunpack.c.l.b16 %v475
    %v535 = vunpack.c.l.b16 %v476
    %v536 = vunpack.c.l.b16 %v477
    %v537 = vunpack.c.l.b16 %v478
    %v538 = vunpack.c.l.b16 %v479
    %v539 = vunpack.c.l.b16 %v480
    %v540 = vunpack.c.l.b16 %v481
    %v541 = vunpack.c.l.b16 %v482
    %v542 = vunpack.c.l.b16 %v483
    %v543 = vunpack.c.l.b16 %v484
    %v544 = vunpack.c.l.b16 %v485
    %v545 = vunpack.c.l.b16 %v486
    %v546 = vunpack.c.l.b16 %v487
    %v547 = vunpack.c.l.b16 %v488
    %v548 = vunpack.c.l.b16 %v489
    %v549 = vpack.c.b16 %v534, %v533
    %v550 = vpack.c.b16 %v536, %v535
    %v551 = vpack.c.b16 %v538, %v537
    %v552 = vpack.c.b16 %v540, %v539
    %v553 = vpack.c.b16 %v542, %v541
    %v554 = vpack.c.b16 %v544, %v543
    %v555 = vpack.c.b16 %v546, %v545
    %v556 = vpack.c.b16 %v548, %v547
    %565 = vmatprep.subr.bf16.mxu0 0
    %566 = vmatpush1.bf16.msra.mxu0 %v549
    %567 = vmatprep.subr.bf16.mxu0 0
    %568 = vmatpush1.bf16.msra.mxu0 %v550
    %569 = vmatprep.subr.bf16.mxu0 0
    %570 = vmatpush1.bf16.msra.mxu0 %v551
    %571 = vmatprep.subr.bf16.mxu0 0
    %572 = vmatpush1.bf16.msra.mxu0 %v552
    %573 = vmatprep.subr.bf16.mxu0 0
    %574 = vmatpush1.bf16.msra.mxu0 %v553
    %575 = vmatprep.subr.bf16.mxu0 0
    %576 = vmatpush1.bf16.msra.mxu0 %v554
    %577 = vmatprep.subr.bf16.mxu0 0
    %578 = vmatpush1.bf16.msra.mxu0 %v555
    %579 = vmatprep.subr.bf16.mxu0 0
    %580 = vmatpush1.bf16.msra.mxu0 %v556
    %581 = vmatprep.subr.bf16.mxu0 0
    %582 = vmatpush1.bf16.msra.mxu0 0
    %583 = vmatprep.subr.bf16.mxu0 0
    %584 = vmatpush1.bf16.msra.mxu0 0
    %585 = vmatprep.subr.bf16.mxu0 0
    %586 = vmatpush1.bf16.msra.mxu0 0
    %587 = vmatprep.subr.bf16.mxu0 0
    %588 = vmatpush1.bf16.msra.mxu0 0
    %589 = vmatprep.subr.bf16.mxu0 0
    %590 = vmatpush1.bf16.msra.mxu0 0
    %591 = vmatprep.subr.bf16.mxu0 0
    %592 = vmatpush1.bf16.msra.mxu0 0
    %593 = vmatprep.subr.bf16.mxu0 0
    %594 = vmatpush1.bf16.msra.mxu0 0
    %595 = vmatprep.subr.bf16.mxu0 0
    %596 = vmatpush1.bf16.msra.mxu0 0
    %597 = vmatprep.mubr.bf16.mxu0 0
    %598 = vmatmul.mubr.bf16.gmra.mrb[0].mxu0 %v472
    %v599 = vpop.f32.mrb[0].mxu0
    %v600 = vadd.f32 %v515, %v599
    %v601 = vpop.f32.mrb[0].mxu0
    %v602 = vpop.f32.mrb[0].mxu0
    %v603 = vadd.f32 %v515, %v602
    %v604 = vpop.f32.mrb[0].mxu0
    %605 = vdwg.mxu0
    %v606 = vmax.f32 %v600, 0.0
    %v607 = vmax.f32 %v603, 0.0
    %v608 = vpack.c.bf16 %v607, %v606
    %v610 = vlaneseq
    %v611 = vshrl.u32 %v610, 7
    %v612 = vsub.s32 0, %v611
    %v613 = vrot.slane %v510, %v612
    %v631 = vunpack.c.l.b16 %v491
    %v632 = vunpack.c.l.b16 %v492
    %v633 = vunpack.c.l.b16 %v493
    %v634 = vunpack.c.l.b16 %v494
    %v635 = vunpack.c.l.b16 %v495
    %v636 = vunpack.c.l.b16 %v496
    %v637 = vunpack.c.l.b16 %v497
    %v638 = vunpack.c.l.b16 %v498
    %v639 = vunpack.c.l.b16 %v499
    %v640 = vunpack.c.l.b16 %v500
    %v641 = vunpack.c.l.b16 %v501
    %v642 = vunpack.c.l.b16 %v502
    %v643 = vunpack.c.l.b16 %v503
    %v644 = vunpack.c.l.b16 %v504
    %v645 = vunpack.c.l.b16 %v505
    %v646 = vunpack.c.l.b16 %v506
    %v647 = vpack.c.b16 %v632, %v631
    %v648 = vpack.c.b16 %v634, %v633
    %v649 = vpack.c.b16 %v636, %v635
    %v650 = vpack.c.b16 %v638, %v637
    %v651 = vpack.c.b16 %v640, %v639
    %v652 = vpack.c.b16 %v642, %v641
    %v653 = vpack.c.b16 %v644, %v643
    %v654 = vpack.c.b16 %v646, %v645
    %663 = vmatprep.subr.bf16.mxu0 0
    %664 = vmatpush1.bf16.msra.mxu0 %v647
    %665 = vmatprep.subr.bf16.mxu0 0
    %666 = vmatpush1.bf16.msra.mxu0 %v648
    %667 = vmatprep.subr.bf16.mxu0 0
    %668 = vmatpush1.bf16.msra.mxu0 %v649
    %669 = vmatprep.subr.bf16.mxu0 0
    %670 = vmatpush1.bf16.msra.mxu0 %v650
    %671 = vmatprep.subr.bf16.mxu0 0
    %672 = vmatpush1.bf16.msra.mxu0 %v651
    %673 = vmatprep.subr.bf16.mxu0 0
    %674 = vmatpush1.bf16.msra.mxu0 %v652
    %675 = vmatprep.subr.bf16.mxu0 0
    %676 = vmatpush1.bf16.msra.mxu0 %v653
    %677 = vmatprep.subr.bf16.mxu0 0
    %678 = vmatpush1.bf16.msra.mxu0 %v654
    %679 = vmatprep.subr.bf16.mxu0 0
    %680 = vmatpush1.bf16.msra.mxu0 0
    %681 = vmatprep.subr.bf16.mxu0 0
    %682 = vmatpush1.bf16.msra.mxu0 0
    %683 = vmatprep.subr.bf16.mxu0 0
    %684 = vmatpush1.bf16.msra.mxu0 0
    %685 = vmatprep.subr.bf16.mxu0 0
    %686 = vmatpush1.bf16.msra.mxu0 0
    %687 = vmatprep.subr.bf16.mxu0 0
    %688 = vmatpush1.bf16.msra.mxu0 0
    %689 = vmatprep.subr.bf16.mxu0 0
    %690 = vmatpush1.bf16.msra.mxu0 0
    %691 = vmatprep.subr.bf16.mxu0 0
    %692 = vmatpush1.bf16.msra.mxu0 0
    %693 = vmatprep.subr.bf16.mxu0 0
    %694 = vmatpush1.bf16.msra.mxu0 0
    %695 = vmatprep.mubr.bf16.mxu0 0
    %696 = vmatmul.mubr.bf16.gmra.mrb[0].mxu0 %v608
    %v697 = vpop.f32.mrb[0].mxu0
    %v698 = vadd.f32 %v613, %v697
    %v699 = vpop.f32.mrb[0].mxu0
    %v700 = vpop.f32.mrb[0].mxu0
    %v701 = vadd.f32 %v613, %v700
    %v702 = vpop.f32.mrb[0].mxu0
    %703 = vdwg.mxu0
    %v704 = vunpack.c.l.bf16 %v472
    %v705 = vunpack.c.h.bf16 %v472
    %v706 = vadd.f32 %v698, %v704
    %v707 = vadd.f32 %v701, %v705
    %v708 = vmax.f32 %v706, 0.0
    %v709 = vmax.f32 %v707, 0.0
    %v710 = vpack.c.bf16 %v709, %v708
    %s711 = scalar_lea.vmem [#allocation4], 128
    %v712 = vld [vmem:[%s711] sm:$0xf]
    %v713 = vld [vmem:[%s711 + $0x4] sm:$0xf]
    %v714 = vld [vmem:[%s711 + $0x8] sm:$0xf]
    %v715 = vld [vmem:[%s711 + $0xc] sm:$0xf]
    %v716 = vld [vmem:[%s711 + $0x10] sm:$0xf]
    %v717 = vld [vmem:[%s711 + $0x14] sm:$0xf]
    %v718 = vld [vmem:[%s711 + $0x18] sm:$0xf]
    %v719 = vld [vmem:[%s711 + $0x1c] sm:$0xf]
    %v720 = vld [vmem:[%s711 + $0x20] sm:$0xf]
    %v721 = vld [vmem:[%s711 + $0x24] sm:$0xf]
    %v722 = vld [vmem:[%s711 + $0x28] sm:$0xf]
    %v723 = vld [vmem:[%s711 + $0x2c] sm:$0xf]
    %v724 = vld [vmem:[%s711 + $0x30] sm:$0xf]
    %v725 = vld [vmem:[%s711 + $0x34] sm:$0xf]
    %v726 = vld [vmem:[%s711 + $0x38] sm:$0xf]
    %v727 = vld [vmem:[%s711 + $0x3c] sm:$0xf]
    %s728 = scalar_lea.vmem [#allocation6], 128
    %v729 = vld [vmem:[%s728] sm:$0xf]
    %v730 = vld [vmem:[%s728 + $0x4] sm:$0xf]
    %v731 = vld [vmem:[%s728 + $0x8] sm:$0xf]
    %v732 = vld [vmem:[%s728 + $0xc] sm:$0xf]
    %v733 = vld [vmem:[%s728 + $0x10] sm:$0xf]
    %v734 = vld [vmem:[%s728 + $0x14] sm:$0xf]
    %v735 = vld [vmem:[%s728 + $0x18] sm:$0xf]
    %v736 = vld [vmem:[%s728 + $0x1c] sm:$0xf]
    %v737 = vld [vmem:[%s728 + $0x20] sm:$0xf]
    %v738 = vld [vmem:[%s728 + $0x24] sm:$0xf]
    %v739 = vld [vmem:[%s728 + $0x28] sm:$0xf]
    %v740 = vld [vmem:[%s728 + $0x2c] sm:$0xf]
    %v741 = vld [vmem:[%s728 + $0x30] sm:$0xf]
    %v742 = vld [vmem:[%s728 + $0x34] sm:$0xf]
    %v743 = vld [vmem:[%s728 + $0x38] sm:$0xf]
    %v744 = vld [vmem:[%s728 + $0x3c] sm:$0xf]
    %s745 = scalar_lea.vmem %s7, 6
    %v746 = vld [vmem:[%s745] sm:$0x3]
    %s747 = scalar_lea.vmem %s7, 12
    %v748 = vld [vmem:[%s747] sm:$0x3]
    %v750 = vlaneseq
    %v751 = vshrl.u32 %v750, 7
    %v752 = vsub.s32 0, %v751
    %v753 = vrot.slane %v746, %v752
    %v771 = vunpack.c.l.b16 %v712
    %v772 = vunpack.c.l.b16 %v713
    %v773 = vunpack.c.l.b16 %v714
    %v774 = vunpack.c.l.b16 %v715
    %v775 = vunpack.c.l.b16 %v716
    %v776 = vunpack.c.l.b16 %v717
    %v777 = vunpack.c.l.b16 %v718
    %v778 = vunpack.c.l.b16 %v719
    %v779 = vunpack.c.l.b16 %v720
    %v780 = vunpack.c.l.b16 %v721
    %v781 = vunpack.c.l.b16 %v722
    %v782 = vunpack.c.l.b16 %v723
    %v783 = vunpack.c.l.b16 %v724
    %v784 = vunpack.c.l.b16 %v725
    %v785 = vunpack.c.l.b16 %v726
    %v786 = vunpack.c.l.b16 %v727
    %v787 = vpack.c.b16 %v772, %v771
    %v788 = vpack.c.b16 %v774, %v773
    %v789 = vpack.c.b16 %v776, %v775
    %v790 = vpack.c.b16 %v778, %v777
    %v791 = vpack.c.b16 %v780, %v779
    %v792 = vpack.c.b16 %v782, %v781
    %v793 = vpack.c.b16 %v784, %v783
    %v794 = vpack.c.b16 %v786, %v785
    %803 = vmatprep.subr.bf16.mxu0 0
    %804 = vmatpush1.bf16.msra.mxu0 %v787
    %805 = vmatprep.subr.bf16.mxu0 0
    %806 = vmatpush1.bf16.msra.mxu0 %v788
    %807 = vmatprep.subr.bf16.mxu0 0
    %808 = vmatpush1.bf16.msra.mxu0 %v789
    %809 = vmatprep.subr.bf16.mxu0 0
    %810 = vmatpush1.bf16.msra.mxu0 %v790
    %811 = vmatprep.subr.bf16.mxu0 0
    %812 = vmatpush1.bf16.msra.mxu0 %v791
    %813 = vmatprep.subr.bf16.mxu0 0
    %814 = vmatpush1.bf16.msra.mxu0 %v792
    %815 = vmatprep.subr.bf16.mxu0 0
    %816 = vmatpush1.bf16.msra.mxu0 %v793
    %817 = vmatprep.subr.bf16.mxu0 0
    %818 = vmatpush1.bf16.msra.mxu0 %v794
    %819 = vmatprep.subr.bf16.mxu0 0
    %820 = vmatpush1.bf16.msra.mxu0 0
    %821 = vmatprep.subr.bf16.mxu0 0
    %822 = vmatpush1.bf16.msra.mxu0 0
    %823 = vmatprep.subr.bf16.mxu0 0
    %824 = vmatpush1.bf16.msra.mxu0 0
    %825 = vmatprep.subr.bf16.mxu0 0
    %826 = vmatpush1.bf16.msra.mxu0 0
    %827 = vmatprep.subr.bf16.mxu0 0
    %828 = vmatpush1.bf16.msra.mxu0 0
    %829 = vmatprep.subr.bf16.mxu0 0
    %830 = vmatpush1.bf16.msra.mxu0 0
    %831 = vmatprep.subr.bf16.mxu0 0
    %832 = vmatpush1.bf16.msra.mxu0 0
    %833 = vmatprep.subr.bf16.mxu0 0
    %834 = vmatpush1.bf16.msra.mxu0 0
    %835 = vmatprep.mubr.bf16.mxu0 0
    %836 = vmatmul.mubr.bf16.gmra.mrb[0].mxu0 %v710
    %v837 = vpop.f32.mrb[0].mxu0
    %v838 = vadd.f32 %v753, %v837
    %v839 = vpop.f32.mrb[0].mxu0
    %v840 = vpop.f32.mrb[0].mxu0
    %v841 = vadd.f32 %v753, %v840
    %v842 = vpop.f32.mrb[0].mxu0
    %843 = vdwg.mxu0
    %v844 = vmax.f32 %v838, 0.0
    %v845 = vmax.f32 %v841, 0.0
    %v846 = vpack.c.bf16 %v845, %v844
    %v848 = vlaneseq
    %v849 = vshrl.u32 %v848, 7
    %v850 = vsub.s32 0, %v849
    %v851 = vrot.slane %v748, %v850
    %v869 = vunpack.c.l.b16 %v729
    %v870 = vunpack.c.l.b16 %v730
    %v871 = vunpack.c.l.b16 %v731
    %v872 = vunpack.c.l.b16 %v732
    %v873 = vunpack.c.l.b16 %v733
    %v874 = vunpack.c.l.b16 %v734
    %v875 = vunpack.c.l.b16 %v735
    %v876 = vunpack.c.l.b16 %v736
    %v877 = vunpack.c.l.b16 %v737
    %v878 = vunpack.c.l.b16 %v738
    %v879 = vunpack.c.l.b16 %v739
    %v880 = vunpack.c.l.b16 %v740
    %v881 = vunpack.c.l.b16 %v741
    %v882 = vunpack.c.l.b16 %v742
    %v883 = vunpack.c.l.b16 %v743
    %v884 = vunpack.c.l.b16 %v744
    %v885 = vpack.c.b16 %v870, %v869
    %v886 = vpack.c.b16 %v872, %v871
    %v887 = vpack.c.b16 %v874, %v873
    %v888 = vpack.c.b16 %v876, %v875
    %v889 = vpack.c.b16 %v878, %v877
    %v890 = vpack.c.b16 %v880, %v879
    %v891 = vpack.c.b16 %v882, %v881
    %v892 = vpack.c.b16 %v884, %v883
    %901 = vmatprep.subr.bf16.mxu0 0
    %902 = vmatpush1.bf16.msra.mxu0 %v885
    %903 = vmatprep.subr.bf16.mxu0 0
    %904 = vmatpush1.bf16.msra.mxu0 %v886
    %905 = vmatprep.subr.bf16.mxu0 0
    %906 = vmatpush1.bf16.msra.mxu0 %v887
    %907 = vmatprep.subr.bf16.mxu0 0
    %908 = vmatpush1.bf16.msra.mxu0 %v888
    %909 = vmatprep.subr.bf16.mxu0 0
    %910 = vmatpush1.bf16.msra.mxu0 %v889
    %911 = vmatprep.subr.bf16.mxu0 0
    %912 = vmatpush1.bf16.msra.mxu0 %v890
    %913 = vmatprep.subr.bf16.mxu0 0
    %914 = vmatpush1.bf16.msra.mxu0 %v891
    %915 = vmatprep.subr.bf16.mxu0 0
    %916 = vmatpush1.bf16.msra.mxu0 %v892
    %917 = vmatprep.subr.bf16.mxu0 0
    %918 = vmatpush1.bf16.msra.mxu0 0
    %919 = vmatprep.subr.bf16.mxu0 0
    %920 = vmatpush1.bf16.msra.mxu0 0
    %921 = vmatprep.subr.bf16.mxu0 0
    %922 = vmatpush1.bf16.msra.mxu0 0
    %923 = vmatprep.subr.bf16.mxu0 0
    %924 = vmatpush1.bf16.msra.mxu0 0
    %925 = vmatprep.subr.bf16.mxu0 0
    %926 = vmatpush1.bf16.msra.mxu0 0
    %927 = vmatprep.subr.bf16.mxu0 0
    %928 = vmatpush1.bf16.msra.mxu0 0
    %929 = vmatprep.subr.bf16.mxu0 0
    %930 = vmatpush1.bf16.msra.mxu0 0
    %931 = vmatprep.subr.bf16.mxu0 0
    %932 = vmatpush1.bf16.msra.mxu0 0
    %933 = vmatprep.mubr.bf16.mxu0 0
    %934 = vmatmul.mubr.bf16.gmra.mrb[0].mxu0 %v846
    %v935 = vpop.f32.mrb[0].mxu0
    %v936 = vadd.f32 %v851, %v935
    %v937 = vpop.f32.mrb[0].mxu0
    %v938 = vpop.f32.mrb[0].mxu0
    %v939 = vadd.f32 %v851, %v938
    %v940 = vpop.f32.mrb[0].mxu0
    %941 = vdwg.mxu0
    %v942 = vunpack.c.l.bf16 %v710
    %v943 = vunpack.c.h.bf16 %v710
    %v944 = vadd.f32 %v936, %v942
    %v945 = vadd.f32 %v939, %v943
    %v946 = vmax.f32 %v944, 0.0
    %v947 = vmax.f32 %v945, 0.0
    %v948 = vpack.c.bf16 %v947, %v946
    %v949 = vld [vmem:[#allocation7] sm:$0xff]
    %v950 = vld [vmem:[#allocation7 + $0x8] sm:$0xff]
    %v951 = vld [vmem:[#allocation7 + $0x10] sm:$0xff]
    %v952 = vld [vmem:[#allocation7 + $0x18] sm:$0xff]
    %v953 = vld [vmem:[#allocation7 + $0x20] sm:$0xff]
    %v954 = vld [vmem:[#allocation7 + $0x28] sm:$0xff]
    %v955 = vld [vmem:[#allocation7 + $0x30] sm:$0xff]
    %v956 = vld [vmem:[#allocation7 + $0x38] sm:$0xff]
    %v957 = vld [vmem:[#allocation7 + $0x40] sm:$0xff]
    %v958 = vld [vmem:[#allocation7 + $0x48] sm:$0xff]
    %v959 = vld [vmem:[#allocation7 + $0x50] sm:$0xff]
    %v960 = vld [vmem:[#allocation7 + $0x58] sm:$0xff]
    %v961 = vld [vmem:[#allocation7 + $0x60] sm:$0xff]
    %v962 = vld [vmem:[#allocation7 + $0x68] sm:$0xff]
    %v963 = vld [vmem:[#allocation7 + $0x70] sm:$0xff]
    %v964 = vld [vmem:[#allocation7 + $0x78] sm:$0xff]
    %s965 = scalar_lea.vmem %s7, 14
    %v966 = vld [vmem:[%s965] sm:$0x3]
    %v968 = vlaneseq
    %v969 = vshrl.u32 %v968, 7
    %v970 = vsub.s32 0, %v969
    %v971 = vrot.slane %v966, %v970
    %v972 = vlaneseq
    %v973 = vshrl.u32 %v972, 7
    %v974 = vsub.s32 1, %v973
    %v975 = vrot.slane %v966, %v974
    %v994 = vunpack.c.l.b16 %v949
    %v995 = vunpack.c.h.b16 %v949
    %v996 = vunpack.c.l.b16 %v950
    %v997 = vunpack.c.h.b16 %v950
    %v998 = vunpack.c.l.b16 %v951
    %v999 = vunpack.c.h.b16 %v951
    %v1000 = vunpack.c.l.b16 %v952
    %v1001 = vunpack.c.h.b16 %v952
    %v1002 = vunpack.c.l.b16 %v953
    %v1003 = vunpack.c.h.b16 %v953
    %v1004 = vunpack.c.l.b16 %v954
    %v1005 = vunpack.c.h.b16 %v954
    %v1006 = vunpack.c.l.b16 %v955
    %v1007 = vunpack.c.h.b16 %v955
    %v1008 = vunpack.c.l.b16 %v956
    %v1009 = vunpack.c.h.b16 %v956
    %v1010 = vunpack.c.l.b16 %v957
    %v1011 = vunpack.c.h.b16 %v957
    %v1012 = vunpack.c.l.b16 %v958
    %v1013 = vunpack.c.h.b16 %v958
    %v1014 = vunpack.c.l.b16 %v959
    %v1015 = vunpack.c.h.b16 %v959
    %v1016 = vunpack.c.l.b16 %v960
    %v1017 = vunpack.c.h.b16 %v960
    %v1018 = vunpack.c.l.b16 %v961
    %v1019 = vunpack.c.h.b16 %v961
    %v1020 = vunpack.c.l.b16 %v962
    %v1021 = vunpack.c.h.b16 %v962
    %v1022 = vunpack.c.l.b16 %v963
    %v1023 = vunpack.c.h.b16 %v963
    %v1024 = vunpack.c.l.b16 %v964
    %v1025 = vunpack.c.h.b16 %v964
    %v1026 = vpack.c.b16 %v996, %v994
    %v1027 = vpack.c.b16 %v997, %v995
    %v1028 = vpack.c.b16 %v1000, %v998
    %v1029 = vpack.c.b16 %v1001, %v999
    %v1030 = vpack.c.b16 %v1004, %v1002
    %v1031 = vpack.c.b16 %v1005, %v1003
    %v1032 = vpack.c.b16 %v1008, %v1006
    %v1033 = vpack.c.b16 %v1009, %v1007
    %v1034 = vpack.c.b16 %v1012, %v1010
    %v1035 = vpack.c.b16 %v1013, %v1011
    %v1036 = vpack.c.b16 %v1016, %v1014
    %v1037 = vpack.c.b16 %v1017, %v1015
    %v1038 = vpack.c.b16 %v1020, %v1018
    %v1039 = vpack.c.b16 %v1021, %v1019
    %v1040 = vpack.c.b16 %v1024, %v1022
    %v1041 = vpack.c.b16 %v1025, %v1023
    %1058 = vmatprep.subr.bf16.mxu0 %v1027
    %1059 = vmatpush1.bf16.msra.mxu0 %v1026
    %1060 = vmatprep.subr.bf16.mxu0 %v1029
    %1061 = vmatpush1.bf16.msra.mxu0 %v1028
    %1062 = vmatprep.subr.bf16.mxu0 %v1031
    %1063 = vmatpush1.bf16.msra.mxu0 %v1030
    %1064 = vmatprep.subr.bf16.mxu0 %v1033
    %1065 = vmatpush1.bf16.msra.mxu0 %v1032
    %1066 = vmatprep.subr.bf16.mxu0 %v1035
    %1067 = vmatpush1.bf16.msra.mxu0 %v1034
    %1068 = vmatprep.subr.bf16.mxu0 %v1037
    %1069 = vmatpush1.bf16.msra.mxu0 %v1036
    %1070 = vmatprep.subr.bf16.mxu0 %v1039
    %1071 = vmatpush1.bf16.msra.mxu0 %v1038
    %1072 = vmatprep.subr.bf16.mxu0 %v1041
    %1073 = vmatpush1.bf16.msra.mxu0 %v1040
    %1074 = vmatprep.subr.bf16.mxu0 0
    %1075 = vmatpush1.bf16.msra.mxu0 0
    %1076 = vmatprep.subr.bf16.mxu0 0
    %1077 = vmatpush1.bf16.msra.mxu0 0
    %1078 = vmatprep.subr.bf16.mxu0 0
    %1079 = vmatpush1.bf16.msra.mxu0 0
    %1080 = vmatprep.subr.bf16.mxu0 0
    %1081 = vmatpush1.bf16.msra.mxu0 0
    %1082 = vmatprep.subr.bf16.mxu0 0
    %1083 = vmatpush1.bf16.msra.mxu0 0
    %1084 = vmatprep.subr.bf16.mxu0 0
    %1085 = vmatpush1.bf16.msra.mxu0 0
    %1086 = vmatprep.subr.bf16.mxu0 0
    %1087 = vmatpush1.bf16.msra.mxu0 0
    %1088 = vmatprep.subr.bf16.mxu0 0
    %1089 = vmatpush1.bf16.msra.mxu0 0
    %1090 = vmatprep.mubr.bf16.mxu0 0
    %1091 = vmatmul.mubr.bf16.gmra.mrb[0].mxu0 %v948
    %v1092 = vpop.f32.mrb[0].mxu0
    %v1093 = vadd.f32 %v971, %v1092
    %v1094 = vpop.f32.mrb[0].mxu0
    %v1095 = vadd.f32 %v975, %v1094
    %v1096 = vpop.f32.mrb[0].mxu0
    %v1097 = vadd.f32 %v971, %v1096
    %v1098 = vpop.f32.mrb[0].mxu0
    %v1099 = vadd.f32 %v975, %v1098
    %1100 = vdwg.mxu0
    %v1101 = vmax.f32 %v1093, 0.0
    %v1102 = vmax.f32 %v1095, 0.0
    %v1103 = vmax.f32 %v1097, 0.0
    %v1104 = vmax.f32 %v1099, 0.0
    %v1105 = vpack.c.bf16 %v1103, %v1101
    %v1106 = vpack.c.bf16 %v1104, %v1102
    %v1107 = vld [vmem:[#allocation9] sm:$0xf]
    %v1108 = vld [vmem:[#allocation9 + $0x4] sm:$0xf]
    %v1109 = vld [vmem:[#allocation9 + $0x8] sm:$0xf]
    %v1110 = vld [vmem:[#allocation9 + $0xc] sm:$0xf]
    %v1111 = vld [vmem:[#allocation9 + $0x10] sm:$0xf]
    %v1112 = vld [vmem:[#allocation9 + $0x14] sm:$0xf]
    %v1113 = vld [vmem:[#allocation9 + $0x18] sm:$0xf]
    %v1114 = vld [vmem:[#allocation9 + $0x1c] sm:$0xf]
    %v1115 = vld [vmem:[#allocation9 + $0x20] sm:$0xf]
    %v1116 = vld [vmem:[#allocation9 + $0x24] sm:$0xf]
    %v1117 = vld [vmem:[#allocation9 + $0x28] sm:$0xf]
    %v1118 = vld [vmem:[#allocation9 + $0x2c] sm:$0xf]
    %v1119 = vld [vmem:[#allocation9 + $0x30] sm:$0xf]
    %v1120 = vld [vmem:[#allocation9 + $0x34] sm:$0xf]
    %v1121 = vld [vmem:[#allocation9 + $0x38] sm:$0xf]
    %v1122 = vld [vmem:[#allocation9 + $0x3c] sm:$0xf]
    %s1123 = scalar_lea.vmem %s7, 16
    %v1124 = vld [vmem:[%s1123] sm:$0x3]
    %v1126 = vlaneseq
    %v1127 = vshrl.u32 %v1126, 7
    %v1128 = vsub.s32 0, %v1127
    %v1129 = vrot.slane %v1124, %v1128
    %v1147 = vunpack.c.l.b16 %v1107
    %v1148 = vunpack.c.l.b16 %v1108
    %v1149 = vunpack.c.l.b16 %v1109
    %v1150 = vunpack.c.l.b16 %v1110
    %v1151 = vunpack.c.l.b16 %v1111
    %v1152 = vunpack.c.l.b16 %v1112
    %v1153 = vunpack.c.l.b16 %v1113
    %v1154 = vunpack.c.l.b16 %v1114
    %v1155 = vunpack.c.l.b16 %v1115
    %v1156 = vunpack.c.l.b16 %v1116
    %v1157 = vunpack.c.l.b16 %v1117
    %v1158 = vunpack.c.l.b16 %v1118
    %v1159 = vunpack.c.l.b16 %v1119
    %v1160 = vunpack.c.l.b16 %v1120
    %v1161 = vunpack.c.l.b16 %v1121
    %v1162 = vunpack.c.l.b16 %v1122
    %v1163 = vpack.c.b16 %v1148, %v1147
    %v1164 = vpack.c.b16 %v1150, %v1149
    %v1165 = vpack.c.b16 %v1152, %v1151
    %v1166 = vpack.c.b16 %v1154, %v1153
    %v1167 = vpack.c.b16 %v1156, %v1155
    %v1168 = vpack.c.b16 %v1158, %v1157
    %v1169 = vpack.c.b16 %v1160, %v1159
    %v1170 = vpack.c.b16 %v1162, %v1161
    %1179 = vmatprep.subr.bf16.mxu0 0
    %1180 = vmatpush1.bf16.msra.mxu0 %v1163
    %1181 = vmatprep.subr.bf16.mxu0 0
    %1182 = vmatpush1.bf16.msra.mxu0 %v1164
    %1183 = vmatprep.subr.bf16.mxu0 0
    %1184 = vmatpush1.bf16.msra.mxu0 %v1165
    %1185 = vmatprep.subr.bf16.mxu0 0
    %1186 = vmatpush1.bf16.msra.mxu0 %v1166
    %1187 = vmatprep.subr.bf16.mxu0 0
    %1188 = vmatpush1.bf16.msra.mxu0 %v1167
    %1189 = vmatprep.subr.bf16.mxu0 0
    %1190 = vmatpush1.bf16.msra.mxu0 %v1168
    %1191 = vmatprep.subr.bf16.mxu0 0
    %1192 = vmatpush1.bf16.msra.mxu0 %v1169
    %1193 = vmatprep.subr.bf16.mxu0 0
    %1194 = vmatpush1.bf16.msra.mxu0 %v1170
    %1195 = vmatprep.subr.bf16.mxu0 0
    %1196 = vmatpush1.bf16.msra.mxu0 0
    %1197 = vmatprep.subr.bf16.mxu0 0
    %1198 = vmatpush1.bf16.msra.mxu0 0
    %1199 = vmatprep.subr.bf16.mxu0 0
    %1200 = vmatpush1.bf16.msra.mxu0 0
    %1201 = vmatprep.subr.bf16.mxu0 0
    %1202 = vmatpush1.bf16.msra.mxu0 0
    %1203 = vmatprep.subr.bf16.mxu0 0
    %1204 = vmatpush1.bf16.msra.mxu0 0
    %1205 = vmatprep.subr.bf16.mxu0 0
    %1206 = vmatpush1.bf16.msra.mxu0 0
    %1207 = vmatprep.subr.bf16.mxu0 0
    %1208 = vmatpush1.bf16.msra.mxu0 0
    %1209 = vmatprep.subr.bf16.mxu0 0
    %1210 = vmatpush1.bf16.msra.mxu0 0
    %1211 = vmatprep.mubr.bf16.mxu0 0
    %1212 = vmatmul.mubr.bf16.gmra.mrb[0].mxu0 %v1105
    %v1213 = vpop.f32.mrb[0].mxu0
    %v1214 = vadd.f32 %v1129, %v1213
    %v1215 = vpop.f32.mrb[0].mxu0
    %v1216 = vpop.f32.mrb[0].mxu0
    %v1217 = vadd.f32 %v1129, %v1216
    %v1218 = vpop.f32.mrb[0].mxu0
    %1219 = vdwg.mxu0
    %1220 = vst [vmem:[%s8] sm:$0xff] %v1214
    %1221 = vst [vmem:[%s8 + $0x8] sm:$0xff] %v1217
    %v1222 = vld [vmem:[#allocation10] sm:$0xf]
    %v1223 = vld [vmem:[#allocation10 + $0x4] sm:$0xf]
    %v1224 = vld [vmem:[#allocation10 + $0x8] sm:$0xf]
    %v1225 = vld [vmem:[#allocation10 + $0xc] sm:$0xf]
    %v1226 = vld [vmem:[#allocation10 + $0x10] sm:$0xf]
    %v1227 = vld [vmem:[#allocation10 + $0x14] sm:$0xf]
    %v1228 = vld [vmem:[#allocation10 + $0x18] sm:$0xf]
    %v1229 = vld [vmem:[#allocation10 + $0x1c] sm:$0xf]
    %v1230 = vld [vmem:[#allocation10 + $0x20] sm:$0xf]
    %v1231 = vld [vmem:[#allocation10 + $0x24] sm:$0xf]
    %v1232 = vld [vmem:[#allocation10 + $0x28] sm:$0xf]
    %v1233 = vld [vmem:[#allocation10 + $0x2c] sm:$0xf]
    %v1234 = vld [vmem:[#allocation10 + $0x30] sm:$0xf]
    %v1235 = vld [vmem:[#allocation10 + $0x34] sm:$0xf]
    %v1236 = vld [vmem:[#allocation10 + $0x38] sm:$0xf]
    %v1237 = vld [vmem:[#allocation10 + $0x3c] sm:$0xf]
    %s1238 = scalar_lea.vmem %s7, 18
    %v1239 = vld [vmem:[%s1238] sm:$0x3]
    %v1241 = vlaneseq
    %v1242 = vshrl.u32 %v1241, 7
    %v1243 = vsub.s32 0, %v1242
    %v1244 = vrot.slane %v1239, %v1243
    %v1262 = vunpack.c.l.b16 %v1222
    %v1263 = vunpack.c.l.b16 %v1223
    %v1264 = vunpack.c.l.b16 %v1224
    %v1265 = vunpack.c.l.b16 %v1225
    %v1266 = vunpack.c.l.b16 %v1226
    %v1267 = vunpack.c.l.b16 %v1227
    %v1268 = vunpack.c.l.b16 %v1228
    %v1269 = vunpack.c.l.b16 %v1229
    %v1270 = vunpack.c.l.b16 %v1230
    %v1271 = vunpack.c.l.b16 %v1231
    %v1272 = vunpack.c.l.b16 %v1232
    %v1273 = vunpack.c.l.b16 %v1233
    %v1274 = vunpack.c.l.b16 %v1234
    %v1275 = vunpack.c.l.b16 %v1235
    %v1276 = vunpack.c.l.b16 %v1236
    %v1277 = vunpack.c.l.b16 %v1237
    %v1278 = vpack.c.b16 %v1263, %v1262
    %v1279 = vpack.c.b16 %v1265, %v1264
    %v1280 = vpack.c.b16 %v1267, %v1266
    %v1281 = vpack.c.b16 %v1269, %v1268
    %v1282 = vpack.c.b16 %v1271, %v1270
    %v1283 = vpack.c.b16 %v1273, %v1272
    %v1284 = vpack.c.b16 %v1275, %v1274
    %v1285 = vpack.c.b16 %v1277, %v1276
    %1294 = vmatprep.subr.bf16.mxu0 0
    %1295 = vmatpush1.bf16.msra.mxu0 %v1278
    %1296 = vmatprep.subr.bf16.mxu0 0
    %1297 = vmatpush1.bf16.msra.mxu0 %v1279
    %1298 = vmatprep.subr.bf16.mxu0 0
    %1299 = vmatpush1.bf16.msra.mxu0 %v1280
    %1300 = vmatprep.subr.bf16.mxu0 0
    %1301 = vmatpush1.bf16.msra.mxu0 %v1281
    %1302 = vmatprep.subr.bf16.mxu0 0
    %1303 = vmatpush1.bf16.msra.mxu0 %v1282
    %1304 = vmatprep.subr.bf16.mxu0 0
    %1305 = vmatpush1.bf16.msra.mxu0 %v1283
    %1306 = vmatprep.subr.bf16.mxu0 0
    %1307 = vmatpush1.bf16.msra.mxu0 %v1284
    %1308 = vmatprep.subr.bf16.mxu0 0
    %1309 = vmatpush1.bf16.msra.mxu0 %v1285
    %1310 = vmatprep.subr.bf16.mxu0 0
    %1311 = vmatpush1.bf16.msra.mxu0 0
    %1312 = vmatprep.subr.bf16.mxu0 0
    %1313 = vmatpush1.bf16.msra.mxu0 0
    %1314 = vmatprep.subr.bf16.mxu0 0
    %1315 = vmatpush1.bf16.msra.mxu0 0
    %1316 = vmatprep.subr.bf16.mxu0 0
    %1317 = vmatpush1.bf16.msra.mxu0 0
    %1318 = vmatprep.subr.bf16.mxu0 0
    %1319 = vmatpush1.bf16.msra.mxu0 0
    %1320 = vmatprep.subr.bf16.mxu0 0
    %1321 = vmatpush1.bf16.msra.mxu0 0
    %1322 = vmatprep.subr.bf16.mxu0 0
    %1323 = vmatpush1.bf16.msra.mxu0 0
    %1324 = vmatprep.subr.bf16.mxu0 0
    %1325 = vmatpush1.bf16.msra.mxu0 0
    %1326 = vmatprep.mubr.bf16.mxu0 0
    %1327 = vmatmul.mubr.bf16.gmra.mrb[0].mxu0 %v1106
    %v1328 = vpop.f32.mrb[0].mxu0
    %v1329 = vadd.f32 %v1244, %v1328
    %v1330 = vpop.f32.mrb[0].mxu0
    %v1331 = vpop.f32.mrb[0].mxu0
    %v1332 = vadd.f32 %v1244, %v1331
    %v1333 = vpop.f32.mrb[0].mxu0
    %1334 = vdwg.mxu0
    %v1335 = vtanh.pop %v1329
    %v1336 = vtanh.pop %v1332
    %1337 = vst [vmem:[%s9] sm:$0xff] %v1335
    %1338 = vst [vmem:[%s9 + $0x8] sm:$0xff] %v1336
    // Predicated region
    $region58: #{_forward_impl.1} parent=1 // pred_check
      _
    $region59: #{_forward_impl.1} parent=1 // pred_check_branch
      %1340 = sbr.rel (0) target = $region61
    $region60: #{_forward_impl.1} parent=1 // pred_region
      _
    $region61: #{_forward_impl.1} parent=1 // pred_fallthru
      _
    // Predicated region
    $region62: #{_forward_impl.1} parent=1 // pred_check
      _
    $region63: #{_forward_impl.1} parent=1 // pred_check_branch
      %1342 = sbr.rel (0) target = $region65
    $region64: #{_forward_impl.1} parent=1 // pred_region
      _
    $region65: #{_forward_impl.1} parent=1 // pred_fallthru
      _
    // Predicated region
    $region66: #{_forward_impl.1} parent=1 // pred_check
      _
    $region67: #{_forward_impl.1} parent=1 // pred_check_branch
      %1344 = sbr.rel (0) target = $region69
    $region68: #{_forward_impl.1} parent=1 // pred_region
      _
    $region69: #{_forward_impl.1} parent=1 // pred_fallthru
      _
    // Predicated region
    $region70: #{_forward_impl.1} parent=1 // pred_check
      _
    $region71: #{_forward_impl.1} parent=1 // pred_check_branch
      %1346 = sbr.rel (0) target = $region73
    $region72: #{_forward_impl.1} parent=1 // pred_region
      _
    $region73: #{_forward_impl.1} parent=1 // pred_fallthru
      _
    %1347 = vsyncpa [#allocation3], 1
    %1348 = vsyncpa [#allocation5], 1
    %1349 = vsyncpa [#allocation8], 1
    %1350 = vsyncpa [#allocation11], 1

// kernel: _forward_impl.1
$region0: #{_forward_impl.1}
  #allocation0 [shape = 'u32[]', space=smem, size = 0x4, offset = 0x4, fixed_abs, tag = 'smem constant byte address 0x4 - core index']
  #allocation1 [shape = 'u32[144,128]{1,0:T(1,128)}', space=vmem, size = 0x12000, scoped, tag = 'internal scratch']
  %s0 = inlined_call_operand.vmem [shape: bf16[16,128], index: 0, kind: input, shape index: {}]
  %s1 = inlined_call_operand.hbm [shape: bf16[128,128], index: 1, kind: input, shape index: {}]
  %s2 = inlined_call_operand.hbm [shape: bf16[3,128,128], index: 2, kind: input, shape index: {}]
  %s3 = inlined_call_operand.hbm [shape: bf16[3,128,128], index: 3, kind: input, shape index: {}]
  %s4 = inlined_call_operand.hbm [shape: bf16[128,256], index: 4, kind: input, shape index: {}]
  %s5 = inlined_call_operand.hbm [shape: bf16[128,128], index: 5, kind: input, shape index: {}]
  %s6 = inlined_call_operand.hbm [shape: bf16[128,128], index: 6, kind: input, shape index: {}]
  %s7 = inlined_call_operand.vmem [shape: f32[10,1,256], index: 7, kind: input, shape index: {}]
  %s8 = inlined_call_operand.vmem [shape: f32[16,128], index: 8, kind: output, shape index: {0}]
  %s9 = inlined_call_operand.vmem [shape: f32[16,128], index: 9, kind: output, shape index: {1}]
  %10 = xla_tuple %s8, %s9
  %s11 = sld [smem:[#allocation0]]
  $region74: #{_forward_impl.1} parent=0
    _
  %s13 = ssub.s32 1, %s11
  %s14 = scalar_select 0, %s13, %s11
  $region1: #{_forward_impl.1} parent=0
    #allocation2 [shape = 'u8[32768]{0}', space=vmem, size = 0x8000, scoped, tag = 'input window, operand 1, single buffered']
    #allocation3 [shape = 's32[1]{0}', space=sflag, size = 0x4, scoped, tag = 'scoped memory for _forward_impl.1']
    #allocation4 [shape = 'u8[98304]{0}', space=vmem, size = 0x18000, scoped, tag = 'input window, operand 2, single buffered']
    #allocation5 [shape = 's32[1]{0}', space=sflag, size = 0x4, scoped, tag = 'scoped memory for _forward_impl.1']
    #allocation6 [shape = 'u8[98304]{0}', space=vmem, size = 0x18000, scoped, tag = 'input window, operand 3, single buffered']
    #allocation7 [shape = 'u8[65536]{0}', space=vmem, size = 0x10000, scoped, tag = 'input window, operand 4, single buffered']
    #allocation8 [shape = 's32[1]{0}', space=sflag, size = 0x4, scoped, tag = 'scoped memory for _forward_impl.1']
    #allocation9 [shape = 'u8[32768]{0}', space=vmem, size = 0x8000, scoped, tag = 'input window, operand 5, single buffered']
    #allocation10 [shape = 'u8[32768]{0}', space=vmem, size = 0x8000, scoped, tag = 'input window, operand 6, single buffered']
    #allocation11 [shape = 's32[1]{0}', space=sflag, size = 0x4, scoped, tag = 'scoped memory for _forward_impl.1']
    %15 = vsyncpa [#allocation3], 0
    %16 = vsyncpa [#allocation5], 0
    %17 = vsyncpa [#allocation8], 0
    %18 = vsyncpa [#allocation11], 0
    // Predicated region
    $region2: #{_forward_impl.1} parent=1 // pred_check
      _
    $region3: #{_forward_impl.1} parent=1 // pred_check_branch
      %20 = sbr.rel (0) target = $region5
    $region4: #{_forward_impl.1} parent=1 // pred_region
      _
    $region5: #{_forward_impl.1} parent=1 // pred_fallthru
      _
    // Predicated region
    $region6: #{_forward_impl.1} parent=1 // pred_check
      _
    $region7: #{_forward_impl.1} parent=1 // pred_check_branch
      %22 = sbr.rel (0) target = $region9
    $region8: #{_forward_impl.1} parent=1 // pred_region
      %s24 = ssub.s32 1024, 1024
      %25 = vsyncadd [#allocation3], %s24
      %s26 = sshll.u32 [#allocation2], 4
      %s27 = int_to_ptr.vmem [resolvable:$true] %s26
      %32 = dma.hbm_to_vmem [thread:$0]  %s1, 1024, %s27, [#allocation3], 64, 64, 4
    $region9: #{_forward_impl.1} parent=1 // pred_fallthru
      _
    // Predicated region
    $region10: #{_forward_impl.1} parent=1 // pred_check
      _
    $region11: #{_forward_impl.1} parent=1 // pred_check_branch
      %34 = sbr.rel (0) target = $region13
    $region12: #{_forward_impl.1} parent=1 // pred_region
      %s36 = ssub.s32 3072, 3072
      %37 = vsyncadd [#allocation5], %s36
      %s38 = sshll.u32 [#allocation4], 4
      %s39 = int_to_ptr.vmem [resolvable:$true] %s38
      %44 = dma.hbm_to_vmem [thread:$0]  %s2, 3072, %s39, [#allocation5], 64, 64, 4
    $region13: #{_forward_impl.1} parent=1 // pred_fallthru
      _
    // Predicated region
    $region14: #{_forward_impl.1} parent=1 // pred_check
      _
    $region15: #{_forward_impl.1} parent=1 // pred_check_branch
      %46 = sbr.rel (0) target = $region17
    $region16: #{_forward_impl.1} parent=1 // pred_region
      %s48 = ssub.s32 3072, 3072
      %49 = vsyncadd [#allocation5], %s48
      %s50 = sshll.u32 [#allocation6], 4
      %s51 = int_to_ptr.vmem [resolvable:$true] %s50
      %56 = dma.hbm_to_vmem [thread:$0]  %s3, 3072, %s51, [#allocation5], 64, 64, 4
    $region17: #{_forward_impl.1} parent=1 // pred_fallthru
      _
    // Predicated region
    $region18: #{_forward_impl.1} parent=1 // pred_check
      _
    $region19: #{_forward_impl.1} parent=1 // pred_check_branch
      %58 = sbr.rel (0) target = $region21
    $region20: #{_forward_impl.1} parent=1 // pred_region
      %s60 = ssub.s32 2048, 2048
      %61 = vsyncadd [#allocation8], %s60
      %s62 = sshll.u32 [#allocation7], 4
      %s63 = int_to_ptr.vmem [resolvable:$true] %s62
      %68 = dma.hbm_to_vmem [thread:$0]  %s4, 2048, %s63, [#allocation8], 128, 128, 8
    $region21: #{_forward_impl.1} parent=1 // pred_fallthru
      _
    // Predicated region
    $region22: #{_forward_impl.1} parent=1 // pred_check
      _
    $region23: #{_forward_impl.1} parent=1 // pred_check_branch
      %70 = sbr.rel (0) target = $region25
    $region24: #{_forward_impl.1} parent=1 // pred_region
      %s72 = ssub.s32 1024, 1024
      %73 = vsyncadd [#allocation8], %s72
      %s74 = sshll.u32 [#allocation9], 4
      %s75 = int_to_ptr.vmem [resolvable:$true] %s74
      %80 = dma.hbm_to_vmem [thread:$0]  %s5, 1024, %s75, [#allocation8], 64, 64, 4
    $region25: #{_forward_impl.1} parent=1 // pred_fallthru
      _
    // Predicated region
    $region26: #{_forward_impl.1} parent=1 // pred_check
      _
    $region27: #{_forward_impl.1} parent=1 // pred_check_branch
      %82 = sbr.rel (0) target = $region29
    $region28: #{_forward_impl.1} parent=1 // pred_region
      %s84 = ssub.s32 1024, 1024
      %85 = vsyncadd [#allocation11], %s84
      %s86 = sshll.u32 [#allocation10], 4
      %s87 = int_to_ptr.vmem [resolvable:$true] %s86
      %92 = dma.hbm_to_vmem [thread:$0]  %s6, 1024, %s87, [#allocation11], 64, 64, 4
    $region29: #{_forward_impl.1} parent=1 // pred_fallthru
      _
    // Predicated region
    $region30: #{_forward_impl.1} parent=1 // pred_check
      _
    $region31: #{_forward_impl.1} parent=1 // pred_check_branch
      %94 = sbr.rel (0) target = $region33
    $region32: #{_forward_impl.1} parent=1 // pred_region
      _
    $region33: #{_forward_impl.1} parent=1 // pred_fallthru
      _
    // Predicated region
    $region34: #{_forward_impl.1} parent=1 // pred_check
      _
    $region35: #{_forward_impl.1} parent=1 // pred_check_branch
      %96 = sbr.rel (0) target = $region37
    $region36: #{_forward_impl.1} parent=1 // pred_region
      %97 = dma.done [#allocation3], 1024
    $region37: #{_forward_impl.1} parent=1 // pred_fallthru
      _
    // Predicated region
    $region38: #{_forward_impl.1} parent=1 // pred_check
      _
    $region39: #{_forward_impl.1} parent=1 // pred_check_branch
      %99 = sbr.rel (0) target = $region41
    $region40: #{_forward_impl.1} parent=1 // pred_region
      %100 = dma.done [#allocation5], 3072
    $region41: #{_forward_impl.1} parent=1 // pred_fallthru
      _
    // Predicated region
    $region42: #{_forward_impl.1} parent=1 // pred_check
      _
    $region43: #{_forward_impl.1} parent=1 // pred_check_branch
      %102 = sbr.rel (0) target = $region45
    $region44: #{_forward_impl.1} parent=1 // pred_region
      %103 = dma.done [#allocation5], 3072
    $region45: #{_forward_impl.1} parent=1 // pred_fallthru
      _
    // Predicated region
    $region46: #{_forward_impl.1} parent=1 // pred_check
      _
    $region47: #{_forward_impl.1} parent=1 // pred_check_branch
      %105 = sbr.rel (0) target = $region49
    $region48: #{_forward_impl.1} parent=1 // pred_region
      %106 = dma.done [#allocation8], 2048
    $region49: #{_forward_impl.1} parent=1 // pred_fallthru
      _
    // Predicated region
    $region50: #{_forward_impl.1} parent=1 // pred_check
      _
    $region51: #{_forward_impl.1} parent=1 // pred_check_branch
      %108 = sbr.rel (0) target = $region53
    $region52: #{_forward_impl.1} parent=1 // pred_region
      %109 = dma.done [#allocation8], 1024
    $region53: #{_forward_impl.1} parent=1 // pred_fallthru
      _
    // Predicated region
    $region54: #{_forward_impl.1} parent=1 // pred_check
      _
    $region55: #{_forward_impl.1} parent=1 // pred_check_branch
      %111 = sbr.rel (0) target = $region57
    $region56: #{_forward_impl.1} parent=1 // pred_region
      %112 = dma.done [#allocation11], 1024
    $region57: #{_forward_impl.1} parent=1 // pred_fallthru
      _
    %v114 = vld [vmem:[%s0] sm:$0xf]
    %v115 = vld [vmem:[%s0 + $0x4] sm:$0xf]
    %v116 = vld [vmem:[#allocation2] sm:$0xf]
    %v117 = vld [vmem:[#allocation2 + $0x4] sm:$0xf]
    %v118 = vld [vmem:[#allocation2 + $0x8] sm:$0xf]
    %v119 = vld [vmem:[#allocation2 + $0xc] sm:$0xf]
    %v120 = vld [vmem:[#allocation2 + $0x10] sm:$0xf]
    %v121 = vld [vmem:[#allocation2 + $0x14] sm:$0xf]
    %v122 = vld [vmem:[#allocation2 + $0x18] sm:$0xf]
    %v123 = vld [vmem:[#allocation2 + $0x1c] sm:$0xf]
    %v124 = vld [vmem:[#allocation2 + $0x20] sm:$0xf]
    %v125 = vld [vmem:[#allocation2 + $0x24] sm:$0xf]
    %v126 = vld [vmem:[#allocation2 + $0x28] sm:$0xf]
    %v127 = vld [vmem:[#allocation2 + $0x2c] sm:$0xf]
    %v128 = vld [vmem:[#allocation2 + $0x30] sm:$0xf]
    %v129 = vld [vmem:[#allocation2 + $0x34] sm:$0xf]
    %v130 = vld [vmem:[#allocation2 + $0x38] sm:$0xf]
    %v131 = vld [vmem:[#allocation2 + $0x3c] sm:$0xf]
    %v132 = vld [vmem:[%s7] sm:$0x3]
    %v134 = vlaneseq
    %v135 = vshrl.u32 %v134, 7
    %v136 = vsub.s32 0, %v135
    %v137 = vrot.slane %v132, %v136
    %v141 = vunpack.c.l.b16 %v114
    %v142 = vunpack.c.l.b16 %v115
    %v143 = vpack.c.b16 %v142, %v141
    %v161 = vunpack.c.l.b16 %v116
    %v162 = vunpack.c.l.b16 %v117
    %v163 = vunpack.c.l.b16 %v118
    %v164 = vunpack.c.l.b16 %v119
    %v165 = vunpack.c.l.b16 %v120
    %v166 = vunpack.c.l.b16 %v121
    %v167 = vunpack.c.l.b16 %v122
    %v168 = vunpack.c.l.b16 %v123
    %v169 = vunpack.c.l.b16 %v124
    %v170 = vunpack.c.l.b16 %v125
    %v171 = vunpack.c.l.b16 %v126
    %v172 = vunpack.c.l.b16 %v127
    %v173 = vunpack.c.l.b16 %v128
    %v174 = vunpack.c.l.b16 %v129
    %v175 = vunpack.c.l.b16 %v130
    %v176 = vunpack.c.l.b16 %v131
    %v177 = vpack.c.b16 %v162, %v161
    %v178 = vpack.c.b16 %v164, %v163
    %v179 = vpack.c.b16 %v166, %v165
    %v180 = vpack.c.b16 %v168, %v167
    %v181 = vpack.c.b16 %v170, %v169
    %v182 = vpack.c.b16 %v172, %v171
    %v183 = vpack.c.b16 %v174, %v173
    %v184 = vpack.c.b16 %v176, %v175
    %193 = vmatprep.subr.bf16.mxu0 0
    %194 = vmatpush1.bf16.msra.mxu0 %v177
    %195 = vmatprep.subr.bf16.mxu0 0
    %196 = vmatpush1.bf16.msra.mxu0 %v178
    %197 = vmatprep.subr.bf16.mxu0 0
    %198 = vmatpush1.bf16.msra.mxu0 %v179
    %199 = vmatprep.subr.bf16.mxu0 0
    %200 = vmatpush1.bf16.msra.mxu0 %v180
    %201 = vmatprep.subr.bf16.mxu0 0
    %202 = vmatpush1.bf16.msra.mxu0 %v181
    %203 = vmatprep.subr.bf16.mxu0 0
    %204 = vmatpush1.bf16.msra.mxu0 %v182
    %205 = vmatprep.subr.bf16.mxu0 0
    %206 = vmatpush1.bf16.msra.mxu0 %v183
    %207 = vmatprep.subr.bf16.mxu0 0
    %208 = vmatpush1.bf16.msra.mxu0 %v184
    %209 = vmatprep.subr.bf16.mxu0 0
    %210 = vmatpush1.bf16.msra.mxu0 0
    %211 = vmatprep.subr.bf16.mxu0 0
    %212 = vmatpush1.bf16.msra.mxu0 0
    %213 = vmatprep.subr.bf16.mxu0 0
    %214 = vmatpush1.bf16.msra.mxu0 0
    %215 = vmatprep.subr.bf16.mxu0 0
    %216 = vmatpush1.bf16.msra.mxu0 0
    %217 = vmatprep.subr.bf16.mxu0 0
    %218 = vmatpush1.bf16.msra.mxu0 0
    %219 = vmatprep.subr.bf16.mxu0 0
    %220 = vmatpush1.bf16.msra.mxu0 0
    %221 = vmatprep.subr.bf16.mxu0 0
    %222 = vmatpush1.bf16.msra.mxu0 0
    %223 = vmatprep.subr.bf16.mxu0 0
    %224 = vmatpush1.bf16.msra.mxu0 0
    %225 = vmatprep.mubr.bf16.mxu0 0
    %226 = vmatmul.mubr.bf16.gmra.mrb[0].mxu0 %v143
    %v227 = vpop.f32.mrb[0].mxu0
    %v228 = vadd.f32 %v137, %v227
    %v229 = vpop.f32.mrb[0].mxu0
    %v230 = vpop.f32.mrb[0].mxu0
    %v231 = vadd.f32 %v137, %v230
    %v232 = vpop.f32.mrb[0].mxu0
    %233 = vdwg.mxu0
    %v234 = vmax.f32 %v228, 0.0
    %v235 = vmax.f32 %v231, 0.0
    %v236 = vpack.c.bf16 %v235, %v234
    %v237 = vld [vmem:[#allocation4] sm:$0xf]
    %v238 = vld [vmem:[#allocation4 + $0x4] sm:$0xf]
    %v239 = vld [vmem:[#allocation4 + $0x8] sm:$0xf]
    %v240 = vld [vmem:[#allocation4 + $0xc] sm:$0xf]
    %v241 = vld [vmem:[#allocation4 + $0x10] sm:$0xf]
    %v242 = vld [vmem:[#allocation4 + $0x14] sm:$0xf]
    %v243 = vld [vmem:[#allocation4 + $0x18] sm:$0xf]
    %v244 = vld [vmem:[#allocation4 + $0x1c] sm:$0xf]
    %v245 = vld [vmem:[#allocation4 + $0x20] sm:$0xf]
    %v246 = vld [vmem:[#allocation4 + $0x24] sm:$0xf]
    %v247 = vld [vmem:[#allocation4 + $0x28] sm:$0xf]
    %v248 = vld [vmem:[#allocation4 + $0x2c] sm:$0xf]
    %v249 = vld [vmem:[#allocation4 + $0x30] sm:$0xf]
    %v250 = vld [vmem:[#allocation4 + $0x34] sm:$0xf]
    %v251 = vld [vmem:[#allocation4 + $0x38] sm:$0xf]
    %v252 = vld [vmem:[#allocation4 + $0x3c] sm:$0xf]
    %v253 = vld [vmem:[#allocation6] sm:$0xf]
    %v254 = vld [vmem:[#allocation6 + $0x4] sm:$0xf]
    %v255 = vld [vmem:[#allocation6 + $0x8] sm:$0xf]
    %v256 = vld [vmem:[#allocation6 + $0xc] sm:$0xf]
    %v257 = vld [vmem:[#allocation6 + $0x10] sm:$0xf]
    %v258 = vld [vmem:[#allocation6 + $0x14] sm:$0xf]
    %v259 = vld [vmem:[#allocation6 + $0x18] sm:$0xf]
    %v260 = vld [vmem:[#allocation6 + $0x1c] sm:$0xf]
    %v261 = vld [vmem:[#allocation6 + $0x20] sm:$0xf]
    %v262 = vld [vmem:[#allocation6 + $0x24] sm:$0xf]
    %v263 = vld [vmem:[#allocation6 + $0x28] sm:$0xf]
    %v264 = vld [vmem:[#allocation6 + $0x2c] sm:$0xf]
    %v265 = vld [vmem:[#allocation6 + $0x30] sm:$0xf]
    %v266 = vld [vmem:[#allocation6 + $0x34] sm:$0xf]
    %v267 = vld [vmem:[#allocation6 + $0x38] sm:$0xf]
    %v268 = vld [vmem:[#allocation6 + $0x3c] sm:$0xf]
    %s269 = scalar_lea.vmem %s7, 2
    %v270 = vld [vmem:[%s269] sm:$0x3]
    %s271 = scalar_lea.vmem %s7, 8
    %v272 = vld [vmem:[%s271] sm:$0x3]
    %v274 = vlaneseq
    %v275 = vshrl.u32 %v274, 7
    %v276 = vsub.s32 0, %v275
    %v277 = vrot.slane %v270, %v276
    %v295 = vunpack.c.l.b16 %v237
    %v296 = vunpack.c.l.b16 %v238
    %v297 = vunpack.c.l.b16 %v239
    %v298 = vunpack.c.l.b16 %v240
    %v299 = vunpack.c.l.b16 %v241
    %v300 = vunpack.c.l.b16 %v242
    %v301 = vunpack.c.l.b16 %v243
    %v302 = vunpack.c.l.b16 %v244
    %v303 = vunpack.c.l.b16 %v245
    %v304 = vunpack.c.l.b16 %v246
    %v305 = vunpack.c.l.b16 %v247
    %v306 = vunpack.c.l.b16 %v248
    %v307 = vunpack.c.l.b16 %v249
    %v308 = vunpack.c.l.b16 %v250
    %v309 = vunpack.c.l.b16 %v251
    %v310 = vunpack.c.l.b16 %v252
    %v311 = vpack.c.b16 %v296, %v295
    %v312 = vpack.c.b16 %v298, %v297
    %v313 = vpack.c.b16 %v300, %v299
    %v314 = vpack.c.b16 %v302, %v301
    %v315 = vpack.c.b16 %v304, %v303
    %v316 = vpack.c.b16 %v306, %v305
    %v317 = vpack.c.b16 %v308, %v307
    %v318 = vpack.c.b16 %v310, %v309
    %327 = vmatprep.subr.bf16.mxu0 0
    %328 = vmatpush1.bf16.msra.mxu0 %v311
    %329 = vmatprep.subr.bf16.mxu0 0
    %330 = vmatpush1.bf16.msra.mxu0 %v312
    %331 = vmatprep.subr.bf16.mxu0 0
    %332 = vmatpush1.bf16.msra.mxu0 %v313
    %333 = vmatprep.subr.bf16.mxu0 0
    %334 = vmatpush1.bf16.msra.mxu0 %v314
    %335 = vmatprep.subr.bf16.mxu0 0
    %336 = vmatpush1.bf16.msra.mxu0 %v315
    %337 = vmatprep.subr.bf16.mxu0 0
    %338 = vmatpush1.bf16.msra.mxu0 %v316
    %339 = vmatprep.subr.bf16.mxu0 0
    %340 = vmatpush1.bf16.msra.mxu0 %v317
    %341 = vmatprep.subr.bf16.mxu0 0
    %342 = vmatpush1.bf16.msra.mxu0 %v318
    %343 = vmatprep.subr.bf16.mxu0 0
    %344 = vmatpush1.bf16.msra.mxu0 0
    %345 = vmatprep.subr.bf16.mxu0 0
    %346 = vmatpush1.bf16.msra.mxu0 0
    %347 = vmatprep.subr.bf16.mxu0 0
    %348 = vmatpush1.bf16.msra.mxu0 0
    %349 = vmatprep.subr.bf16.mxu0 0
    %350 = vmatpush1.bf16.msra.mxu0 0
    %351 = vmatprep.subr.bf16.mxu0 0
    %352 = vmatpush1.bf16.msra.mxu0 0
    %353 = vmatprep.subr.bf16.mxu0 0
    %354 = vmatpush1.bf16.msra.mxu0 0
    %355 = vmatprep.subr.bf16.mxu0 0
    %356 = vmatpush1.bf16.msra.mxu0 0
    %357 = vmatprep.subr.bf16.mxu0 0
    %358 = vmatpush1.bf16.msra.mxu0 0
    %359 = vmatprep.mubr.bf16.mxu0 0
    %360 = vmatmul.mubr.bf16.gmra.mrb[0].mxu0 %v236
    %v361 = vpop.f32.mrb[0].mxu0
    %v362 = vadd.f32 %v277, %v361
    %v363 = vpop.f32.mrb[0].mxu0
    %v364 = vpop.f32.mrb[0].mxu0
    %v365 = vadd.f32 %v277, %v364
    %v366 = vpop.f32.mrb[0].mxu0
    %367 = vdwg.mxu0
    %v368 = vmax.f32 %v362, 0.0
    %v369 = vmax.f32 %v365, 0.0
    %v370 = vpack.c.bf16 %v369, %v368
    %v372 = vlaneseq
    %v373 = vshrl.u32 %v372, 7
    %v374 = vsub.s32 0, %v373
    %v375 = vrot.slane %v272, %v374
    %v393 = vunpack.c.l.b16 %v253
    %v394 = vunpack.c.l.b16 %v254
    %v395 = vunpack.c.l.b16 %v255
    %v396 = vunpack.c.l.b16 %v256
    %v397 = vunpack.c.l.b16 %v257
    %v398 = vunpack.c.l.b16 %v258
    %v399 = vunpack.c.l.b16 %v259
    %v400 = vunpack.c.l.b16 %v260
    %v401 = vunpack.c.l.b16 %v261
    %v402 = vunpack.c.l.b16 %v262
    %v403 = vunpack.c.l.b16 %v263
    %v404 = vunpack.c.l.b16 %v264
    %v405 = vunpack.c.l.b16 %v265
    %v406 = vunpack.c.l.b16 %v266
    %v407 = vunpack.c.l.b16 %v267
    %v408 = vunpack.c.l.b16 %v268
    %v409 = vpack.c.b16 %v394, %v393
    %v410 = vpack.c.b16 %v396, %v395
    %v411 = vpack.c.b16 %v398, %v397
    %v412 = vpack.c.b16 %v400, %v399
    %v413 = vpack.c.b16 %v402, %v401
    %v414 = vpack.c.b16 %v404, %v403
    %v415 = vpack.c.b16 %v406, %v405
    %v416 = vpack.c.b16 %v408, %v407
    %425 = vmatprep.subr.bf16.mxu0 0
    %426 = vmatpush1.bf16.msra.mxu0 %v409
    %427 = vmatprep.subr.bf16.mxu0 0
    %428 = vmatpush1.bf16.msra.mxu0 %v410
    %429 = vmatprep.subr.bf16.mxu0 0
    %430 = vmatpush1.bf16.msra.mxu0 %v411
    %431 = vmatprep.subr.bf16.mxu0 0
    %432 = vmatpush1.bf16.msra.mxu0 %v412
    %433 = vmatprep.subr.bf16.mxu0 0
    %434 = vmatpush1.bf16.msra.mxu0 %v413
    %435 = vmatprep.subr.bf16.mxu0 0
    %436 = vmatpush1.bf16.msra.mxu0 %v414
    %437 = vmatprep.subr.bf16.mxu0 0
    %438 = vmatpush1.bf16.msra.mxu0 %v415
    %439 = vmatprep.subr.bf16.mxu0 0
    %440 = vmatpush1.bf16.msra.mxu0 %v416
    %441 = vmatprep.subr.bf16.mxu0 0
    %442 = vmatpush1.bf16.msra.mxu0 0
    %443 = vmatprep.subr.bf16.mxu0 0
    %444 = vmatpush1.bf16.msra.mxu0 0
    %445 = vmatprep.subr.bf16.mxu0 0
    %446 = vmatpush1.bf16.msra.mxu0 0
    %447 = vmatprep.subr.bf16.mxu0 0
    %448 = vmatpush1.bf16.msra.mxu0 0
    %449 = vmatprep.subr.bf16.mxu0 0
    %450 = vmatpush1.bf16.msra.mxu0 0
    %451 = vmatprep.subr.bf16.mxu0 0
    %452 = vmatpush1.bf16.msra.mxu0 0
    %453 = vmatprep.subr.bf16.mxu0 0
    %454 = vmatpush1.bf16.msra.mxu0 0
    %455 = vmatprep.subr.bf16.mxu0 0
    %456 = vmatpush1.bf16.msra.mxu0 0
    %457 = vmatprep.mubr.bf16.mxu0 0
    %458 = vmatmul.mubr.bf16.gmra.mrb[0].mxu0 %v370
    %v459 = vpop.f32.mrb[0].mxu0
    %v460 = vadd.f32 %v375, %v459
    %v461 = vpop.f32.mrb[0].mxu0
    %v462 = vpop.f32.mrb[0].mxu0
    %v463 = vadd.f32 %v375, %v462
    %v464 = vpop.f32.mrb[0].mxu0
    %465 = vdwg.mxu0
    %v466 = vunpack.c.l.bf16 %v236
    %v467 = vunpack.c.h.bf16 %v236
    %v468 = vadd.f32 %v460, %v466
    %v469 = vadd.f32 %v463, %v467
    %v470 = vmax.f32 %v468, 0.0
    %v471 = vmax.f32 %v469, 0.0
    %v472 = vpack.c.bf16 %v471, %v470
    %s473 = scalar_lea.vmem [#allocation4], 64
    %v474 = vld [vmem:[%s473] sm:$0xf]
    %v475 = vld [vmem:[%s473 + $0x4] sm:$0xf]
    %v476 = vld [vmem:[%s473 + $0x8] sm:$0xf]
    %v477 = vld [vmem:[%s473 + $0xc] sm:$0xf]
    %v478 = vld [vmem:[%s473 + $0x10] sm:$0xf]
    %v479 = vld [vmem:[%s473 + $0x14] sm:$0xf]
    %v480 = vld [vmem:[%s473 + $0x18] sm:$0xf]
    %v481 = vld [vmem:[%s473 + $0x1c] sm:$0xf]
    %v482 = vld [vmem:[%s473 + $0x20] sm:$0xf]
    %v483 = vld [vmem:[%s473 + $0x24] sm:$0xf]
    %v484 = vld [vmem:[%s473 + $0x28] sm:$0xf]
    %v485 = vld [vmem:[%s473 + $0x2c] sm:$0xf]
    %v486 = vld [vmem:[%s473 + $0x30] sm:$0xf]
    %v487 = vld [vmem:[%s473 + $0x34] sm:$0xf]
    %v488 = vld [vmem:[%s473 + $0x38] sm:$0xf]
    %v489 = vld [vmem:[%s473 + $0x3c] sm:$0xf]
    %s490 = scalar_lea.vmem [#allocation6], 64
    %v491 = vld [vmem:[%s490] sm:$0xf]
    %v492 = vld [vmem:[%s490 + $0x4] sm:$0xf]
    %v493 = vld [vmem:[%s490 + $0x8] sm:$0xf]
    %v494 = vld [vmem:[%s490 + $0xc] sm:$0xf]
    %v495 = vld [vmem:[%s490 + $0x10] sm:$0xf]
    %v496 = vld [vmem:[%s490 + $0x14] sm:$0xf]
    %v497 = vld [vmem:[%s490 + $0x18] sm:$0xf]
    %v498 = vld [vmem:[%s490 + $0x1c] sm:$0xf]
    %v499 = vld [vmem:[%s490 + $0x20] sm:$0xf]
    %v500 = vld [vmem:[%s490 + $0x24] sm:$0xf]
    %v501 = vld [vmem:[%s490 + $0x28] sm:$0xf]
    %v502 = vld [vmem:[%s490 + $0x2c] sm:$0xf]
    %v503 = vld [vmem:[%s490 + $0x30] sm:$0xf]
    %v504 = vld [vmem:[%s490 + $0x34] sm:$0xf]
    %v505 = vld [vmem:[%s490 + $0x38] sm:$0xf]
    %v506 = vld [vmem:[%s490 + $0x3c] sm:$0xf]
    %s507 = scalar_lea.vmem %s7, 4
    %v508 = vld [vmem:[%s507] sm:$0x3]
    %s509 = scalar_lea.vmem %s7, 10
    %v510 = vld [vmem:[%s509] sm:$0x3]
    %v512 = vlaneseq
    %v513 = vshrl.u32 %v512, 7
    %v514 = vsub.s32 0, %v513
    %v515 = vrot.slane %v508, %v514
    %v533 = vunpack.c.l.b16 %v474
    %v534 = vunpack.c.l.b16 %v475
    %v535 = vunpack.c.l.b16 %v476
    %v536 = vunpack.c.l.b16 %v477
    %v537 = vunpack.c.l.b16 %v478
    %v538 = vunpack.c.l.b16 %v479
    %v539 = vunpack.c.l.b16 %v480
    %v540 = vunpack.c.l.b16 %v481
    %v541 = vunpack.c.l.b16 %v482
    %v542 = vunpack.c.l.b16 %v483
    %v543 = vunpack.c.l.b16 %v484
    %v544 = vunpack.c.l.b16 %v485
    %v545 = vunpack.c.l.b16 %v486
    %v546 = vunpack.c.l.b16 %v487
    %v547 = vunpack.c.l.b16 %v488
    %v548 = vunpack.c.l.b16 %v489
    %v549 = vpack.c.b16 %v534, %v533
    %v550 = vpack.c.b16 %v536, %v535
    %v551 = vpack.c.b16 %v538, %v537
    %v552 = vpack.c.b16 %v540, %v539
    %v553 = vpack.c.b16 %v542, %v541
    %v554 = vpack.c.b16 %v544, %v543
    %v555 = vpack.c.b16 %v546, %v545
    %v556 = vpack.c.b16 %v548, %v547
    %565 = vmatprep.subr.bf16.mxu0 0
    %566 = vmatpush1.bf16.msra.mxu0 %v549
    %567 = vmatprep.subr.bf16.mxu0 0
    %568 = vmatpush1.bf16.msra.mxu0 %v550
    %569 = vmatprep.subr.bf16.mxu0 0
    %570 = vmatpush1.bf16.msra.mxu0 %v551
    %571 = vmatprep.subr.bf16.mxu0 0
    %572 = vmatpush1.bf16.msra.mxu0 %v552
    %573 = vmatprep.subr.bf16.mxu0 0
    %574 = vmatpush1.bf16.msra.mxu0 %v553
    %575 = vmatprep.subr.bf16.mxu0 0
    %576 = vmatpush1.bf16.msra.mxu0 %v554
    %577 = vmatprep.subr.bf16.mxu0 0
    %578 = vmatpush1.bf16.msra.mxu0 %v555
    %579 = vmatprep.subr.bf16.mxu0 0
    %580 = vmatpush1.bf16.msra.mxu0 %v556
    %581 = vmatprep.subr.bf16.mxu0 0
    %582 = vmatpush1.bf16.msra.mxu0 0
    %583 = vmatprep.subr.bf16.mxu0 0
    %584 = vmatpush1.bf16.msra.mxu0 0
    %585 = vmatprep.subr.bf16.mxu0 0
    %586 = vmatpush1.bf16.msra.mxu0 0
    %587 = vmatprep.subr.bf16.mxu0 0
    %588 = vmatpush1.bf16.msra.mxu0 0
    %589 = vmatprep.subr.bf16.mxu0 0
    %590 = vmatpush1.bf16.msra.mxu0 0
    %591 = vmatprep.subr.bf16.mxu0 0
    %592 = vmatpush1.bf16.msra.mxu0 0
    %593 = vmatprep.subr.bf16.mxu0 0
    %594 = vmatpush1.bf16.msra.mxu0 0
    %595 = vmatprep.subr.bf16.mxu0 0
    %596 = vmatpush1.bf16.msra.mxu0 0
    %597 = vmatprep.mubr.bf16.mxu0 0
    %598 = vmatmul.mubr.bf16.gmra.mrb[0].mxu0 %v472
    %v599 = vpop.f32.mrb[0].mxu0
    %v600 = vadd.f32 %v515, %v599
    %v601 = vpop.f32.mrb[0].mxu0
    %v602 = vpop.f32.mrb[0].mxu0
    %v603 = vadd.f32 %v515, %v602
    %v604 = vpop.f32.mrb[0].mxu0
    %605 = vdwg.mxu0
    %v606 = vmax.f32 %v600, 0.0
    %v607 = vmax.f32 %v603, 0.0
    %v608 = vpack.c.bf16 %v607, %v606
    %v610 = vlaneseq
    %v611 = vshrl.u32 %v610, 7
    %v612 = vsub.s32 0, %v611
    %v613 = vrot.slane %v510, %v612
    %v631 = vunpack.c.l.b16 %v491
    %v632 = vunpack.c.l.b16 %v492
    %v633 = vunpack.c.l.b16 %v493
    %v634 = vunpack.c.l.b16 %v494
    %v635 = vunpack.c.l.b16 %v495
    %v636 = vunpack.c.l.b16 %v496
    %v637 = vunpack.c.l.b16 %v497
    %v638 = vunpack.c.l.b16 %v498
    %v639 = vunpack.c.l.b16 %v499
    %v640 = vunpack.c.l.b16 %v500
    %v641 = vunpack.c.l.b16 %v501
    %v642 = vunpack.c.l.b16 %v502
    %v643 = vunpack.c.l.b16 %v503
    %v644 = vunpack.c.l.b16 %v504
    %v645 = vunpack.c.l.b16 %v505
    %v646 = vunpack.c.l.b16 %v506
    %v647 = vpack.c.b16 %v632, %v631
    %v648 = vpack.c.b16 %v634, %v633
    %v649 = vpack.c.b16 %v636, %v635
    %v650 = vpack.c.b16 %v638, %v637
    %v651 = vpack.c.b16 %v640, %v639
    %v652 = vpack.c.b16 %v642, %v641
    %v653 = vpack.c.b16 %v644, %v643
    %v654 = vpack.c.b16 %v646, %v645
    %663 = vmatprep.subr.bf16.mxu0 0
    %664 = vmatpush1.bf16.msra.mxu0 %v647
    %665 = vmatprep.subr.bf16.mxu0 0
    %666 = vmatpush1.bf16.msra.mxu0 %v648
    %667 = vmatprep.subr.bf16.mxu0 0
    %668 = vmatpush1.bf16.msra.mxu0 %v649
    %669 = vmatprep.subr.bf16.mxu0 0
    %670 = vmatpush1.bf16.msra.mxu0 %v650
    %671 = vmatprep.subr.bf16.mxu0 0
    %672 = vmatpush1.bf16.msra.mxu0 %v651
    %673 = vmatprep.subr.bf16.mxu0 0
    %674 = vmatpush1.bf16.msra.mxu0 %v652
    %675 = vmatprep.subr.bf16.mxu0 0
    %676 = vmatpush1.bf16.msra.mxu0 %v653
    %677 = vmatprep.subr.bf16.mxu0 0
    %678 = vmatpush1.bf16.msra.mxu0 %v654
    %679 = vmatprep.subr.bf16.mxu0 0
    %680 = vmatpush1.bf16.msra.mxu0 0
    %681 = vmatprep.subr.bf16.mxu0 0
    %682 = vmatpush1.bf16.msra.mxu0 0
    %683 = vmatprep.subr.bf16.mxu0 0
    %684 = vmatpush1.bf16.msra.mxu0 0
    %685 = vmatprep.subr.bf16.mxu0 0
    %686 = vmatpush1.bf16.msra.mxu0 0
    %687 = vmatprep.subr.bf16.mxu0 0
    %688 = vmatpush1.bf16.msra.mxu0 0
    %689 = vmatprep.subr.bf16.mxu0 0
    %690 = vmatpush1.bf16.msra.mxu0 0
    %691 = vmatprep.subr.bf16.mxu0 0
    %692 = vmatpush1.bf16.msra.mxu0 0
    %693 = vmatprep.subr.bf16.mxu0 0
    %694 = vmatpush1.bf16.msra.mxu0 0
    %695 = vmatprep.mubr.bf16.mxu0 0
    %696 = vmatmul.mubr.bf16.gmra.mrb[0].mxu0 %v608
    %v697 = vpop.f32.mrb[0].mxu0
    %v698 = vadd.f32 %v613, %v697
    %v699 = vpop.f32.mrb[0].mxu0
    %v700 = vpop.f32.mrb[0].mxu0
    %v701 = vadd.f32 %v613, %v700
    %v702 = vpop.f32.mrb[0].mxu0
    %703 = vdwg.mxu0
    %v704 = vunpack.c.l.bf16 %v472
    %v705 = vunpack.c.h.bf16 %v472
    %v706 = vadd.f32 %v698, %v704
    %v707 = vadd.f32 %v701, %v705
    %v708 = vmax.f32 %v706, 0.0
    %v709 = vmax.f32 %v707, 0.0
    %v710 = vpack.c.bf16 %v709, %v708
    %s711 = scalar_lea.vmem [#allocation4], 128
    %v712 = vld [vmem:[%s711] sm:$0xf]
    %v713 = vld [vmem:[%s711 + $0x4] sm:$0xf]
    %v714 = vld [vmem:[%s711 + $0x8] sm:$0xf]
    %v715 = vld [vmem:[%s711 + $0xc] sm:$0xf]
    %v716 = vld [vmem:[%s711 + $0x10] sm:$0xf]
    %v717 = vld [vmem:[%s711 + $0x14] sm:$0xf]
    %v718 = vld [vmem:[%s711 + $0x18] sm:$0xf]
    %v719 = vld [vmem:[%s711 + $0x1c] sm:$0xf]
    %v720 = vld [vmem:[%s711 + $0x20] sm:$0xf]
    %v721 = vld [vmem:[%s711 + $0x24] sm:$0xf]
    %v722 = vld [vmem:[%s711 + $0x28] sm:$0xf]
    %v723 = vld [vmem:[%s711 + $0x2c] sm:$0xf]
    %v724 = vld [vmem:[%s711 + $0x30] sm:$0xf]
    %v725 = vld [vmem:[%s711 + $0x34] sm:$0xf]
    %v726 = vld [vmem:[%s711 + $0x38] sm:$0xf]
    %v727 = vld [vmem:[%s711 + $0x3c] sm:$0xf]
    %s728 = scalar_lea.vmem [#allocation6], 128
    %v729 = vld [vmem:[%s728] sm:$0xf]
    %v730 = vld [vmem:[%s728 + $0x4] sm:$0xf]
    %v731 = vld [vmem:[%s728 + $0x8] sm:$0xf]
    %v732 = vld [vmem:[%s728 + $0xc] sm:$0xf]
    %v733 = vld [vmem:[%s728 + $0x10] sm:$0xf]
    %v734 = vld [vmem:[%s728 + $0x14] sm:$0xf]
    %v735 = vld [vmem:[%s728 + $0x18] sm:$0xf]
    %v736 = vld [vmem:[%s728 + $0x1c] sm:$0xf]
    %v737 = vld [vmem:[%s728 + $0x20] sm:$0xf]
    %v738 = vld [vmem:[%s728 + $0x24] sm:$0xf]
    %v739 = vld [vmem:[%s728 + $0x28] sm:$0xf]
    %v740 = vld [vmem:[%s728 + $0x2c] sm:$0xf]
    %v741 = vld [vmem:[%s728 + $0x30] sm:$0xf]
    %v742 = vld [vmem:[%s728 + $0x34] sm:$0xf]
    %v743 = vld [vmem:[%s728 + $0x38] sm:$0xf]
    %v744 = vld [vmem:[%s728 + $0x3c] sm:$0xf]
    %s745 = scalar_lea.vmem %s7, 6
    %v746 = vld [vmem:[%s745] sm:$0x3]
    %s747 = scalar_lea.vmem %s7, 12
    %v748 = vld [vmem:[%s747] sm:$0x3]
    %v750 = vlaneseq
    %v751 = vshrl.u32 %v750, 7
    %v752 = vsub.s32 0, %v751
    %v753 = vrot.slane %v746, %v752
    %v771 = vunpack.c.l.b16 %v712
    %v772 = vunpack.c.l.b16 %v713
    %v773 = vunpack.c.l.b16 %v714
    %v774 = vunpack.c.l.b16 %v715
    %v775 = vunpack.c.l.b16 %v716
    %v776 = vunpack.c.l.b16 %v717
    %v777 = vunpack.c.l.b16 %v718
    %v778 = vunpack.c.l.b16 %v719
    %v779 = vunpack.c.l.b16 %v720
    %v780 = vunpack.c.l.b16 %v721
    %v781 = vunpack.c.l.b16 %v722
    %v782 = vunpack.c.l.b16 %v723
    %v783 = vunpack.c.l.b16 %v724
    %v784 = vunpack.c.l.b16 %v725
    %v785 = vunpack.c.l.b16 %v726
    %v786 = vunpack.c.l.b16 %v727
    %v787 = vpack.c.b16 %v772, %v771
    %v788 = vpack.c.b16 %v774, %v773
    %v789 = vpack.c.b16 %v776, %v775
    %v790 = vpack.c.b16 %v778, %v777
    %v791 = vpack.c.b16 %v780, %v779
    %v792 = vpack.c.b16 %v782, %v781
    %v793 = vpack.c.b16 %v784, %v783
    %v794 = vpack.c.b16 %v786, %v785
    %803 = vmatprep.subr.bf16.mxu0 0
    %804 = vmatpush1.bf16.msra.mxu0 %v787
    %805 = vmatprep.subr.bf16.mxu0 0
    %806 = vmatpush1.bf16.msra.mxu0 %v788
    %807 = vmatprep.subr.bf16.mxu0 0
    %808 = vmatpush1.bf16.msra.mxu0 %v789
    %809 = vmatprep.subr.bf16.mxu0 0
    %810 = vmatpush1.bf16.msra.mxu0 %v790
    %811 = vmatprep.subr.bf16.mxu0 0
    %812 = vmatpush1.bf16.msra.mxu0 %v791
    %813 = vmatprep.subr.bf16.mxu0 0
    %814 = vmatpush1.bf16.msra.mxu0 %v792
    %815 = vmatprep.subr.bf16.mxu0 0
    %816 = vmatpush1.bf16.msra.mxu0 %v793
    %817 = vmatprep.subr.bf16.mxu0 0
    %818 = vmatpush1.bf16.msra.mxu0 %v794
    %819 = vmatprep.subr.bf16.mxu0 0
    %820 = vmatpush1.bf16.msra.mxu0 0
    %821 = vmatprep.subr.bf16.mxu0 0
    %822 = vmatpush1.bf16.msra.mxu0 0
    %823 = vmatprep.subr.bf16.mxu0 0
    %824 = vmatpush1.bf16.msra.mxu0 0
    %825 = vmatprep.subr.bf16.mxu0 0
    %826 = vmatpush1.bf16.msra.mxu0 0
    %827 = vmatprep.subr.bf16.mxu0 0
    %828 = vmatpush1.bf16.msra.mxu0 0
    %829 = vmatprep.subr.bf16.mxu0 0
    %830 = vmatpush1.bf16.msra.mxu0 0
    %831 = vmatprep.subr.bf16.mxu0 0
    %832 = vmatpush1.bf16.msra.mxu0 0
    %833 = vmatprep.subr.bf16.mxu0 0
    %834 = vmatpush1.bf16.msra.mxu0 0
    %835 = vmatprep.mubr.bf16.mxu0 0
    %836 = vmatmul.mubr.bf16.gmra.mrb[0].mxu0 %v710
    %v837 = vpop.f32.mrb[0].mxu0
    %v838 = vadd.f32 %v753, %v837
    %v839 = vpop.f32.mrb[0].mxu0
    %v840 = vpop.f32.mrb[0].mxu0
    %v841 = vadd.f32 %v753, %v840
    %v842 = vpop.f32.mrb[0].mxu0
    %843 = vdwg.mxu0
    %v844 = vmax.f32 %v838, 0.0
    %v845 = vmax.f32 %v841, 0.0
    %v846 = vpack.c.bf16 %v845, %v844
    %v848 = vlaneseq
    %v849 = vshrl.u32 %v848, 7
    %v850 = vsub.s32 0, %v849
    %v851 = vrot.slane %v748, %v850
    %v869 = vunpack.c.l.b16 %v729
    %v870 = vunpack.c.l.b16 %v730
    %v871 = vunpack.c.l.b16 %v731
    %v872 = vunpack.c.l.b16 %v732
    %v873 = vunpack.c.l.b16 %v733
    %v874 = vunpack.c.l.b16 %v734
    %v875 = vunpack.c.l.b16 %v735
    %v876 = vunpack.c.l.b16 %v736
    %v877 = vunpack.c.l.b16 %v737
    %v878 = vunpack.c.l.b16 %v738
    %v879 = vunpack.c.l.b16 %v739
    %v880 = vunpack.c.l.b16 %v740
    %v881 = vunpack.c.l.b16 %v741
    %v882 = vunpack.c.l.b16 %v742
    %v883 = vunpack.c.l.b16 %v743
    %v884 = vunpack.c.l.b16 %v744
    %v885 = vpack.c.b16 %v870, %v869
    %v886 = vpack.c.b16 %v872, %v871
    %v887 = vpack.c.b16 %v874, %v873
    %v888 = vpack.c.b16 %v876, %v875
    %v889 = vpack.c.b16 %v878, %v877
    %v890 = vpack.c.b16 %v880, %v879
    %v891 = vpack.c.b16 %v882, %v881
    %v892 = vpack.c.b16 %v884, %v883
    %901 = vmatprep.subr.bf16.mxu0 0
    %902 = vmatpush1.bf16.msra.mxu0 %v885
    %903 = vmatprep.subr.bf16.mxu0 0
    %904 = vmatpush1.bf16.msra.mxu0 %v886
    %905 = vmatprep.subr.bf16.mxu0 0
    %906 = vmatpush1.bf16.msra.mxu0 %v887
    %907 = vmatprep.subr.bf16.mxu0 0
    %908 = vmatpush1.bf16.msra.mxu0 %v888
    %909 = vmatprep.subr.bf16.mxu0 0
    %910 = vmatpush1.bf16.msra.mxu0 %v889
    %911 = vmatprep.subr.bf16.mxu0 0
    %912 = vmatpush1.bf16.msra.mxu0 %v890
    %913 = vmatprep.subr.bf16.mxu0 0
    %914 = vmatpush1.bf16.msra.mxu0 %v891
    %915 = vmatprep.subr.bf16.mxu0 0
    %916 = vmatpush1.bf16.msra.mxu0 %v892
    %917 = vmatprep.subr.bf16.mxu0 0
    %918 = vmatpush1.bf16.msra.mxu0 0
    %919 = vmatprep.subr.bf16.mxu0 0
    %920 = vmatpush1.bf16.msra.mxu0 0
    %921 = vmatprep.subr.bf16.mxu0 0
    %922 = vmatpush1.bf16.msra.mxu0 0
    %923 = vmatprep.subr.bf16.mxu0 0
    %924 = vmatpush1.bf16.msra.mxu0 0
    %925 = vmatprep.subr.bf16.mxu0 0
    %926 = vmatpush1.bf16.msra.mxu0 0
    %927 = vmatprep.subr.bf16.mxu0 0
    %928 = vmatpush1.bf16.msra.mxu0 0
    %929 = vmatprep.subr.bf16.mxu0 0
    %930 = vmatpush1.bf16.msra.mxu0 0
    %931 = vmatprep.subr.bf16.mxu0 0
    %932 = vmatpush1.bf16.msra.mxu0 0
    %933 = vmatprep.mubr.bf16.mxu0 0
    %934 = vmatmul.mubr.bf16.gmra.mrb[0].mxu0 %v846
    %v935 = vpop.f32.mrb[0].mxu0
    %v936 = vadd.f32 %v851, %v935
    %v937 = vpop.f32.mrb[0].mxu0
    %v938 = vpop.f32.mrb[0].mxu0
    %v939 = vadd.f32 %v851, %v938
    %v940 = vpop.f32.mrb[0].mxu0
    %941 = vdwg.mxu0
    %v942 = vunpack.c.l.bf16 %v710
    %v943 = vunpack.c.h.bf16 %v710
    %v944 = vadd.f32 %v936, %v942
    %v945 = vadd.f32 %v939, %v943
    %v946 = vmax.f32 %v944, 0.0
    %v947 = vmax.f32 %v945, 0.0
    %v948 = vpack.c.bf16 %v947, %v946
    %v949 = vld [vmem:[#allocation7] sm:$0xff]
    %v950 = vld [vmem:[#allocation7 + $0x8] sm:$0xff]
    %v951 = vld [vmem:[#allocation7 + $0x10] sm:$0xff]
    %v952 = vld [vmem:[#allocation7 + $0x18] sm:$0xff]
    %v953 = vld [vmem:[#allocation7 + $0x20] sm:$0xff]
    %v954 = vld [vmem:[#allocation7 + $0x28] sm:$0xff]
    %v955 = vld [vmem:[#allocation7 + $0x30] sm:$0xff]
    %v956 = vld [vmem:[#allocation7 + $0x38] sm:$0xff]
    %v957 = vld [vmem:[#allocation7 + $0x40] sm:$0xff]
    %v958 = vld [vmem:[#allocation7 + $0x48] sm:$0xff]
    %v959 = vld [vmem:[#allocation7 + $0x50] sm:$0xff]
    %v960 = vld [vmem:[#allocation7 + $0x58] sm:$0xff]
    %v961 = vld [vmem:[#allocation7 + $0x60] sm:$0xff]
    %v962 = vld [vmem:[#allocation7 + $0x68] sm:$0xff]
    %v963 = vld [vmem:[#allocation7 + $0x70] sm:$0xff]
    %v964 = vld [vmem:[#allocation7 + $0x78] sm:$0xff]
    %s965 = scalar_lea.vmem %s7, 14
    %v966 = vld [vmem:[%s965] sm:$0x3]
    %v968 = vlaneseq
    %v969 = vshrl.u32 %v968, 7
    %v970 = vsub.s32 0, %v969
    %v971 = vrot.slane %v966, %v970
    %v972 = vlaneseq
    %v973 = vshrl.u32 %v972, 7
    %v974 = vsub.s32 1, %v973
    %v975 = vrot.slane %v966, %v974
    %v994 = vunpack.c.l.b16 %v949
    %v995 = vunpack.c.h.b16 %v949
    %v996 = vunpack.c.l.b16 %v950
    %v997 = vunpack.c.h.b16 %v950
    %v998 = vunpack.c.l.b16 %v951
    %v999 = vunpack.c.h.b16 %v951
    %v1000 = vunpack.c.l.b16 %v952
    %v1001 = vunpack.c.h.b16 %v952
    %v1002 = vunpack.c.l.b16 %v953
    %v1003 = vunpack.c.h.b16 %v953
    %v1004 = vunpack.c.l.b16 %v954
    %v1005 = vunpack.c.h.b16 %v954
    %v1006 = vunpack.c.l.b16 %v955
    %v1007 = vunpack.c.h.b16 %v955
    %v1008 = vunpack.c.l.b16 %v956
    %v1009 = vunpack.c.h.b16 %v956
    %v1010 = vunpack.c.l.b16 %v957
    %v1011 = vunpack.c.h.b16 %v957
    %v1012 = vunpack.c.l.b16 %v958
    %v1013 = vunpack.c.h.b16 %v958
    %v1014 = vunpack.c.l.b16 %v959
    %v1015 = vunpack.c.h.b16 %v959
    %v1016 = vunpack.c.l.b16 %v960
    %v1017 = vunpack.c.h.b16 %v960
    %v1018 = vunpack.c.l.b16 %v961
    %v1019 = vunpack.c.h.b16 %v961
    %v1020 = vunpack.c.l.b16 %v962
    %v1021 = vunpack.c.h.b16 %v962
    %v1022 = vunpack.c.l.b16 %v963
    %v1023 = vunpack.c.h.b16 %v963
    %v1024 = vunpack.c.l.b16 %v964
    %v1025 = vunpack.c.h.b16 %v964
    %v1026 = vpack.c.b16 %v996, %v994
    %v1027 = vpack.c.b16 %v997, %v995
    %v1028 = vpack.c.b16 %v1000, %v998
    %v1029 = vpack.c.b16 %v1001, %v999
    %v1030 = vpack.c.b16 %v1004, %v1002
    %v1031 = vpack.c.b16 %v1005, %v1003
    %v1032 = vpack.c.b16 %v1008, %v1006
    %v1033 = vpack.c.b16 %v1009, %v1007
    %v1034 = vpack.c.b16 %v1012, %v1010
    %v1035 = vpack.c.b16 %v1013, %v1011
    %v1036 = vpack.c.b16 %v1016, %v1014
    %v1037 = vpack.c.b16 %v1017, %v1015
    %v1038 = vpack.c.b16 %v1020, %v1018
    %v1039 = vpack.c.b16 %v1021, %v1019
    %v1040 = vpack.c.b16 %v1024, %v1022
    %v1041 = vpack.c.b16 %v1025, %v1023
    %1058 = vmatprep.subr.bf16.mxu0 %v1027
    %1059 = vmatpush1.bf16.msra.mxu0 %v1026
    %1060 = vmatprep.subr.bf16.mxu0 %v1029
    %1061 = vmatpush1.bf16.msra.mxu0 %v1028
    %1062 = vmatprep.subr.bf16.mxu0 %v1031
    %1063 = vmatpush1.bf16.msra.mxu0 %v1030
    %1064 = vmatprep.subr.bf16.mxu0 %v1033
    %1065 = vmatpush1.bf16.msra.mxu0 %v1032
    %1066 = vmatprep.subr.bf16.mxu0 %v1035
    %1067 = vmatpush1.bf16.msra.mxu0 %v1034
    %1068 = vmatprep.subr.bf16.mxu0 %v1037
    %1069 = vmatpush1.bf16.msra.mxu0 %v1036
    %1070 = vmatprep.subr.bf16.mxu0 %v1039
    %1071 = vmatpush1.bf16.msra.mxu0 %v1038
    %1072 = vmatprep.subr.bf16.mxu0 %v1041
    %1073 = vmatpush1.bf16.msra.mxu0 %v1040
    %1074 = vmatprep.subr.bf16.mxu0 0
    %1075 = vmatpush1.bf16.msra.mxu0 0
    %1076 = vmatprep.subr.bf16.mxu0 0
    %1077 = vmatpush1.bf16.msra.mxu0 0
    %1078 = vmatprep.subr.bf16.mxu0 0
    %1079 = vmatpush1.bf16.msra.mxu0 0
    %1080 = vmatprep.subr.bf16.mxu0 0
    %1081 = vmatpush1.bf16.msra.mxu0 0
    %1082 = vmatprep.subr.bf16.mxu0 0
    %1083 = vmatpush1.bf16.msra.mxu0 0
    %1084 = vmatprep.subr.bf16.mxu0 0
    %1085 = vmatpush1.bf16.msra.mxu0 0
    %1086 = vmatprep.subr.bf16.mxu0 0
    %1087 = vmatpush1.bf16.msra.mxu0 0
    %1088 = vmatprep.subr.bf16.mxu0 0
    %1089 = vmatpush1.bf16.msra.mxu0 0
    %1090 = vmatprep.mubr.bf16.mxu0 0
    %1091 = vmatmul.mubr.bf16.gmra.mrb[0].mxu0 %v948
    %v1092 = vpop.f32.mrb[0].mxu0
    %v1093 = vadd.f32 %v971, %v1092
    %v1094 = vpop.f32.mrb[0].mxu0
    %v1095 = vadd.f32 %v975, %v1094
    %v1096 = vpop.f32.mrb[0].mxu0
    %v1097 = vadd.f32 %v971, %v1096
    %v1098 = vpop.f32.mrb[0].mxu0
    %v1099 = vadd.f32 %v975, %v1098
    %1100 = vdwg.mxu0
    %v1101 = vmax.f32 %v1093, 0.0
    %v1102 = vmax.f32 %v1095, 0.0
    %v1103 = vmax.f32 %v1097, 0.0
    %v1104 = vmax.f32 %v1099, 0.0
    %v1105 = vpack.c.bf16 %v1103, %v1101
    %v1106 = vpack.c.bf16 %v1104, %v1102
    %v1107 = vld [vmem:[#allocation9] sm:$0xf]
    %v1108 = vld [vmem:[#allocation9 + $0x4] sm:$0xf]
    %v1109 = vld [vmem:[#allocation9 + $0x8] sm:$0xf]
    %v1110 = vld [vmem:[#allocation9 + $0xc] sm:$0xf]
    %v1111 = vld [vmem:[#allocation9 + $0x10] sm:$0xf]
    %v1112 = vld [vmem:[#allocation9 + $0x14] sm:$0xf]
    %v1113 = vld [vmem:[#allocation9 + $0x18] sm:$0xf]
    %v1114 = vld [vmem:[#allocation9 + $0x1c] sm:$0xf]
    %v1115 = vld [vmem:[#allocation9 + $0x20] sm:$0xf]
    %v1116 = vld [vmem:[#allocation9 + $0x24] sm:$0xf]
    %v1117 = vld [vmem:[#allocation9 + $0x28] sm:$0xf]
    %v1118 = vld [vmem:[#allocation9 + $0x2c] sm:$0xf]
    %v1119 = vld [vmem:[#allocation9 + $0x30] sm:$0xf]
    %v1120 = vld [vmem:[#allocation9 + $0x34] sm:$0xf]
    %v1121 = vld [vmem:[#allocation9 + $0x38] sm:$0xf]
    %v1122 = vld [vmem:[#allocation9 + $0x3c] sm:$0xf]
    %s1123 = scalar_lea.vmem %s7, 16
    %v1124 = vld [vmem:[%s1123] sm:$0x3]
    %v1126 = vlaneseq
    %v1127 = vshrl.u32 %v1126, 7
    %v1128 = vsub.s32 0, %v1127
    %v1129 = vrot.slane %v1124, %v1128
    %v1147 = vunpack.c.l.b16 %v1107
    %v1148 = vunpack.c.l.b16 %v1108
    %v1149 = vunpack.c.l.b16 %v1109
    %v1150 = vunpack.c.l.b16 %v1110
    %v1151 = vunpack.c.l.b16 %v1111
    %v1152 = vunpack.c.l.b16 %v1112
    %v1153 = vunpack.c.l.b16 %v1113
    %v1154 = vunpack.c.l.b16 %v1114
    %v1155 = vunpack.c.l.b16 %v1115
    %v1156 = vunpack.c.l.b16 %v1116
    %v1157 = vunpack.c.l.b16 %v1117
    %v1158 = vunpack.c.l.b16 %v1118
    %v1159 = vunpack.c.l.b16 %v1119
    %v1160 = vunpack.c.l.b16 %v1120
    %v1161 = vunpack.c.l.b16 %v1121
    %v1162 = vunpack.c.l.b16 %v1122
    %v1163 = vpack.c.b16 %v1148, %v1147
    %v1164 = vpack.c.b16 %v1150, %v1149
    %v1165 = vpack.c.b16 %v1152, %v1151
    %v1166 = vpack.c.b16 %v1154, %v1153
    %v1167 = vpack.c.b16 %v1156, %v1155
    %v1168 = vpack.c.b16 %v1158, %v1157
    %v1169 = vpack.c.b16 %v1160, %v1159
    %v1170 = vpack.c.b16 %v1162, %v1161
    %1179 = vmatprep.subr.bf16.mxu0 0
    %1180 = vmatpush1.bf16.msra.mxu0 %v1163
    %1181 = vmatprep.subr.bf16.mxu0 0
    %1182 = vmatpush1.bf16.msra.mxu0 %v1164
    %1183 = vmatprep.subr.bf16.mxu0 0
    %1184 = vmatpush1.bf16.msra.mxu0 %v1165
    %1185 = vmatprep.subr.bf16.mxu0 0
    %1186 = vmatpush1.bf16.msra.mxu0 %v1166
    %1187 = vmatprep.subr.bf16.mxu0 0
    %1188 = vmatpush1.bf16.msra.mxu0 %v1167
    %1189 = vmatprep.subr.bf16.mxu0 0
    %1190 = vmatpush1.bf16.msra.mxu0 %v1168
    %1191 = vmatprep.subr.bf16.mxu0 0
    %1192 = vmatpush1.bf16.msra.mxu0 %v1169
    %1193 = vmatprep.subr.bf16.mxu0 0
    %1194 = vmatpush1.bf16.msra.mxu0 %v1170
    %1195 = vmatprep.subr.bf16.mxu0 0
    %1196 = vmatpush1.bf16.msra.mxu0 0
    %1197 = vmatprep.subr.bf16.mxu0 0
    %1198 = vmatpush1.bf16.msra.mxu0 0
    %1199 = vmatprep.subr.bf16.mxu0 0
    %1200 = vmatpush1.bf16.msra.mxu0 0
    %1201 = vmatprep.subr.bf16.mxu0 0
    %1202 = vmatpush1.bf16.msra.mxu0 0
    %1203 = vmatprep.subr.bf16.mxu0 0
    %1204 = vmatpush1.bf16.msra.mxu0 0
    %1205 = vmatprep.subr.bf16.mxu0 0
    %1206 = vmatpush1.bf16.msra.mxu0 0
    %1207 = vmatprep.subr.bf16.mxu0 0
    %1208 = vmatpush1.bf16.msra.mxu0 0
    %1209 = vmatprep.subr.bf16.mxu0 0
    %1210 = vmatpush1.bf16.msra.mxu0 0
    %1211 = vmatprep.mubr.bf16.mxu0 0
    %1212 = vmatmul.mubr.bf16.gmra.mrb[0].mxu0 %v1105
    %v1213 = vpop.f32.mrb[0].mxu0
    %v1214 = vadd.f32 %v1129, %v1213
    %v1215 = vpop.f32.mrb[0].mxu0
    %v1216 = vpop.f32.mrb[0].mxu0
    %v1217 = vadd.f32 %v1129, %v1216
    %v1218 = vpop.f32.mrb[0].mxu0
    %1219 = vdwg.mxu0
    %1220 = vst [vmem:[%s8] sm:$0xff] %v1214
    %1221 = vst [vmem:[%s8 + $0x8] sm:$0xff] %v1217
    %v1222 = vld [vmem:[#allocation10] sm:$0xf]
    %v1223 = vld [vmem:[#allocation10 + $0x4] sm:$0xf]
    %v1224 = vld [vmem:[#allocation10 + $0x8] sm:$0xf]
    %v1225 = vld [vmem:[#allocation10 + $0xc] sm:$0xf]
    %v1226 = vld [vmem:[#allocation10 + $0x10] sm:$0xf]
    %v1227 = vld [vmem:[#allocation10 + $0x14] sm:$0xf]
    %v1228 = vld [vmem:[#allocation10 + $0x18] sm:$0xf]
    %v1229 = vld [vmem:[#allocation10 + $0x1c] sm:$0xf]
    %v1230 = vld [vmem:[#allocation10 + $0x20] sm:$0xf]
    %v1231 = vld [vmem:[#allocation10 + $0x24] sm:$0xf]
    %v1232 = vld [vmem:[#allocation10 + $0x28] sm:$0xf]
    %v1233 = vld [vmem:[#allocation10 + $0x2c] sm:$0xf]
    %v1234 = vld [vmem:[#allocation10 + $0x30] sm:$0xf]
    %v1235 = vld [vmem:[#allocation10 + $0x34] sm:$0xf]
    %v1236 = vld [vmem:[#allocation10 + $0x38] sm:$0xf]
    %v1237 = vld [vmem:[#allocation10 + $0x3c] sm:$0xf]
    %s1238 = scalar_lea.vmem %s7, 18
    %v1239 = vld [vmem:[%s1238] sm:$0x3]
    %v1241 = vlaneseq
    %v1242 = vshrl.u32 %v1241, 7
    %v1243 = vsub.s32 0, %v1242
    %v1244 = vrot.slane %v1239, %v1243
    %v1262 = vunpack.c.l.b16 %v1222
    %v1263 = vunpack.c.l.b16 %v1223
    %v1264 = vunpack.c.l.b16 %v1224
    %v1265 = vunpack.c.l.b16 %v1225
    %v1266 = vunpack.c.l.b16 %v1226
    %v1267 = vunpack.c.l.b16 %v1227
    %v1268 = vunpack.c.l.b16 %v1228
    %v1269 = vunpack.c.l.b16 %v1229
    %v1270 = vunpack.c.l.b16 %v1230
    %v1271 = vunpack.c.l.b16 %v1231
    %v1272 = vunpack.c.l.b16 %v1232
    %v1273 = vunpack.c.l.b16 %v1233
    %v1274 = vunpack.c.l.b16 %v1234
    %v1275 = vunpack.c.l.b16 %v1235
    %v1276 = vunpack.c.l.b16 %v1236
    %v1277 = vunpack.c.l.b16 %v1237
    %v1278 = vpack.c.b16 %v1263, %v1262
    %v1279 = vpack.c.b16 %v1265, %v1264
    %v1280 = vpack.c.b16 %v1267, %v1266
    %v1281 = vpack.c.b16 %v1269, %v1268
    %v1282 = vpack.c.b16 %v1271, %v1270
    %v1283 = vpack.c.b16 %v1273, %v1272
    %v1284 = vpack.c.b16 %v1275, %v1274
    %v1285 = vpack.c.b16 %v1277, %v1276
    %1294 = vmatprep.subr.bf16.mxu0 0
    %1295 = vmatpush1.bf16.msra.mxu0 %v1278
    %1296 = vmatprep.subr.bf16.mxu0 0
    %1297 = vmatpush1.bf16.msra.mxu0 %v1279
    %1298 = vmatprep.subr.bf16.mxu0 0
    %1299 = vmatpush1.bf16.msra.mxu0 %v1280
    %1300 = vmatprep.subr.bf16.mxu0 0
    %1301 = vmatpush1.bf16.msra.mxu0 %v1281
    %1302 = vmatprep.subr.bf16.mxu0 0
    %1303 = vmatpush1.bf16.msra.mxu0 %v1282
    %1304 = vmatprep.subr.bf16.mxu0 0
    %1305 = vmatpush1.bf16.msra.mxu0 %v1283
    %1306 = vmatprep.subr.bf16.mxu0 0
    %1307 = vmatpush1.bf16.msra.mxu0 %v1284
    %1308 = vmatprep.subr.bf16.mxu0 0
    %1309 = vmatpush1.bf16.msra.mxu0 %v1285
    %1310 = vmatprep.subr.bf16.mxu0 0
    %1311 = vmatpush1.bf16.msra.mxu0 0
    %1312 = vmatprep.subr.bf16.mxu0 0
    %1313 = vmatpush1.bf16.msra.mxu0 0
    %1314 = vmatprep.subr.bf16.mxu0 0
    %1315 = vmatpush1.bf16.msra.mxu0 0
    %1316 = vmatprep.subr.bf16.mxu0 0
    %1317 = vmatpush1.bf16.msra.mxu0 0
    %1318 = vmatprep.subr.bf16.mxu0 0
    %1319 = vmatpush1.bf16.msra.mxu0 0
    %1320 = vmatprep.subr.bf16.mxu0 0
    %1321 = vmatpush1.bf16.msra.mxu0 0
    %1322 = vmatprep.subr.bf16.mxu0 0
    %1323 = vmatpush1.bf16.msra.mxu0 0
    %1324 = vmatprep.subr.bf16.mxu0 0
    %1325 = vmatpush1.bf16.msra.mxu0 0
    %1326 = vmatprep.mubr.bf16.mxu0 0
    %1327 = vmatmul.mubr.bf16.gmra.mrb[0].mxu0 %v1106
    %v1328 = vpop.f32.mrb[0].mxu0
    %v1329 = vadd.f32 %v1244, %v1328
    %v1330 = vpop.f32.mrb[0].mxu0
    %v1331 = vpop.f32.mrb[0].mxu0
    %v1332 = vadd.f32 %v1244, %v1331
    %v1333 = vpop.f32.mrb[0].mxu0
    %1334 = vdwg.mxu0
    %v1335 = vtanh.pop %v1329
    %v1336 = vtanh.pop %v1332
    %1337 = vst [vmem:[%s9] sm:$0xff] %v1335
    %1338 = vst [vmem:[%s9 + $0x8] sm:$0xff] %v1336
    // Predicated region
    $region58: #{_forward_impl.1} parent=1 // pred_check
      _
    $region59: #{_forward_impl.1} parent=1 // pred_check_branch
      %1340 = sbr.rel (0) target = $region61
    $region60: #{_forward_impl.1} parent=1 // pred_region
      _
    $region61: #{_forward_impl.1} parent=1 // pred_fallthru
      _
    // Predicated region
    $region62: #{_forward_impl.1} parent=1 // pred_check
      _
    $region63: #{_forward_impl.1} parent=1 // pred_check_branch
      %1342 = sbr.rel (0) target = $region65
    $region64: #{_forward_impl.1} parent=1 // pred_region
      _
    $region65: #{_forward_impl.1} parent=1 // pred_fallthru
      _
    // Predicated region
    $region66: #{_forward_impl.1} parent=1 // pred_check
      _
    $region67: #{_forward_impl.1} parent=1 // pred_check_branch
      %1344 = sbr.rel (0) target = $region69
    $region68: #{_forward_impl.1} parent=1 // pred_region
      _
    $region69: #{_forward_impl.1} parent=1 // pred_fallthru
      _
    // Predicated region
    $region70: #{_forward_impl.1} parent=1 // pred_check
      _
    $region71: #{_forward_impl.1} parent=1 // pred_check_branch
      %1346 = sbr.rel (0) target = $region73
    $region72: #{_forward_impl.1} parent=1 // pred_region
      _
    $region73: #{_forward_impl.1} parent=1 // pred_fallthru
      _
    %1347 = vsyncpa [#allocation3], 1
    %1348 = vsyncpa [#allocation5], 1
    %1349 = vsyncpa [#allocation8], 1
    %1350 = vsyncpa [#allocation11], 1

</llo_original>
